<compile_context>
chip_gen: v7x
topology: tpu7x:2x2x1
jax: 0.10.0
libtpu: 0.0.40
codegen_flags: <defaults>
</compile_context>

<pallas_src>
import functools

import jax
import jax.numpy as jnp
from jax.experimental import pallas as pl
from jax.experimental.pallas import tpu as pltpu

# ----------------------------- model dimensions ------------------------------
B = 2          # batch
C = 3          # image channels
IMG = 16       # image height / width
PATCH = 8      # patch size
NPAT = (IMG // PATCH) ** 2
TV = NPAT + 1  # vision tokens (CLS + patches)
TVP = 8        # vision tokens padded to a sublane-aligned count
CPP = C * PATCH * PATCH
HID = 32       # hidden size
NH = 4         # attention heads
DH = HID // NH
FF = 64        # FFN width
T = 8          # text sequence length
VOCAB = 64
PROJ = 32      # ITC projection dim
LN_EPS_V = 1e-5     # BLIP vision LN eps
LN_EPS_T = 1e-12    # BLIP text LN eps
NEG_INF = -1e9
LANES = 128

_VMEM = pl.BlockSpec(memory_space=pltpu.MemorySpace.VMEM)
_SDS = jax.ShapeDtypeStruct


# ---------------------------- packed param layouts ----------------------------
def _layout(entries):
    idx, r = {}, 0
    for name, (h, w) in entries:
        idx[name] = (r, h, w)
        r += h
    return idx, r


_VIS_ENTRIES = [
    ("wp", (CPP, HID)), ("bp", (1, HID)), ("clspos", (TVP, HID)),
    ("ln1_g", (1, HID)), ("ln1_b", (1, HID)),
    ("wqkv", (HID, 3 * HID)), ("bqkv", (1, 3 * HID)),
    ("wo", (HID, HID)), ("bo", (1, HID)),
    ("ln2_g", (1, HID)), ("ln2_b", (1, HID)),
    ("wf1", (HID, FF)), ("bf1", (1, FF)),
    ("wf2", (FF, HID)), ("bf2", (1, HID)),
    ("post_g", (1, HID)), ("post_b", (1, HID)),
]

_TEXT_BASE = [
    ("tok_emb", (VOCAB, HID)), ("pos_emb", (T, HID)),
    ("emb_g", (1, HID)), ("emb_b", (1, HID)),
    ("wqkv", (HID, 3 * HID)), ("bqkv", (1, 3 * HID)),
    ("wo", (HID, HID)), ("bo", (1, HID)),
    ("ln1_g", (1, HID)), ("ln1_b", (1, HID)),
    ("cwq", (HID, HID)), ("cbq", (1, HID)),
    ("cwkv", (HID, 2 * HID)), ("cbkv", (1, 2 * HID)),
    ("cwo", (HID, HID)), ("cbo", (1, HID)),
    ("lnx_g", (1, HID)), ("lnx_b", (1, HID)),
    ("wf1", (HID, FF)), ("bf1", (1, FF)),
    ("wf2", (FF, HID)), ("bf2", (1, HID)),
    ("ln2_g", (1, HID)), ("ln2_b", (1, HID)),
]

_ENC_ENTRIES = _TEXT_BASE + [
    ("itm_w", (HID, 2)), ("itm_b", (1, 2)),
    ("vproj_w", (HID, PROJ)), ("vproj_b", (1, PROJ)),
    ("tproj_w", (HID, PROJ)), ("tproj_b", (1, PROJ)),
]

_DEC_ENTRIES = _TEXT_BASE + [("lm_w", (HID, VOCAB)), ("lm_b", (1, VOCAB))]

VIS_IDX, VIS_ROWS = _layout(_VIS_ENTRIES)
ENC_IDX, ENC_ROWS = _layout(_ENC_ENTRIES)
DEC_IDX, DEC_ROWS = _layout(_DEC_ENTRIES)

_BIAS_NAMES = {"bp", "bqkv", "bo", "bf1", "bf2", "cbq", "cbkv", "cbo"}


def _init_pack(key, entries, idx, total_rows):
    slab = jnp.zeros((total_rows, LANES), jnp.float32)
    keys = jax.random.split(key, len(entries))
    for k, (name, (h, w)) in zip(keys, entries):
        r0 = idx[name][0]
        if name == "clspos":
            kc, kp = jax.random.split(k)
            cls = jax.random.normal(kc, (1, HID), jnp.float32) * 0.02
            pos = jax.random.normal(kp, (TV, HID), jnp.float32) * 0.02
            val = jnp.concatenate(
                [cls + pos[0:1], pos[1:TV], jnp.zeros((TVP - TV, HID), jnp.float32)], 0)
        elif name.endswith("_g"):
            val = jnp.ones((h, w), jnp.float32)
        elif name.endswith("_b") or name in _BIAS_NAMES:
            val = jnp.zeros((h, w), jnp.float32)
        else:
            val = jax.random.normal(k, (h, w), jnp.float32) * 0.02
        slab = slab.at[r0:r0 + h, 0:w].set(val)
    return slab


def init_params(key):
    kv, ke, kd = jax.random.split(key, 3)
    return {"vision": _init_pack(kv, _VIS_ENTRIES, VIS_IDX, VIS_ROWS),
            "encoder": _init_pack(ke, _ENC_ENTRIES, ENC_IDX, ENC_ROWS),
            "decoder": _init_pack(kd, _DEC_ENTRIES, DEC_IDX, DEC_ROWS)}


# ------------------------------ in-kernel helpers -----------------------------
def _prm(ref, idx, name):
    r0, h, w = idx[name]
    return ref[r0:r0 + h, 0:w]


def _ln(x, g, b, eps):
    mu = jnp.mean(x, axis=-1, keepdims=True)
    var = jnp.mean((x - mu) ** 2, axis=-1, keepdims=True)
    return (x - mu) * jax.lax.rsqrt(var + eps) * g + b


def _dot(a, b):
    return jnp.dot(a, b, preferred_element_type=jnp.float32)


def _dot_nt(a, b):  # a @ b.T
    return jax.lax.dot_general(a, b, (((1,), (1,)), ((), ())),
                               preferred_element_type=jnp.float32)


def _softmax(s):
    s = s - jnp.max(s, axis=-1, keepdims=True)
    p = jnp.exp(s)
    return p / jnp.sum(p, axis=-1, keepdims=True)


def _gelu(x):
    # TODO(synk): torch nn.GELU (BLIP) uses the exact erf form; tanh approximation is
    #             kept (small systematic drift) to avoid relying on Mosaic erf lowering.
    return jax.nn.gelu(x, approximate=True)


def _padw(x, width=LANES):
    pad = width - x.shape[1]
    if pad == 0:
        return x
    return jnp.concatenate([x, jnp.zeros((x.shape[0], pad), x.dtype)], axis=1)


def _mh_attention(q_all, k_all, v_all, bias):
    """q_all [tq,HID], k_all/v_all [tk,HID], bias broadcastable to [tq,tk]."""
    scale = 1.0 / (DH ** 0.5)
    heads = []
    for hh in range(NH):
        c = hh * DH
        s = _dot_nt(q_all[:, c:c + DH], k_all[:, c:c + DH]) * scale + bias
        heads.append(_dot(_softmax(s), v_all[:, c:c + DH]))
    # one lane-concat per batch instead of NH masked column stores into scratch
    return jnp.concatenate(heads, axis=-1)


# ------------------------------ Pallas kernels --------------------------------
def _vision_kernel(pat_ref, prm_ref, out_ref, *, bsz):
    """Patch embed + CLS/pos + pre-LN MHA + FFN + post-LN, all from one param slab."""
    g = lambda n: _prm(prm_ref, VIS_IDX, n)
    ti = jax.lax.broadcasted_iota(jnp.int32, (TVP, 1), 0)
    tok_scale = jnp.where(jnp.logical_and(ti >= 1, ti < TV), 1.0, 0.0)   # zero CLS/pad
    row_scale = jnp.concatenate([tok_scale] * bsz, axis=0)               # [rows,1]
    clspos = jnp.concatenate([g("clspos")] * bsz, axis=0)                # [rows,HID]
    x0 = (_dot(pat_ref[...], g("wp")) + g("bp")) * row_scale + clspos
    h = _ln(x0, g("ln1_g"), g("ln1_b"), LN_EPS_V)
    qkv = _dot(h, g("wqkv")) + g("bqkv")
    ci = jax.lax.broadcasted_iota(jnp.int32, (1, TVP), 1)
    kmask = jnp.where(ci < TV, 0.0, NEG_INF)                             # mask pad keys
    att = []
    for b in range(bsz):
        r0 = b * TVP
        blk = qkv[r0:r0 + TVP, :]
        att.append(_mh_attention(blk[:, 0:HID], blk[:, HID:2 * HID],
                                 blk[:, 2 * HID:3 * HID], kmask))
    x1 = x0 + _dot(jnp.concatenate(att, axis=0), g("wo")) + g("bo")
    h2 = _ln(x1, g("ln2_g"), g("ln2_b"), LN_EPS_V)
    f = _dot(_gelu(_dot(h2, g("wf1")) + g("bf1")), g("wf2")) + g("bf2")
    # NOTE: padded rows TV..TVP-1 are masked in every attention use and sliced off for
    #       image_embeds; they must not be pooled over without re-masking.
    out_ref[...] = _ln(x1 + f, g("post_g"), g("post_b"), LN_EPS_V)


def _text_block(prm_ref, idx, ids_col, padm, *, bsz, tq, causal, cross, img=None):
    """Embedding-LN + self-attn(+LN) [+ cross-attn(+LN)] + FFN(+LN)."""
    g = lambda n: _prm(prm_ref, idx, n)
    rows = bsz * tq
    # token + position embedding, in-kernel (one-hot @ tok_emb == exact gather)
    vio = jax.lax.broadcasted_iota(jnp.int32, (rows, VOCAB), 1)
    onehot = jnp.where(vio == ids_col, 1.0, 0.0)
    pos = g("pos_emb")[0:tq, :]
    x = _dot(onehot, g("tok_emb")) + jnp.concatenate([pos] * bsz, axis=0)
    x = _ln(x, g("emb_g"), g("emb_b"), LN_EPS_T)

    # ---------------- self attention ----------------
    qkv = _dot(x, g("wqkv")) + g("bqkv")
    if causal:
        ri = jax.lax.broadcasted_iota(jnp.int32, (tq, tq), 0)
        cj = jax.lax.broadcasted_iota(jnp.int32, (tq, tq), 1)
        cmask = jnp.where(ri >= cj, 0.0, NEG_INF)
    att = []
    for b in range(bsz):
        r0 = b * tq
        blk = qkv[r0:r0 + tq, :]
        bias = (1.0 - padm[b:b + 1, :]) * NEG_INF                        # [1,tq]
        if causal:
            bias = bias + cmask
        att.append(_mh_attention(blk[:, 0:HID], blk[:, HID:2 * HID],
                                 blk[:, 2 * HID:3 * HID], bias))
    x = _ln(x + _dot(jnp.concatenate(att, axis=0), g("wo")) + g("bo"),
            g("ln1_g"), g("ln1_b"), LN_EPS_T)

    # ---------------- cross attention ----------------
    if cross:
        img_bsz = img.shape[0] // TVP
        cq = _dot(x, g("cwq")) + g("cbq")
        ckv = _dot(img, g("cwkv")) + g("cbkv")                           # [img_bsz*TVP,2H]
        ci = jax.lax.broadcasted_iota(jnp.int32, (1, TVP), 1)
        ebias = jnp.where(ci < TV, 0.0, NEG_INF)                         # mask padded keys
        catt = []
        for b in range(bsz):
            r0 = b * tq
            e0 = (b % img_bsz) * TVP   # pos+neg text rows share the same image states
            kv = ckv[e0:e0 + TVP, :]
            catt.append(_mh_attention(cq[r0:r0 + tq, :], kv[:, 0:HID],
                                      kv[:, HID:2 * HID], ebias))
        x = _ln(x + _dot(jnp.concatenate(catt, axis=0), g("cwo")) + g("cbo"),
                g("lnx_g"), g("lnx_b"), LN_EPS_T)

    # ---------------- FFN ----------------
    f = _dot(_gelu(_dot(x, g("wf1")) + g("bf1")), g("wf2")) + g("bf2")
    return _ln(x + f, g("ln2_g"), g("ln2_b"), LN_EPS_T)


def _itc_kernel(ids_ref, padm_ref, img_ref, prm_ref, out_ref,
                *, bsz, tq, with_loss, margin, threshold):
    """No-cross text encoder + ITC projection heads + similarity + contrastive loss."""
    g = lambda n: _prm(prm_ref, ENC_IDX, n)
    hidden = _text_block(prm_ref, ENC_IDX, ids_ref[...], padm_ref[...],
                         bsz=bsz, tq=tq, causal=False, cross=False)
    text_cls = jnp.concatenate([hidden[b * tq:b * tq + 1, :] for b in range(bsz)], 0)
    img = img_ref[...]
    img_cls = jnp.concatenate([img[b * TVP:b * TVP + 1, :] for b in range(bsz)], 0)
    ip = _dot(img_cls, g("vproj_w")) + g("vproj_b")
    tp_ = _dot(text_cls, g("tproj_w")) + g("tproj_b")
    inorm = ip / jnp.maximum(jnp.sqrt(jnp.sum(ip * ip, -1, keepdims=True)), 1e-12)
    tnorm = tp_ / jnp.maximum(jnp.sqrt(jnp.sum(tp_ * tp_, -1, keepdims=True)), 1e-12)
    sim = _dot_nt(tnorm, inorm)                                          # [B,B]
    if with_loss:
        tsim = _dot_nt(tnorm, tnorm)                                     # symmetric
        ri = jax.lax.broadcasted_iota(jnp.int32, (bsz, bsz), 0)
        cj = jax.lax.broadcasted_iota(jnp.int32, (bsz, bsz), 1)
        eyef = jnp.where(ri == cj, 1.0, 0.0)
        gtf = jnp.where(tsim > threshold, 1.0, 0.0)
        exclude = gtf * (1.0 - eyef)
        m = sim * (1.0 - exclude) + (-10000.0) * exclude
        rmax = jnp.max(m, axis=-1, keepdims=True)
        lse_r = rmax + jnp.log(jnp.sum(jnp.exp(m - rmax), -1, keepdims=True))
        diag_r = jnp.sum(m * eyef, -1, keepdims=True)
        text_loss = jnp.sum(lse_r - diag_r, axis=0, keepdims=True) / float(bsz)
        cmax = jnp.max(m, axis=0, keepdims=True)
        lse_c = cmax + jnp.log(jnp.sum(jnp.exp(m - cmax), axis=0, keepdims=True))
        diag_c = jnp.sum(m * eyef, axis=0, keepdims=True)
        image_loss = jnp.sum(lse_c - diag_c, axis=-1, keepdims=True) / float(bsz)
        cl1 = (text_loss + image_loss) * 0.5
        dpos = jnp.sum(sim * eyef, -1, keepdims=True)
        hardf = (1.0 - gtf) * jnp.where(sim + margin > dpos, 1.0, 0.0)
        cl2 = jnp.sum(jnp.sum(hardf * jnp.maximum(margin + sim - dpos, 0.0),
                              axis=-1, keepdims=True), axis=0, keepdims=True) / float(bsz)
        loss = cl1 * 0.5 + cl2 * 0.5
    else:
        loss = jnp.zeros((1, 1), jnp.float32)
    # single lane-dense packed output slab
    out_ref[...] = jnp.concatenate(
        [_padw(text_cls), _padw(inorm), _padw(tnorm), _padw(sim), _padw(loss)], axis=0)


def _itm_kernel(ids_ref, padm_ref, img_ref, prm_ref, out_ref, *, nb, tq, with_loss, ls):
    """Cross-attn text encoder (pos [+neg] rows) + ITM head + smoothed CE loss."""
    g = lambda n: _prm(prm_ref, ENC_IDX, n)
    hidden = _text_block(prm_ref, ENC_IDX, ids_ref[...], padm_ref[...],
                         bsz=nb, tq=tq, causal=False, cross=True, img=img_ref[...])
    cls = jnp.concatenate([hidden[b * tq:b * tq + 1, :] for b in range(nb)], 0)
    logits = _dot(cls, g("itm_w")) + g("itm_b")                          # [nb,2]
    if with_loss:
        half = nb // 2
        ri = jax.lax.broadcasted_iota(jnp.int32, (nb, 2), 0)
        cj = jax.lax.broadcasted_iota(jnp.int32, (nb, 2), 1)
        lab = jnp.where(ri < half, 1, 0)                                 # pos=1, neg=0
        onehot = jnp.where(cj == lab, 1.0, 0.0)
        tgt = (1.0 - ls) * onehot + ls / 2.0
        zz = logits - jnp.max(logits, -1, keepdims=True)
        logp = zz - jnp.log(jnp.sum(jnp.exp(zz), -1, keepdims=True))
        per = -jnp.sum(tgt * logp, -1, keepdims=True)
        loss = jnp.sum(per, axis=0, keepdims=True) / float(nb)
    else:
        loss = jnp.zeros((1, 1), jnp.float32)
    out_ref[...] = jnp.concatenate([_padw(logits), _padw(loss)], axis=0)


def _caption_kernel(ids_ref, padm_ref, img_ref, lab_ref, prm_ref, out_ref, *, bsz, tq):
    """Causal cross-attn decoder + LM head + label-smoothed (0.1) CE with ignore=-100."""
    g = lambda n: _prm(prm_ref, DEC_IDX, n)
    hidden = _text_block(prm_ref, DEC_IDX, ids_ref[...], padm_ref[...],
                         bsz=bsz, tq=tq, causal=True, cross=True, img=img_ref[...])
    z = _dot(hidden, g("lm_w")) + g("lm_b")                              # [rows,VOCAB]
    lab = lab_ref[...]                                                   # [rows,1] shifted
    n, v = z.shape
    vio = jax.lax.broadcasted_iota(jnp.int32, (n, v), 1)
    onehot = jnp.where(vio == lab, 1.0, 0.0)
    valid = jnp.where(lab != -100, 1.0, 0.0)
    ls = 0.1                                                             # BLIP LM smoothing
    tgt = (1.0 - ls) * onehot + ls / float(v)
    zz = z - jnp.max(z, -1, keepdims=True)
    logp = zz - jnp.log(jnp.sum(jnp.exp(zz), -1, keepdims=True))
    per = -jnp.sum(tgt * logp, -1, keepdims=True)
    num = jnp.sum(per * valid, axis=0, keepdims=True)
    den = jnp.sum(valid, axis=0, keepdims=True)
    out_ref[...] = _padw(num / jnp.maximum(den, 1.0))


# ------------------------------ kernel wrappers -------------------------------
def _call(kernel, out_shape, args):
    return pl.pallas_call(kernel, out_shape=out_shape,
                          in_specs=[_VMEM] * len(args), out_specs=_VMEM)(*args)


def _vision_forward(vis_packed, pixel_values):
    bsz = pixel_values.shape[0]
    x = pixel_values.astype(jnp.float32).reshape(
        bsz, C, IMG // PATCH, PATCH, IMG // PATCH, PATCH)
    x = x.transpose(0, 2, 4, 1, 3, 5).reshape(bsz, NPAT, CPP)
    patches = jnp.pad(x, ((0, 0), (1, TVP - 1 - NPAT), (0, 0))).reshape(bsz * TVP, CPP)
    return _call(functools.partial(_vision_kernel, bsz=bsz),
                 _SDS((bsz * TVP, HID), jnp.float32), [patches, vis_packed])


def _padm_of(mask, bsz, tq):
    if mask is None:
        return jnp.ones((bsz, tq), jnp.float32)
    return mask.astype(jnp.float32)


def _stage1_impl(vis_p, enc_p, pixel_values, image_embeds, input_ids, attention_mask,
                 *, use_pixels, run_itc_kernel, itc_with_loss, margin, threshold):
    if use_pixels:
        bsz = pixel_values.shape[0]
        img_pad2d = _vision_forward(vis_p, pixel_values)
    else:
        bsz = image_embeds.shape[0]
        img_pad2d = jnp.pad(image_embeds.astype(jnp.float32),
                            ((0, 0), (0, TVP - TV), (0, 0))).reshape(bsz * TVP, HID)
    res = {"img_pad2d": img_pad2d,
           "image_embeds": img_pad2d.reshape(bsz, TVP, HID)[:, :TV, :]}
    if run_itc_kernel:
        tq = input_ids.shape[1]
        ids_col = input_ids.reshape(-1, 1).astype(jnp.int32)
        padm = _padm_of(attention_mask, bsz, tq)
        kern = functools.partial(_itc_kernel, bsz=bsz, tq=tq, with_loss=itc_with_loss,
                                 margin=margin, threshold=threshold)
        pack = _call(kern, _SDS((4 * bsz + 1, LANES), jnp.float32),
                     [ids_col, padm, img_pad2d, enc_p])
        res["text_cls"] = pack[0:bsz, 0:HID]
        res["itc"] = {
            "image_embeds_norm": pack[bsz:2 * bsz, 0:PROJ],
            "text_embeds_norm": pack[2 * bsz:3 * bsz, 0:PROJ],
            "similarity": pack[3 * bsz:4 * bsz, 0:bsz],
            "loss": pack[4 * bsz, 0] if itc_with_loss else None,
        }
    return res


_stage1 = jax.jit(_stage1_impl, static_argnames=(
    "use_pixels", "run_itc_kernel", "itc_with_loss", "margin", "threshold"))


def _stage2_impl(enc_p, dec_p, img_pad2d, input_ids, attention_mask,
                 neg_input_ids, neg_attention_mask, labels,
                 *, run_itm, itm_with_loss, run_caption, label_smoothing):
    bsz, tq = input_ids.shape
    padm = _padm_of(attention_mask, bsz, tq)
    res = {}
    if run_itm:
        if itm_with_loss:
            ids2 = jnp.concatenate([input_ids, neg_input_ids], axis=0)
            padm2 = jnp.concatenate([padm, _padm_of(neg_attention_mask, bsz, tq)], axis=0)
            nb = 2 * bsz
        else:
            ids2, padm2, nb = input_ids, padm, bsz
        kern = functools.partial(_itm_kernel, nb=nb, tq=tq,
                                 with_loss=itm_with_loss, ls=label_smoothing)
        pack = _call(kern, _SDS((nb + 1, LANES), jnp.float32),
                     [ids2.reshape(-1, 1).astype(jnp.int32), padm2, img_pad2d, enc_p])
        res["itm_outputs"] = pack[0:nb, 0:2]
        res["itm_loss"] = pack[nb, 0] if itm_with_loss else None
    if run_caption:
        lab_s = jnp.concatenate(
            [labels[:, 1:], jnp.full((bsz, 1), -100, labels.dtype)], axis=1)
        kern = functools.partial(_caption_kernel, bsz=bsz, tq=tq)
        pack = _call(kern, _SDS((1, LANES), jnp.float32),
                     [input_ids.reshape(-1, 1).astype(jnp.int32), padm, img_pad2d,
                      lab_s.reshape(-1, 1).astype(jnp.int32), dec_p])
        res["caption_loss"] = pack[0, 0]
    return res


_stage2 = jax.jit(_stage2_impl, static_argnames=(
    "run_itm", "itm_with_loss", "run_caption", "label_smoothing"))


# ------------------------------ public forward --------------------------------
def forward(params, pixel_values, input_ids=None, attention_mask=None, image_embeds=None,
            labels=None, neg_input_ids=None, neg_attention_mask=None, return_loss=True,
            task=None, label_smoothing=0.0, margin=0.0, text_similarity_threshold=1.0,
            rng=None):
    run_itm = task in ("itm", None)
    run_itc = task in ("itc", None)
    run_caption = task in ("caption", None)
    need_resample = (run_itm and return_loss
                     and neg_input_ids is None and neg_attention_mask is None)
    use_pixels = image_embeds is None
    bsz = pixel_values.shape[0] if use_pixels else image_embeds.shape[0]

    # Stage 1: vision tower + fused (no-cross text encoder + ITC heads + loss).
    # Its CLS rows are computed once and reused by both the ITC branch and the
    # host-side negative-resampling loop (no duplicate no-cross text pass).
    s1 = _stage1(params["vision"], params["encoder"], pixel_values, image_embeds,
                 input_ids, attention_mask,
                 use_pixels=use_pixels,
                 run_itc_kernel=bool(run_itc or need_resample),
                 itc_with_loss=bool(run_itc and return_loss),
                 margin=float(margin), threshold=float(text_similarity_threshold))
    output = {"image_embeds": s1["image_embeds"]}

    if need_resample:
        # Data-dependent negative resampling (host while-loop, faithful to torch).
        # NOTE: torch's F.cosine_similarity(x.unsqueeze(0), x.unsqueeze(1)) uses default
        # dim=1 and yields a [B, HID] tensor, so [i, perm[i]] indexes hidden channels.
        # Reproduced bug-for-bug from the reference module.
        pos_emb = s1["text_cls"]
        x1 = jnp.broadcast_to(pos_emb[None, :, :], (bsz, bsz, HID))
        x2 = jnp.broadcast_to(pos_emb[:, None, :], (bsz, bsz, HID))
        text_sim = jnp.sum(x1 * x2, axis=1) / jnp.maximum(
            jnp.linalg.norm(x1, axis=1) * jnp.linalg.norm(x2, axis=1), 1e-8)
        rng = rng if rng is not None else jax.random.PRNGKey(1)
        perm = [int(v) for v in jax.device_get(jax.random.permutation(rng, bsz))]
        sim_host = jax.device_get(text_sim)
        for i in range(bsz):
            while sim_host[i, perm[i]] > text_similarity_threshold:
                perm[i] = (perm[i] + 1) % bsz
        perm = jnp.array(perm, jnp.int32)
        neg_input_ids = input_ids[perm]
        neg_attention_mask = None if attention_mask is None else attention_mask[perm]

    # Stage 2: fused ITM (pos+neg cross-attn + head + CE) and fused caption decoder.
    run_cap_kernel = run_caption and labels is not None
    s2 = {}
    if run_itm or run_cap_kernel:
        s2 = _stage2(params["encoder"], params["decoder"], s1["img_pad2d"],
                     input_ids, attention_mask, neg_input_ids, neg_attention_mask, labels,
                     run_itm=run_itm, itm_with_loss=bool(return_loss),
                     run_caption=run_cap_kernel, label_smoothing=float(label_smoothing))

    if run_itm:
        output["itm"] = {"loss": s2.get("itm_loss"), "outputs": s2["itm_outputs"]}
    if run_itc:
        output["itc"] = s1["itc"]
    if run_caption:
        # When labels is None the reference decoder run has no observable output,
        # so the kernel launch is skipped and caption_loss stays None.
        output["caption_loss"] = s2.get("caption_loss")
    return output


# ----------------------------------- main --------------------------------------
if __name__ == "__main__":
    key = jax.random.PRNGKey(0)
    kp, kpix, kids = jax.random.split(key, 3)
    params = init_params(kp)

    pixel_values = jax.random.normal(kpix, (B, C, IMG, IMG), jnp.float32)
    input_ids = jax.random.randint(kids, (B, T), 0, VOCAB, dtype=jnp.int32)
    attention_mask = jnp.ones((B, T), jnp.int32).at[1, -2:].set(0)
    labels = jnp.where(attention_mask == 1, input_ids, -100)
    neg_input_ids = input_ids[::-1]
    neg_attention_mask = attention_mask[::-1]

    out = forward(params, pixel_values,
                  input_ids=input_ids, attention_mask=attention_mask, labels=labels,
                  neg_input_ids=neg_input_ids, neg_attention_mask=neg_attention_mask,
                  return_loss=True, task=None, label_smoothing=0.1, margin=0.2,
                  text_similarity_threshold=0.95)

    jax.tree_util.tree_map(jax.block_until_ready, out)
    print("KERNEL_OK")
</pallas_src>

<mosaic_0001>
module attributes {stable_mosaic.version = 11 : i64} {
  func.func @_vision_kernel(%arg0: memref<16x192xf32, #tpu.memory_space<vmem>>, %arg1: memref<371x128xf32, #tpu.memory_space<vmem>>, %arg2: memref<16x32xf32, #tpu.memory_space<vmem>>) attributes {dimension_semantics = [], scalar_prefetch = 0 : i64, scratch_operands = 0 : i64, tpu.core_type = #tpu.core_type<tc>} {
    %0 = tpu.iota {dimensions = array<i32: 0>} : vector<8x1xi32>
    %c1_i32 = arith.constant 1 : i32
    %1 = vector.broadcast %c1_i32 : i32 to vector<8x1xi32>
    %2 = arith.cmpi sge, %0, %1 : vector<8x1xi32>
    %c5_i32 = arith.constant 5 : i32
    %3 = vector.broadcast %c5_i32 : i32 to vector<8x1xi32>
    %4 = arith.cmpi slt, %0, %3 : vector<8x1xi32>
    %5 = arith.andi %2, %4 : vector<8x1xi1>
    %cst = arith.constant 1.000000e+00 : f32
    %cst_0 = arith.constant 0.000000e+00 : f32
    %6 = vector.broadcast %cst : f32 to vector<8x1xf32>
    %7 = vector.broadcast %cst_0 : f32 to vector<8x1xf32>
    %8 = arith.select %5, %6, %7 : vector<8x1xi1>, vector<8x1xf32>
    %9 = tpu.concatenate %8, %8 in 0 : vector<8x1xf32>, vector<8x1xf32> -> vector<16x1xf32>
    %c193 = arith.constant 193 : index
    %c0 = arith.constant 0 : index
    %10 = vector.load %arg1[%c193, %c0] : memref<371x128xf32, #tpu.memory_space<vmem>>, vector<8x32xf32>
    %11 = tpu.concatenate %10, %10 in 0 : vector<8x32xf32>, vector<8x32xf32> -> vector<16x32xf32>
    %c0_1 = arith.constant 0 : index
    %c0_2 = arith.constant 0 : index
    %12 = vector.load %arg0[%c0_1, %c0_2] : memref<16x192xf32, #tpu.memory_space<vmem>>, vector<16x192xf32>
    %c0_3 = arith.constant 0 : index
    %c0_4 = arith.constant 0 : index
    %13 = vector.load %arg1[%c0_3, %c0_4] : memref<371x128xf32, #tpu.memory_space<vmem>>, vector<192x32xf32>
    %cst_5 = arith.constant dense<0.000000e+00> : vector<16x32xf32>
    %14 = tpu.matmul %12, %13, %cst_5 {dimension_numbers = #tpu.dot_dimension_numbers<[1], [0], [0], [1], [0, 0, 1, 1], [], []>} : vector<16x192xf32>, vector<192x32xf32>, vector<16x32xf32> -> vector<16x32xf32>
    %c192 = arith.constant 192 : index
    %c0_6 = arith.constant 0 : index
    %15 = vector.load %arg1[%c192, %c0_6] : memref<371x128xf32, #tpu.memory_space<vmem>>, vector<1x32xf32>
    %16 = vector.broadcast %15 : vector<1x32xf32> to vector<16x32xf32>
    %17 = arith.addf %14, %16 : vector<16x32xf32>
    %18 = vector.broadcast %9 : vector<16x1xf32> to vector<16x32xf32>
    %19 = arith.mulf %17, %18 : vector<16x32xf32>
    %20 = arith.addf %19, %11 : vector<16x32xf32>
    %c201 = arith.constant 201 : index
    %c0_7 = arith.constant 0 : index
    %21 = vector.load %arg1[%c201, %c0_7] : memref<371x128xf32, #tpu.memory_space<vmem>>, vector<1x32xf32>
    %c202 = arith.constant 202 : index
    %c0_8 = arith.constant 0 : index
    %22 = vector.load %arg1[%c202, %c0_8] : memref<371x128xf32, #tpu.memory_space<vmem>>, vector<1x32xf32>
    %cst_9 = arith.constant dense<0.000000e+00> : vector<16xf32>
    %23 = vector.multi_reduction <add>, %20, %cst_9 [1] : vector<16x32xf32> to vector<16xf32>
    %24 = vector.shape_cast %23 : vector<16xf32> to vector<16x1xf32>
    %cst_10 = arith.constant 3.200000e+01 : f32
    %25 = vector.broadcast %cst_10 : f32 to vector<16x1xf32>
    %26 = arith.divf %24, %25 : vector<16x1xf32>
    %27 = vector.broadcast %26 : vector<16x1xf32> to vector<16x32xf32>
    %28 = arith.subf %20, %27 : vector<16x32xf32>
    %29 = arith.mulf %28, %28 : vector<16x32xf32>
    %cst_11 = arith.constant dense<0.000000e+00> : vector<16xf32>
    %30 = vector.multi_reduction <add>, %29, %cst_11 [1] : vector<16x32xf32> to vector<16xf32>
    %31 = vector.shape_cast %30 : vector<16xf32> to vector<16x1xf32>
    %cst_12 = arith.constant 3.200000e+01 : f32
    %32 = vector.broadcast %cst_12 : f32 to vector<16x1xf32>
    %33 = arith.divf %31, %32 : vector<16x1xf32>
    %34 = vector.broadcast %26 : vector<16x1xf32> to vector<16x32xf32>
    %35 = arith.subf %20, %34 : vector<16x32xf32>
    %cst_13 = arith.constant 9.99999974E-6 : f32
    %36 = vector.broadcast %cst_13 : f32 to vector<16x1xf32>
    %37 = arith.addf %33, %36 : vector<16x1xf32>
    %38 = math.rsqrt %37 : vector<16x1xf32>
    %39 = vector.broadcast %38 : vector<16x1xf32> to vector<16x32xf32>
    %40 = arith.mulf %35, %39 : vector<16x32xf32>
    %41 = vector.broadcast %21 : vector<1x32xf32> to vector<16x32xf32>
    %42 = arith.mulf %40, %41 : vector<16x32xf32>
    %43 = vector.broadcast %22 : vector<1x32xf32> to vector<16x32xf32>
    %44 = arith.addf %42, %43 : vector<16x32xf32>
    %c203 = arith.constant 203 : index
    %c0_14 = arith.constant 0 : index
    %45 = vector.load %arg1[%c203, %c0_14] : memref<371x128xf32, #tpu.memory_space<vmem>>, vector<32x96xf32>
    %cst_15 = arith.constant dense<0.000000e+00> : vector<16x96xf32>
    %46 = tpu.matmul %44, %45, %cst_15 {dimension_numbers = #tpu.dot_dimension_numbers<[1], [0], [0], [1], [0, 0, 1, 1], [], []>} : vector<16x32xf32>, vector<32x96xf32>, vector<16x96xf32> -> vector<16x96xf32>
    %c235 = arith.constant 235 : index
    %c0_16 = arith.constant 0 : index
    %47 = vector.load %arg1[%c235, %c0_16] : memref<371x128xf32, #tpu.memory_space<vmem>>, vector<1x96xf32>
    %48 = vector.broadcast %47 : vector<1x96xf32> to vector<16x96xf32>
    %49 = arith.addf %46, %48 : vector<16x96xf32>
    %50 = tpu.iota {dimensions = array<i32: 1>} : vector<1x8xi32>
    %c5_i32_17 = arith.constant 5 : i32
    %51 = vector.broadcast %c5_i32_17 : i32 to vector<1x8xi32>
    %52 = arith.cmpi slt, %50, %51 : vector<1x8xi32>
    %cst_18 = arith.constant 0.000000e+00 : f32
    %cst_19 = arith.constant -1.000000e+09 : f32
    %53 = vector.broadcast %cst_18 : f32 to vector<1x8xf32>
    %54 = vector.broadcast %cst_19 : f32 to vector<1x8xf32>
    %55 = arith.select %52, %53, %54 : vector<1x8xi1>, vector<1x8xf32>
    %56 = vector.extract_strided_slice %49 {offsets = [0, 0], sizes = [8, 96], strides = [1, 1]} : vector<16x96xf32> to vector<8x96xf32>
    %57 = vector.extract_strided_slice %56 {offsets = [0, 0], sizes = [8, 32], strides = [1, 1]} : vector<8x96xf32> to vector<8x32xf32>
    %58 = vector.extract_strided_slice %56 {offsets = [0, 32], sizes = [8, 32], strides = [1, 1]} : vector<8x96xf32> to vector<8x32xf32>
    %59 = vector.extract_strided_slice %56 {offsets = [0, 64], sizes = [8, 32], strides = [1, 1]} : vector<8x96xf32> to vector<8x32xf32>
    %60 = vector.extract_strided_slice %57 {offsets = [0, 0], sizes = [8, 8], strides = [1, 1]} : vector<8x32xf32> to vector<8x8xf32>
    %61 = vector.extract_strided_slice %58 {offsets = [0, 0], sizes = [8, 8], strides = [1, 1]} : vector<8x32xf32> to vector<8x8xf32>
    %cst_20 = arith.constant dense<0.000000e+00> : vector<8x8xf32>
    %62 = tpu.matmul %60, %61, %cst_20 {dimension_numbers = #tpu.dot_dimension_numbers<[1], [1], [0], [0], [0, 0, 1, 0], [], []>} : vector<8x8xf32>, vector<8x8xf32>, vector<8x8xf32> -> vector<8x8xf32>
    %cst_21 = arith.constant 0.353553385 : f32
    %63 = vector.broadcast %cst_21 : f32 to vector<8x8xf32>
    %64 = arith.mulf %62, %63 : vector<8x8xf32>
    %65 = vector.broadcast %55 : vector<1x8xf32> to vector<8x8xf32>
    %66 = arith.addf %64, %65 : vector<8x8xf32>
    %cst_22 = arith.constant dense<0xFF800000> : vector<8xf32>
    %67 = vector.multi_reduction <maximumf>, %66, %cst_22 [1] : vector<8x8xf32> to vector<8xf32>
    %68 = vector.shape_cast %67 : vector<8xf32> to vector<8x1xf32>
    %69 = vector.broadcast %68 : vector<8x1xf32> to vector<8x8xf32>
    %70 = arith.subf %66, %69 : vector<8x8xf32>
    %71 = math.exp %70 : vector<8x8xf32>
    %cst_23 = arith.constant dense<0.000000e+00> : vector<8xf32>
    %72 = vector.multi_reduction <add>, %71, %cst_23 [1] : vector<8x8xf32> to vector<8xf32>
    %73 = vector.shape_cast %72 : vector<8xf32> to vector<8x1xf32>
    %74 = vector.broadcast %73 : vector<8x1xf32> to vector<8x8xf32>
    %75 = arith.divf %71, %74 : vector<8x8xf32>
    %76 = vector.extract_strided_slice %59 {offsets = [0, 0], sizes = [8, 8], strides = [1, 1]} : vector<8x32xf32> to vector<8x8xf32>
    %cst_24 = arith.constant dense<0.000000e+00> : vector<8x8xf32>
    %77 = tpu.matmul %75, %76, %cst_24 {dimension_numbers = #tpu.dot_dimension_numbers<[1], [0], [0], [1], [0, 0, 1, 1], [], []>} : vector<8x8xf32>, vector<8x8xf32>, vector<8x8xf32> -> vector<8x8xf32>
    %78 = vector.extract_strided_slice %57 {offsets = [0, 8], sizes = [8, 8], strides = [1, 1]} : vector<8x32xf32> to vector<8x8xf32>
    %79 = vector.extract_strided_slice %58 {offsets = [0, 8], sizes = [8, 8], strides = [1, 1]} : vector<8x32xf32> to vector<8x8xf32>
    %cst_25 = arith.constant dense<0.000000e+00> : vector<8x8xf32>
    %80 = tpu.matmul %78, %79, %cst_25 {dimension_numbers = #tpu.dot_dimension_numbers<[1], [1], [0], [0], [0, 0, 1, 0], [], []>} : vector<8x8xf32>, vector<8x8xf32>, vector<8x8xf32> -> vector<8x8xf32>
    %cst_26 = arith.constant 0.353553385 : f32
    %81 = vector.broadcast %cst_26 : f32 to vector<8x8xf32>
    %82 = arith.mulf %80, %81 : vector<8x8xf32>
    %83 = vector.broadcast %55 : vector<1x8xf32> to vector<8x8xf32>
    %84 = arith.addf %82, %83 : vector<8x8xf32>
    %cst_27 = arith.constant dense<0xFF800000> : vector<8xf32>
    %85 = vector.multi_reduction <maximumf>, %84, %cst_27 [1] : vector<8x8xf32> to vector<8xf32>
    %86 = vector.shape_cast %85 : vector<8xf32> to vector<8x1xf32>
    %87 = vector.broadcast %86 : vector<8x1xf32> to vector<8x8xf32>
    %88 = arith.subf %84, %87 : vector<8x8xf32>
    %89 = math.exp %88 : vector<8x8xf32>
    %cst_28 = arith.constant dense<0.000000e+00> : vector<8xf32>
    %90 = vector.multi_reduction <add>, %89, %cst_28 [1] : vector<8x8xf32> to vector<8xf32>
    %91 = vector.shape_cast %90 : vector<8xf32> to vector<8x1xf32>
    %92 = vector.broadcast %91 : vector<8x1xf32> to vector<8x8xf32>
    %93 = arith.divf %89, %92 : vector<8x8xf32>
    %94 = vector.extract_strided_slice %59 {offsets = [0, 8], sizes = [8, 8], strides = [1, 1]} : vector<8x32xf32> to vector<8x8xf32>
    %cst_29 = arith.constant dense<0.000000e+00> : vector<8x8xf32>
    %95 = tpu.matmul %93, %94, %cst_29 {dimension_numbers = #tpu.dot_dimension_numbers<[1], [0], [0], [1], [0, 0, 1, 1], [], []>} : vector<8x8xf32>, vector<8x8xf32>, vector<8x8xf32> -> vector<8x8xf32>
    %96 = vector.extract_strided_slice %57 {offsets = [0, 16], sizes = [8, 8], strides = [1, 1]} : vector<8x32xf32> to vector<8x8xf32>
    %97 = vector.extract_strided_slice %58 {offsets = [0, 16], sizes = [8, 8], strides = [1, 1]} : vector<8x32xf32> to vector<8x8xf32>
    %cst_30 = arith.constant dense<0.000000e+00> : vector<8x8xf32>
    %98 = tpu.matmul %96, %97, %cst_30 {dimension_numbers = #tpu.dot_dimension_numbers<[1], [1], [0], [0], [0, 0, 1, 0], [], []>} : vector<8x8xf32>, vector<8x8xf32>, vector<8x8xf32> -> vector<8x8xf32>
    %cst_31 = arith.constant 0.353553385 : f32
    %99 = vector.broadcast %cst_31 : f32 to vector<8x8xf32>
    %100 = arith.mulf %98, %99 : vector<8x8xf32>
    %101 = vector.broadcast %55 : vector<1x8xf32> to vector<8x8xf32>
    %102 = arith.addf %100, %101 : vector<8x8xf32>
    %cst_32 = arith.constant dense<0xFF800000> : vector<8xf32>
    %103 = vector.multi_reduction <maximumf>, %102, %cst_32 [1] : vector<8x8xf32> to vector<8xf32>
    %104 = vector.shape_cast %103 : vector<8xf32> to vector<8x1xf32>
    %105 = vector.broadcast %104 : vector<8x1xf32> to vector<8x8xf32>
    %106 = arith.subf %102, %105 : vector<8x8xf32>
    %107 = math.exp %106 : vector<8x8xf32>
    %cst_33 = arith.constant dense<0.000000e+00> : vector<8xf32>
    %108 = vector.multi_reduction <add>, %107, %cst_33 [1] : vector<8x8xf32> to vector<8xf32>
    %109 = vector.shape_cast %108 : vector<8xf32> to vector<8x1xf32>
    %110 = vector.broadcast %109 : vector<8x1xf32> to vector<8x8xf32>
    %111 = arith.divf %107, %110 : vector<8x8xf32>
    %112 = vector.extract_strided_slice %59 {offsets = [0, 16], sizes = [8, 8], strides = [1, 1]} : vector<8x32xf32> to vector<8x8xf32>
    %cst_34 = arith.constant dense<0.000000e+00> : vector<8x8xf32>
    %113 = tpu.matmul %111, %112, %cst_34 {dimension_numbers = #tpu.dot_dimension_numbers<[1], [0], [0], [1], [0, 0, 1, 1], [], []>} : vector<8x8xf32>, vector<8x8xf32>, vector<8x8xf32> -> vector<8x8xf32>
    %114 = vector.extract_strided_slice %57 {offsets = [0, 24], sizes = [8, 8], strides = [1, 1]} : vector<8x32xf32> to vector<8x8xf32>
    %115 = vector.extract_strided_slice %58 {offsets = [0, 24], sizes = [8, 8], strides = [1, 1]} : vector<8x32xf32> to vector<8x8xf32>
    %cst_35 = arith.constant dense<0.000000e+00> : vector<8x8xf32>
    %116 = tpu.matmul %114, %115, %cst_35 {dimension_numbers = #tpu.dot_dimension_numbers<[1], [1], [0], [0], [0, 0, 1, 0], [], []>} : vector<8x8xf32>, vector<8x8xf32>, vector<8x8xf32> -> vector<8x8xf32>
    %cst_36 = arith.constant 0.353553385 : f32
    %117 = vector.broadcast %cst_36 : f32 to vector<8x8xf32>
    %118 = arith.mulf %116, %117 : vector<8x8xf32>
    %119 = vector.broadcast %55 : vector<1x8xf32> to vector<8x8xf32>
    %120 = arith.addf %118, %119 : vector<8x8xf32>
    %cst_37 = arith.constant dense<0xFF800000> : vector<8xf32>
    %121 = vector.multi_reduction <maximumf>, %120, %cst_37 [1] : vector<8x8xf32> to vector<8xf32>
    %122 = vector.shape_cast %121 : vector<8xf32> to vector<8x1xf32>
    %123 = vector.broadcast %122 : vector<8x1xf32> to vector<8x8xf32>
    %124 = arith.subf %120, %123 : vector<8x8xf32>
    %125 = math.exp %124 : vector<8x8xf32>
    %cst_38 = arith.constant dense<0.000000e+00> : vector<8xf32>
    %126 = vector.multi_reduction <add>, %125, %cst_38 [1] : vector<8x8xf32> to vector<8xf32>
    %127 = vector.shape_cast %126 : vector<8xf32> to vector<8x1xf32>
    %128 = vector.broadcast %127 : vector<8x1xf32> to vector<8x8xf32>
    %129 = arith.divf %125, %128 : vector<8x8xf32>
    %130 = vector.extract_strided_slice %59 {offsets = [0, 24], sizes = [8, 8], strides = [1, 1]} : vector<8x32xf32> to vector<8x8xf32>
    %cst_39 = arith.constant dense<0.000000e+00> : vector<8x8xf32>
    %131 = tpu.matmul %129, %130, %cst_39 {dimension_numbers = #tpu.dot_dimension_numbers<[1], [0], [0], [1], [0, 0, 1, 1], [], []>} : vector<8x8xf32>, vector<8x8xf32>, vector<8x8xf32> -> vector<8x8xf32>
    %132 = tpu.concatenate %77, %95, %113, %131 in 1 : vector<8x8xf32>, vector<8x8xf32>, vector<8x8xf32>, vector<8x8xf32> -> vector<8x32xf32>
    %133 = vector.extract_strided_slice %49 {offsets = [8, 0], sizes = [8, 96], strides = [1, 1]} : vector<16x96xf32> to vector<8x96xf32>
    %134 = vector.extract_strided_slice %133 {offsets = [0, 0], sizes = [8, 32], strides = [1, 1]} : vector<8x96xf32> to vector<8x32xf32>
    %135 = vector.extract_strided_slice %133 {offsets = [0, 32], sizes = [8, 32], strides = [1, 1]} : vector<8x96xf32> to vector<8x32xf32>
    %136 = vector.extract_strided_slice %133 {offsets = [0, 64], sizes = [8, 32], strides = [1, 1]} : vector<8x96xf32> to vector<8x32xf32>
    %137 = vector.extract_strided_slice %134 {offsets = [0, 0], sizes = [8, 8], strides = [1, 1]} : vector<8x32xf32> to vector<8x8xf32>
    %138 = vector.extract_strided_slice %135 {offsets = [0, 0], sizes = [8, 8], strides = [1, 1]} : vector<8x32xf32> to vector<8x8xf32>
    %cst_40 = arith.constant dense<0.000000e+00> : vector<8x8xf32>
    %139 = tpu.matmul %137, %138, %cst_40 {dimension_numbers = #tpu.dot_dimension_numbers<[1], [1], [0], [0], [0, 0, 1, 0], [], []>} : vector<8x8xf32>, vector<8x8xf32>, vector<8x8xf32> -> vector<8x8xf32>
    %cst_41 = arith.constant 0.353553385 : f32
    %140 = vector.broadcast %cst_41 : f32 to vector<8x8xf32>
    %141 = arith.mulf %139, %140 : vector<8x8xf32>
    %142 = vector.broadcast %55 : vector<1x8xf32> to vector<8x8xf32>
    %143 = arith.addf %141, %142 : vector<8x8xf32>
    %cst_42 = arith.constant dense<0xFF800000> : vector<8xf32>
    %144 = vector.multi_reduction <maximumf>, %143, %cst_42 [1] : vector<8x8xf32> to vector<8xf32>
    %145 = vector.shape_cast %144 : vector<8xf32> to vector<8x1xf32>
    %146 = vector.broadcast %145 : vector<8x1xf32> to vector<8x8xf32>
    %147 = arith.subf %143, %146 : vector<8x8xf32>
    %148 = math.exp %147 : vector<8x8xf32>
    %cst_43 = arith.constant dense<0.000000e+00> : vector<8xf32>
    %149 = vector.multi_reduction <add>, %148, %cst_43 [1] : vector<8x8xf32> to vector<8xf32>
    %150 = vector.shape_cast %149 : vector<8xf32> to vector<8x1xf32>
    %151 = vector.broadcast %150 : vector<8x1xf32> to vector<8x8xf32>
    %152 = arith.divf %148, %151 : vector<8x8xf32>
    %153 = vector.extract_strided_slice %136 {offsets = [0, 0], sizes = [8, 8], strides = [1, 1]} : vector<8x32xf32> to vector<8x8xf32>
    %cst_44 = arith.constant dense<0.000000e+00> : vector<8x8xf32>
    %154 = tpu.matmul %152, %153, %cst_44 {dimension_numbers = #tpu.dot_dimension_numbers<[1], [0], [0], [1], [0, 0, 1, 1], [], []>} : vector<8x8xf32>, vector<8x8xf32>, vector<8x8xf32> -> vector<8x8xf32>
    %155 = vector.extract_strided_slice %134 {offsets = [0, 8], sizes = [8, 8], strides = [1, 1]} : vector<8x32xf32> to vector<8x8xf32>
    %156 = vector.extract_strided_slice %135 {offsets = [0, 8], sizes = [8, 8], strides = [1, 1]} : vector<8x32xf32> to vector<8x8xf32>
    %cst_45 = arith.constant dense<0.000000e+00> : vector<8x8xf32>
    %157 = tpu.matmul %155, %156, %cst_45 {dimension_numbers = #tpu.dot_dimension_numbers<[1], [1], [0], [0], [0, 0, 1, 0], [], []>} : vector<8x8xf32>, vector<8x8xf32>, vector<8x8xf32> -> vector<8x8xf32>
    %cst_46 = arith.constant 0.353553385 : f32
    %158 = vector.broadcast %cst_46 : f32 to vector<8x8xf32>
    %159 = arith.mulf %157, %158 : vector<8x8xf32>
    %160 = vector.broadcast %55 : vector<1x8xf32> to vector<8x8xf32>
    %161 = arith.addf %159, %160 : vector<8x8xf32>
    %cst_47 = arith.constant dense<0xFF800000> : vector<8xf32>
    %162 = vector.multi_reduction <maximumf>, %161, %cst_47 [1] : vector<8x8xf32> to vector<8xf32>
    %163 = vector.shape_cast %162 : vector<8xf32> to vector<8x1xf32>
    %164 = vector.broadcast %163 : vector<8x1xf32> to vector<8x8xf32>
    %165 = arith.subf %161, %164 : vector<8x8xf32>
    %166 = math.exp %165 : vector<8x8xf32>
    %cst_48 = arith.constant dense<0.000000e+00> : vector<8xf32>
    %167 = vector.multi_reduction <add>, %166, %cst_48 [1] : vector<8x8xf32> to vector<8xf32>
    %168 = vector.shape_cast %167 : vector<8xf32> to vector<8x1xf32>
    %169 = vector.broadcast %168 : vector<8x1xf32> to vector<8x8xf32>
    %170 = arith.divf %166, %169 : vector<8x8xf32>
    %171 = vector.extract_strided_slice %136 {offsets = [0, 8], sizes = [8, 8], strides = [1, 1]} : vector<8x32xf32> to vector<8x8xf32>
    %cst_49 = arith.constant dense<0.000000e+00> : vector<8x8xf32>
    %172 = tpu.matmul %170, %171, %cst_49 {dimension_numbers = #tpu.dot_dimension_numbers<[1], [0], [0], [1], [0, 0, 1, 1], [], []>} : vector<8x8xf32>, vector<8x8xf32>, vector<8x8xf32> -> vector<8x8xf32>
    %173 = vector.extract_strided_slice %134 {offsets = [0, 16], sizes = [8, 8], strides = [1, 1]} : vector<8x32xf32> to vector<8x8xf32>
    %174 = vector.extract_strided_slice %135 {offsets = [0, 16], sizes = [8, 8], strides = [1, 1]} : vector<8x32xf32> to vector<8x8xf32>
    %cst_50 = arith.constant dense<0.000000e+00> : vector<8x8xf32>
    %175 = tpu.matmul %173, %174, %cst_50 {dimension_numbers = #tpu.dot_dimension_numbers<[1], [1], [0], [0], [0, 0, 1, 0], [], []>} : vector<8x8xf32>, vector<8x8xf32>, vector<8x8xf32> -> vector<8x8xf32>
    %cst_51 = arith.constant 0.353553385 : f32
    %176 = vector.broadcast %cst_51 : f32 to vector<8x8xf32>
    %177 = arith.mulf %175, %176 : vector<8x8xf32>
    %178 = vector.broadcast %55 : vector<1x8xf32> to vector<8x8xf32>
    %179 = arith.addf %177, %178 : vector<8x8xf32>
    %cst_52 = arith.constant dense<0xFF800000> : vector<8xf32>
    %180 = vector.multi_reduction <maximumf>, %179, %cst_52 [1] : vector<8x8xf32> to vector<8xf32>
    %181 = vector.shape_cast %180 : vector<8xf32> to vector<8x1xf32>
    %182 = vector.broadcast %181 : vector<8x1xf32> to vector<8x8xf32>
    %183 = arith.subf %179, %182 : vector<8x8xf32>
    %184 = math.exp %183 : vector<8x8xf32>
    %cst_53 = arith.constant dense<0.000000e+00> : vector<8xf32>
    %185 = vector.multi_reduction <add>, %184, %cst_53 [1] : vector<8x8xf32> to vector<8xf32>
    %186 = vector.shape_cast %185 : vector<8xf32> to vector<8x1xf32>
    %187 = vector.broadcast %186 : vector<8x1xf32> to vector<8x8xf32>
    %188 = arith.divf %184, %187 : vector<8x8xf32>
    %189 = vector.extract_strided_slice %136 {offsets = [0, 16], sizes = [8, 8], strides = [1, 1]} : vector<8x32xf32> to vector<8x8xf32>
    %cst_54 = arith.constant dense<0.000000e+00> : vector<8x8xf32>
    %190 = tpu.matmul %188, %189, %cst_54 {dimension_numbers = #tpu.dot_dimension_numbers<[1], [0], [0], [1], [0, 0, 1, 1], [], []>} : vector<8x8xf32>, vector<8x8xf32>, vector<8x8xf32> -> vector<8x8xf32>
    %191 = vector.extract_strided_slice %134 {offsets = [0, 24], sizes = [8, 8], strides = [1, 1]} : vector<8x32xf32> to vector<8x8xf32>
    %192 = vector.extract_strided_slice %135 {offsets = [0, 24], sizes = [8, 8], strides = [1, 1]} : vector<8x32xf32> to vector<8x8xf32>
    %cst_55 = arith.constant dense<0.000000e+00> : vector<8x8xf32>
    %193 = tpu.matmul %191, %192, %cst_55 {dimension_numbers = #tpu.dot_dimension_numbers<[1], [1], [0], [0], [0, 0, 1, 0], [], []>} : vector<8x8xf32>, vector<8x8xf32>, vector<8x8xf32> -> vector<8x8xf32>
    %cst_56 = arith.constant 0.353553385 : f32
    %194 = vector.broadcast %cst_56 : f32 to vector<8x8xf32>
    %195 = arith.mulf %193, %194 : vector<8x8xf32>
    %196 = vector.broadcast %55 : vector<1x8xf32> to vector<8x8xf32>
    %197 = arith.addf %195, %196 : vector<8x8xf32>
    %cst_57 = arith.constant dense<0xFF800000> : vector<8xf32>
    %198 = vector.multi_reduction <maximumf>, %197, %cst_57 [1] : vector<8x8xf32> to vector<8xf32>
    %199 = vector.shape_cast %198 : vector<8xf32> to vector<8x1xf32>
    %200 = vector.broadcast %199 : vector<8x1xf32> to vector<8x8xf32>
    %201 = arith.subf %197, %200 : vector<8x8xf32>
    %202 = math.exp %201 : vector<8x8xf32>
    %cst_58 = arith.constant dense<0.000000e+00> : vector<8xf32>
    %203 = vector.multi_reduction <add>, %202, %cst_58 [1] : vector<8x8xf32> to vector<8xf32>
    %204 = vector.shape_cast %203 : vector<8xf32> to vector<8x1xf32>
    %205 = vector.broadcast %204 : vector<8x1xf32> to vector<8x8xf32>
    %206 = arith.divf %202, %205 : vector<8x8xf32>
    %207 = vector.extract_strided_slice %136 {offsets = [0, 24], sizes = [8, 8], strides = [1, 1]} : vector<8x32xf32> to vector<8x8xf32>
    %cst_59 = arith.constant dense<0.000000e+00> : vector<8x8xf32>
    %208 = tpu.matmul %206, %207, %cst_59 {dimension_numbers = #tpu.dot_dimension_numbers<[1], [0], [0], [1], [0, 0, 1, 1], [], []>} : vector<8x8xf32>, vector<8x8xf32>, vector<8x8xf32> -> vector<8x8xf32>
    %209 = tpu.concatenate %154, %172, %190, %208 in 1 : vector<8x8xf32>, vector<8x8xf32>, vector<8x8xf32>, vector<8x8xf32> -> vector<8x32xf32>
    %210 = tpu.concatenate %132, %209 in 0 : vector<8x32xf32>, vector<8x32xf32> -> vector<16x32xf32>
    %c236 = arith.constant 236 : index
    %c0_60 = arith.constant 0 : index
    %211 = vector.load %arg1[%c236, %c0_60] : memref<371x128xf32, #tpu.memory_space<vmem>>, vector<32x32xf32>
    %cst_61 = arith.constant dense<0.000000e+00> : vector<16x32xf32>
    %212 = tpu.matmul %210, %211, %cst_61 {dimension_numbers = #tpu.dot_dimension_numbers<[1], [0], [0], [1], [0, 0, 1, 1], [], []>} : vector<16x32xf32>, vector<32x32xf32>, vector<16x32xf32> -> vector<16x32xf32>
    %213 = arith.addf %20, %212 : vector<16x32xf32>
    %c268 = arith.constant 268 : index
    %c0_62 = arith.constant 0 : index
    %214 = vector.load %arg1[%c268, %c0_62] : memref<371x128xf32, #tpu.memory_space<vmem>>, vector<1x32xf32>
    %215 = vector.broadcast %214 : vector<1x32xf32> to vector<16x32xf32>
    %216 = arith.addf %213, %215 : vector<16x32xf32>
    %c269 = arith.constant 269 : index
    %c0_63 = arith.constant 0 : index
    %217 = vector.load %arg1[%c269, %c0_63] : memref<371x128xf32, #tpu.memory_space<vmem>>, vector<1x32xf32>
    %c270 = arith.constant 270 : index
    %c0_64 = arith.constant 0 : index
    %218 = vector.load %arg1[%c270, %c0_64] : memref<371x128xf32, #tpu.memory_space<vmem>>, vector<1x32xf32>
    %cst_65 = arith.constant dense<0.000000e+00> : vector<16xf32>
    %219 = vector.multi_reduction <add>, %216, %cst_65 [1] : vector<16x32xf32> to vector<16xf32>
    %220 = vector.shape_cast %219 : vector<16xf32> to vector<16x1xf32>
    %cst_66 = arith.constant 3.200000e+01 : f32
    %221 = vector.broadcast %cst_66 : f32 to vector<16x1xf32>
    %222 = arith.divf %220, %221 : vector<16x1xf32>
    %223 = vector.broadcast %222 : vector<16x1xf32> to vector<16x32xf32>
    %224 = arith.subf %216, %223 : vector<16x32xf32>
    %225 = arith.mulf %224, %224 : vector<16x32xf32>
    %cst_67 = arith.constant dense<0.000000e+00> : vector<16xf32>
    %226 = vector.multi_reduction <add>, %225, %cst_67 [1] : vector<16x32xf32> to vector<16xf32>
    %227 = vector.shape_cast %226 : vector<16xf32> to vector<16x1xf32>
    %cst_68 = arith.constant 3.200000e+01 : f32
    %228 = vector.broadcast %cst_68 : f32 to vector<16x1xf32>
    %229 = arith.divf %227, %228 : vector<16x1xf32>
    %230 = vector.broadcast %222 : vector<16x1xf32> to vector<16x32xf32>
    %231 = arith.subf %216, %230 : vector<16x32xf32>
    %cst_69 = arith.constant 9.99999974E-6 : f32
    %232 = vector.broadcast %cst_69 : f32 to vector<16x1xf32>
    %233 = arith.addf %229, %232 : vector<16x1xf32>
    %234 = math.rsqrt %233 : vector<16x1xf32>
    %235 = vector.broadcast %234 : vector<16x1xf32> to vector<16x32xf32>
    %236 = arith.mulf %231, %235 : vector<16x32xf32>
    %237 = vector.broadcast %217 : vector<1x32xf32> to vector<16x32xf32>
    %238 = arith.mulf %236, %237 : vector<16x32xf32>
    %239 = vector.broadcast %218 : vector<1x32xf32> to vector<16x32xf32>
    %240 = arith.addf %238, %239 : vector<16x32xf32>
    %c271 = arith.constant 271 : index
    %c0_70 = arith.constant 0 : index
    %241 = vector.load %arg1[%c271, %c0_70] : memref<371x128xf32, #tpu.memory_space<vmem>>, vector<32x64xf32>
    %cst_71 = arith.constant dense<0.000000e+00> : vector<16x64xf32>
    %242 = tpu.matmul %240, %241, %cst_71 {dimension_numbers = #tpu.dot_dimension_numbers<[1], [0], [0], [1], [0, 0, 1, 1], [], []>} : vector<16x32xf32>, vector<32x64xf32>, vector<16x64xf32> -> vector<16x64xf32>
    %c303 = arith.constant 303 : index
    %c0_72 = arith.constant 0 : index
    %243 = vector.load %arg1[%c303, %c0_72] : memref<371x128xf32, #tpu.memory_space<vmem>>, vector<1x64xf32>
    %244 = vector.broadcast %243 : vector<1x64xf32> to vector<16x64xf32>
    %245 = arith.addf %242, %244 : vector<16x64xf32>
    %246 = arith.mulf %245, %245 : vector<16x64xf32>
    %247 = arith.mulf %245, %246 : vector<16x64xf32>
    %cst_73 = arith.constant 4.471500e-02 : f32
    %248 = vector.broadcast %cst_73 : f32 to vector<16x64xf32>
    %249 = arith.mulf %248, %247 : vector<16x64xf32>
    %250 = arith.addf %245, %249 : vector<16x64xf32>
    %cst_74 = arith.constant 0.797884583 : f32
    %251 = vector.broadcast %cst_74 : f32 to vector<16x64xf32>
    %252 = arith.mulf %251, %250 : vector<16x64xf32>
    %253 = math.tanh %252 : vector<16x64xf32>
    %cst_75 = arith.constant 1.000000e+00 : f32
    %254 = vector.broadcast %cst_75 : f32 to vector<16x64xf32>
    %255 = arith.addf %254, %253 : vector<16x64xf32>
    %cst_76 = arith.constant 5.000000e-01 : f32
    %256 = vector.broadcast %cst_76 : f32 to vector<16x64xf32>
    %257 = arith.mulf %256, %255 : vector<16x64xf32>
    %258 = arith.mulf %245, %257 : vector<16x64xf32>
    %c304 = arith.constant 304 : index
    %c0_77 = arith.constant 0 : index
    %259 = vector.load %arg1[%c304, %c0_77] : memref<371x128xf32, #tpu.memory_space<vmem>>, vector<64x32xf32>
    %cst_78 = arith.constant dense<0.000000e+00> : vector<16x32xf32>
    %260 = tpu.matmul %258, %259, %cst_78 {dimension_numbers = #tpu.dot_dimension_numbers<[1], [0], [0], [1], [0, 0, 1, 1], [], []>} : vector<16x64xf32>, vector<64x32xf32>, vector<16x32xf32> -> vector<16x32xf32>
    %c368 = arith.constant 368 : index
    %c0_79 = arith.constant 0 : index
    %261 = vector.load %arg1[%c368, %c0_79] : memref<371x128xf32, #tpu.memory_space<vmem>>, vector<1x32xf32>
    %262 = vector.broadcast %261 : vector<1x32xf32> to vector<16x32xf32>
    %263 = arith.addf %260, %262 : vector<16x32xf32>
    %264 = arith.addf %216, %263 : vector<16x32xf32>
    %c369 = arith.constant 369 : index
    %c0_80 = arith.constant 0 : index
    %265 = vector.load %arg1[%c369, %c0_80] : memref<371x128xf32, #tpu.memory_space<vmem>>, vector<1x32xf32>
    %c370 = arith.constant 370 : index
    %c0_81 = arith.constant 0 : index
    %266 = vector.load %arg1[%c370, %c0_81] : memref<371x128xf32, #tpu.memory_space<vmem>>, vector<1x32xf32>
    %cst_82 = arith.constant dense<0.000000e+00> : vector<16xf32>
    %267 = vector.multi_reduction <add>, %264, %cst_82 [1] : vector<16x32xf32> to vector<16xf32>
    %268 = vector.shape_cast %267 : vector<16xf32> to vector<16x1xf32>
    %cst_83 = arith.constant 3.200000e+01 : f32
    %269 = vector.broadcast %cst_83 : f32 to vector<16x1xf32>
    %270 = arith.divf %268, %269 : vector<16x1xf32>
    %271 = vector.broadcast %270 : vector<16x1xf32> to vector<16x32xf32>
    %272 = arith.subf %264, %271 : vector<16x32xf32>
    %273 = arith.mulf %272, %272 : vector<16x32xf32>
    %cst_84 = arith.constant dense<0.000000e+00> : vector<16xf32>
    %274 = vector.multi_reduction <add>, %273, %cst_84 [1] : vector<16x32xf32> to vector<16xf32>
    %275 = vector.shape_cast %274 : vector<16xf32> to vector<16x1xf32>
    %cst_85 = arith.constant 3.200000e+01 : f32
    %276 = vector.broadcast %cst_85 : f32 to vector<16x1xf32>
    %277 = arith.divf %275, %276 : vector<16x1xf32>
    %278 = vector.broadcast %270 : vector<16x1xf32> to vector<16x32xf32>
    %279 = arith.subf %264, %278 : vector<16x32xf32>
    %cst_86 = arith.constant 9.99999974E-6 : f32
    %280 = vector.broadcast %cst_86 : f32 to vector<16x1xf32>
    %281 = arith.addf %277, %280 : vector<16x1xf32>
    %282 = math.rsqrt %281 : vector<16x1xf32>
    %283 = vector.broadcast %282 : vector<16x1xf32> to vector<16x32xf32>
    %284 = arith.mulf %279, %283 : vector<16x32xf32>
    %285 = vector.broadcast %265 : vector<1x32xf32> to vector<16x32xf32>
    %286 = arith.mulf %284, %285 : vector<16x32xf32>
    %287 = vector.broadcast %266 : vector<1x32xf32> to vector<16x32xf32>
    %288 = arith.addf %286, %287 : vector<16x32xf32>
    %c0_87 = arith.constant 0 : index
    %c0_88 = arith.constant 0 : index
    %289 = vector.load %arg2[%c0_87, %c0_88] : memref<16x32xf32, #tpu.memory_space<vmem>>, vector<16x32xf32>
    tpu.vector_store %arg2[%c0_87, %c0_88], %288 {strides = array<i32>} : memref<16x32xf32, #tpu.memory_space<vmem>>, vector<16x32xf32>,
    return
  }
}

module attributes {stable_mosaic.version = 11 : i64} {
  func.func @_itc_kernel(%arg0: memref<16x1xi32, #tpu.memory_space<vmem>>, %arg1: memref<2x8xf32, #tpu.memory_space<vmem>>, %arg2: memref<16x32xf32, #tpu.memory_space<vmem>>, %arg3: memref<442x128xf32, #tpu.memory_space<vmem>>, %arg4: memref<9x128xf32, #tpu.memory_space<vmem>>) attributes {dimension_semantics = [], scalar_prefetch = 0 : i64, scratch_operands = 0 : i64, tpu.core_type = #tpu.core_type<tc>} {
    %c0 = arith.constant 0 : index
    %c0_0 = arith.constant 0 : index
    %0 = vector.load %arg0[%c0, %c0_0] : memref<16x1xi32, #tpu.memory_space<vmem>>, vector<16x1xi32>
    %c0_1 = arith.constant 0 : index
    %c0_2 = arith.constant 0 : index
    %1 = vector.load %arg1[%c0_1, %c0_2] : memref<2x8xf32, #tpu.memory_space<vmem>>, vector<2x8xf32>
    %2 = tpu.iota {dimensions = array<i32: 1>} : vector<16x64xi32>
    %3 = vector.broadcast %0 : vector<16x1xi32> to vector<16x64xi32>
    %4 = arith.cmpi eq, %2, %3 : vector<16x64xi32>
    %cst = arith.constant 1.000000e+00 : f32
    %cst_3 = arith.constant 0.000000e+00 : f32
    %5 = vector.broadcast %cst : f32 to vector<16x64xf32>
    %6 = vector.broadcast %cst_3 : f32 to vector<16x64xf32>
    %7 = arith.select %4, %5, %6 : vector<16x64xi1>, vector<16x64xf32>
    %c64 = arith.constant 64 : index
    %c0_4 = arith.constant 0 : index
    %8 = vector.load %arg3[%c64, %c0_4] : memref<442x128xf32, #tpu.memory_space<vmem>>, vector<8x32xf32>
    %c0_5 = arith.constant 0 : index
    %c0_6 = arith.constant 0 : index
    %9 = vector.load %arg3[%c0_5, %c0_6] : memref<442x128xf32, #tpu.memory_space<vmem>>, vector<64x32xf32>
    %cst_7 = arith.constant dense<0.000000e+00> : vector<16x32xf32>
    %10 = tpu.matmul %7, %9, %cst_7 {dimension_numbers = #tpu.dot_dimension_numbers<[1], [0], [0], [1], [0, 0, 1, 1], [], []>} : vector<16x64xf32>, vector<64x32xf32>, vector<16x32xf32> -> vector<16x32xf32>
    %11 = tpu.concatenate %8, %8 in 0 : vector<8x32xf32>, vector<8x32xf32> -> vector<16x32xf32>
    %12 = arith.addf %10, %11 : vector<16x32xf32>
    %c72 = arith.constant 72 : index
    %c0_8 = arith.constant 0 : index
    %13 = vector.load %arg3[%c72, %c0_8] : memref<442x128xf32, #tpu.memory_space<vmem>>, vector<1x32xf32>
    %c73 = arith.constant 73 : index
    %c0_9 = arith.constant 0 : index
    %14 = vector.load %arg3[%c73, %c0_9] : memref<442x128xf32, #tpu.memory_space<vmem>>, vector<1x32xf32>
    %cst_10 = arith.constant dense<0.000000e+00> : vector<16xf32>
    %15 = vector.multi_reduction <add>, %12, %cst_10 [1] : vector<16x32xf32> to vector<16xf32>
    %16 = vector.shape_cast %15 : vector<16xf32> to vector<16x1xf32>
    %cst_11 = arith.constant 3.200000e+01 : f32
    %17 = vector.broadcast %cst_11 : f32 to vector<16x1xf32>
    %18 = arith.divf %16, %17 : vector<16x1xf32>
    %19 = vector.broadcast %18 : vector<16x1xf32> to vector<16x32xf32>
    %20 = arith.subf %12, %19 : vector<16x32xf32>
    %21 = arith.mulf %20, %20 : vector<16x32xf32>
    %cst_12 = arith.constant dense<0.000000e+00> : vector<16xf32>
    %22 = vector.multi_reduction <add>, %21, %cst_12 [1] : vector<16x32xf32> to vector<16xf32>
    %23 = vector.shape_cast %22 : vector<16xf32> to vector<16x1xf32>
    %cst_13 = arith.constant 3.200000e+01 : f32
    %24 = vector.broadcast %cst_13 : f32 to vector<16x1xf32>
    %25 = arith.divf %23, %24 : vector<16x1xf32>
    %26 = vector.broadcast %18 : vector<16x1xf32> to vector<16x32xf32>
    %27 = arith.subf %12, %26 : vector<16x32xf32>
    %cst_14 = arith.constant 9.99999996E-13 : f32
    %28 = vector.broadcast %cst_14 : f32 to vector<16x1xf32>
    %29 = arith.addf %25, %28 : vector<16x1xf32>
    %30 = math.rsqrt %29 : vector<16x1xf32>
    %31 = vector.broadcast %30 : vector<16x1xf32> to vector<16x32xf32>
    %32 = arith.mulf %27, %31 : vector<16x32xf32>
    %33 = vector.broadcast %13 : vector<1x32xf32> to vector<16x32xf32>
    %34 = arith.mulf %32, %33 : vector<16x32xf32>
    %35 = vector.broadcast %14 : vector<1x32xf32> to vector<16x32xf32>
    %36 = arith.addf %34, %35 : vector<16x32xf32>
    %c74 = arith.constant 74 : index
    %c0_15 = arith.constant 0 : index
    %37 = vector.load %arg3[%c74, %c0_15] : memref<442x128xf32, #tpu.memory_space<vmem>>, vector<32x96xf32>
    %cst_16 = arith.constant dense<0.000000e+00> : vector<16x96xf32>
    %38 = tpu.matmul %36, %37, %cst_16 {dimension_numbers = #tpu.dot_dimension_numbers<[1], [0], [0], [1], [0, 0, 1, 1], [], []>} : vector<16x32xf32>, vector<32x96xf32>, vector<16x96xf32> -> vector<16x96xf32>
    %c106 = arith.constant 106 : index
    %c0_17 = arith.constant 0 : index
    %39 = vector.load %arg3[%c106, %c0_17] : memref<442x128xf32, #tpu.memory_space<vmem>>, vector<1x96xf32>
    %40 = vector.broadcast %39 : vector<1x96xf32> to vector<16x96xf32>
    %41 = arith.addf %38, %40 : vector<16x96xf32>
    %42 = vector.extract_strided_slice %41 {offsets = [0, 0], sizes = [8, 96], strides = [1, 1]} : vector<16x96xf32> to vector<8x96xf32>
    %43 = vector.extract_strided_slice %1 {offsets = [0, 0], sizes = [1, 8], strides = [1, 1]} : vector<2x8xf32> to vector<1x8xf32>
    %cst_18 = arith.constant 1.000000e+00 : f32
    %44 = vector.broadcast %cst_18 : f32 to vector<1x8xf32>
    %45 = arith.subf %44, %43 : vector<1x8xf32>
    %cst_19 = arith.constant -1.000000e+09 : f32
    %46 = vector.broadcast %cst_19 : f32 to vector<1x8xf32>
    %47 = arith.mulf %45, %46 : vector<1x8xf32>
    %48 = vector.extract_strided_slice %42 {offsets = [0, 0], sizes = [8, 32], strides = [1, 1]} : vector<8x96xf32> to vector<8x32xf32>
    %49 = vector.extract_strided_slice %42 {offsets = [0, 32], sizes = [8, 32], strides = [1, 1]} : vector<8x96xf32> to vector<8x32xf32>
    %50 = vector.extract_strided_slice %42 {offsets = [0, 64], sizes = [8, 32], strides = [1, 1]} : vector<8x96xf32> to vector<8x32xf32>
    %51 = vector.extract_strided_slice %48 {offsets = [0, 0], sizes = [8, 8], strides = [1, 1]} : vector<8x32xf32> to vector<8x8xf32>
    %52 = vector.extract_strided_slice %49 {offsets = [0, 0], sizes = [8, 8], strides = [1, 1]} : vector<8x32xf32> to vector<8x8xf32>
    %cst_20 = arith.constant dense<0.000000e+00> : vector<8x8xf32>
    %53 = tpu.matmul %51, %52, %cst_20 {dimension_numbers = #tpu.dot_dimension_numbers<[1], [1], [0], [0], [0, 0, 1, 0], [], []>} : vector<8x8xf32>, vector<8x8xf32>, vector<8x8xf32> -> vector<8x8xf32>
    %cst_21 = arith.constant 0.353553385 : f32
    %54 = vector.broadcast %cst_21 : f32 to vector<8x8xf32>
    %55 = arith.mulf %53, %54 : vector<8x8xf32>
    %56 = vector.broadcast %47 : vector<1x8xf32> to vector<8x8xf32>
    %57 = arith.addf %55, %56 : vector<8x8xf32>
    %cst_22 = arith.constant dense<0xFF800000> : vector<8xf32>
    %58 = vector.multi_reduction <maximumf>, %57, %cst_22 [1] : vector<8x8xf32> to vector<8xf32>
    %59 = vector.shape_cast %58 : vector<8xf32> to vector<8x1xf32>
    %60 = vector.broadcast %59 : vector<8x1xf32> to vector<8x8xf32>
    %61 = arith.subf %57, %60 : vector<8x8xf32>
    %62 = math.exp %61 : vector<8x8xf32>
    %cst_23 = arith.constant dense<0.000000e+00> : vector<8xf32>
    %63 = vector.multi_reduction <add>, %62, %cst_23 [1] : vector<8x8xf32> to vector<8xf32>
    %64 = vector.shape_cast %63 : vector<8xf32> to vector<8x1xf32>
    %65 = vector.broadcast %64 : vector<8x1xf32> to vector<8x8xf32>
    %66 = arith.divf %62, %65 : vector<8x8xf32>
    %67 = vector.extract_strided_slice %50 {offsets = [0, 0], sizes = [8, 8], strides = [1, 1]} : vector<8x32xf32> to vector<8x8xf32>
    %cst_24 = arith.constant dense<0.000000e+00> : vector<8x8xf32>
    %68 = tpu.matmul %66, %67, %cst_24 {dimension_numbers = #tpu.dot_dimension_numbers<[1], [0], [0], [1], [0, 0, 1, 1], [], []>} : vector<8x8xf32>, vector<8x8xf32>, vector<8x8xf32> -> vector<8x8xf32>
    %69 = vector.extract_strided_slice %48 {offsets = [0, 8], sizes = [8, 8], strides = [1, 1]} : vector<8x32xf32> to vector<8x8xf32>
    %70 = vector.extract_strided_slice %49 {offsets = [0, 8], sizes = [8, 8], strides = [1, 1]} : vector<8x32xf32> to vector<8x8xf32>
    %cst_25 = arith.constant dense<0.000000e+00> : vector<8x8xf32>
    %71 = tpu.matmul %69, %70, %cst_25 {dimension_numbers = #tpu.dot_dimension_numbers<[1], [1], [0], [0], [0, 0, 1, 0], [], []>} : vector<8x8xf32>, vector<8x8xf32>, vector<8x8xf32> -> vector<8x8xf32>
    %cst_26 = arith.constant 0.353553385 : f32
    %72 = vector.broadcast %cst_26 : f32 to vector<8x8xf32>
    %73 = arith.mulf %71, %72 : vector<8x8xf32>
    %74 = vector.broadcast %47 : vector<1x8xf32> to vector<8x8xf32>
    %75 = arith.addf %73, %74 : vector<8x8xf32>
    %cst_27 = arith.constant dense<0xFF800000> : vector<8xf32>
    %76 = vector.multi_reduction <maximumf>, %75, %cst_27 [1] : vector<8x8xf32> to vector<8xf32>
    %77 = vector.shape_cast %76 : vector<8xf32> to vector<8x1xf32>
    %78 = vector.broadcast %77 : vector<8x1xf32> to vector<8x8xf32>
    %79 = arith.subf %75, %78 : vector<8x8xf32>
    %80 = math.exp %79 : vector<8x8xf32>
    %cst_28 = arith.constant dense<0.000000e+00> : vector<8xf32>
    %81 = vector.multi_reduction <add>, %80, %cst_28 [1] : vector<8x8xf32> to vector<8xf32>
    %82 = vector.shape_cast %81 : vector<8xf32> to vector<8x1xf32>
    %83 = vector.broadcast %82 : vector<8x1xf32> to vector<8x8xf32>
    %84 = arith.divf %80, %83 : vector<8x8xf32>
    %85 = vector.extract_strided_slice %50 {offsets = [0, 8], sizes = [8, 8], strides = [1, 1]} : vector<8x32xf32> to vector<8x8xf32>
    %cst_29 = arith.constant dense<0.000000e+00> : vector<8x8xf32>
    %86 = tpu.matmul %84, %85, %cst_29 {dimension_numbers = #tpu.dot_dimension_numbers<[1], [0], [0], [1], [0, 0, 1, 1], [], []>} : vector<8x8xf32>, vector<8x8xf32>, vector<8x8xf32> -> vector<8x8xf32>
    %87 = vector.extract_strided_slice %48 {offsets = [0, 16], sizes = [8, 8], strides = [1, 1]} : vector<8x32xf32> to vector<8x8xf32>
    %88 = vector.extract_strided_slice %49 {offsets = [0, 16], sizes = [8, 8], strides = [1, 1]} : vector<8x32xf32> to vector<8x8xf32>
    %cst_30 = arith.constant dense<0.000000e+00> : vector<8x8xf32>
    %89 = tpu.matmul %87, %88, %cst_30 {dimension_numbers = #tpu.dot_dimension_numbers<[1], [1], [0], [0], [0, 0, 1, 0], [], []>} : vector<8x8xf32>, vector<8x8xf32>, vector<8x8xf32> -> vector<8x8xf32>
    %cst_31 = arith.constant 0.353553385 : f32
    %90 = vector.broadcast %cst_31 : f32 to vector<8x8xf32>
    %91 = arith.mulf %89, %90 : vector<8x8xf32>
    %92 = vector.broadcast %47 : vector<1x8xf32> to vector<8x8xf32>
    %93 = arith.addf %91, %92 : vector<8x8xf32>
    %cst_32 = arith.constant dense<0xFF800000> : vector<8xf32>
    %94 = vector.multi_reduction <maximumf>, %93, %cst_32 [1] : vector<8x8xf32> to vector<8xf32>
    %95 = vector.shape_cast %94 : vector<8xf32> to vector<8x1xf32>
    %96 = vector.broadcast %95 : vector<8x1xf32> to vector<8x8xf32>
    %97 = arith.subf %93, %96 : vector<8x8xf32>
    %98 = math.exp %97 : vector<8x8xf32>
    %cst_33 = arith.constant dense<0.000000e+00> : vector<8xf32>
    %99 = vector.multi_reduction <add>, %98, %cst_33 [1] : vector<8x8xf32> to vector<8xf32>
    %100 = vector.shape_cast %99 : vector<8xf32> to vector<8x1xf32>
    %101 = vector.broadcast %100 : vector<8x1xf32> to vector<8x8xf32>
    %102 = arith.divf %98, %101 : vector<8x8xf32>
    %103 = vector.extract_strided_slice %50 {offsets = [0, 16], sizes = [8, 8], strides = [1, 1]} : vector<8x32xf32> to vector<8x8xf32>
    %cst_34 = arith.constant dense<0.000000e+00> : vector<8x8xf32>
    %104 = tpu.matmul %102, %103, %cst_34 {dimension_numbers = #tpu.dot_dimension_numbers<[1], [0], [0], [1], [0, 0, 1, 1], [], []>} : vector<8x8xf32>, vector<8x8xf32>, vector<8x8xf32> -> vector<8x8xf32>
    %105 = vector.extract_strided_slice %48 {offsets = [0, 24], sizes = [8, 8], strides = [1, 1]} : vector<8x32xf32> to vector<8x8xf32>
    %106 = vector.extract_strided_slice %49 {offsets = [0, 24], sizes = [8, 8], strides = [1, 1]} : vector<8x32xf32> to vector<8x8xf32>
    %cst_35 = arith.constant dense<0.000000e+00> : vector<8x8xf32>
    %107 = tpu.matmul %105, %106, %cst_35 {dimension_numbers = #tpu.dot_dimension_numbers<[1], [1], [0], [0], [0, 0, 1, 0], [], []>} : vector<8x8xf32>, vector<8x8xf32>, vector<8x8xf32> -> vector<8x8xf32>
    %cst_36 = arith.constant 0.353553385 : f32
    %108 = vector.broadcast %cst_36 : f32 to vector<8x8xf32>
    %109 = arith.mulf %107, %108 : vector<8x8xf32>
    %110 = vector.broadcast %47 : vector<1x8xf32> to vector<8x8xf32>
    %111 = arith.addf %109, %110 : vector<8x8xf32>
    %cst_37 = arith.constant dense<0xFF800000> : vector<8xf32>
    %112 = vector.multi_reduction <maximumf>, %111, %cst_37 [1] : vector<8x8xf32> to vector<8xf32>
    %113 = vector.shape_cast %112 : vector<8xf32> to vector<8x1xf32>
    %114 = vector.broadcast %113 : vector<8x1xf32> to vector<8x8xf32>
    %115 = arith.subf %111, %114 : vector<8x8xf32>
    %116 = math.exp %115 : vector<8x8xf32>
    %cst_38 = arith.constant dense<0.000000e+00> : vector<8xf32>
    %117 = vector.multi_reduction <add>, %116, %cst_38 [1] : vector<8x8xf32> to vector<8xf32>
    %118 = vector.shape_cast %117 : vector<8xf32> to vector<8x1xf32>
    %119 = vector.broadcast %118 : vector<8x1xf32> to vector<8x8xf32>
    %120 = arith.divf %116, %119 : vector<8x8xf32>
    %121 = vector.extract_strided_slice %50 {offsets = [0, 24], sizes = [8, 8], strides = [1, 1]} : vector<8x32xf32> to vector<8x8xf32>
    %cst_39 = arith.constant dense<0.000000e+00> : vector<8x8xf32>
    %122 = tpu.matmul %120, %121, %cst_39 {dimension_numbers = #tpu.dot_dimension_numbers<[1], [0], [0], [1], [0, 0, 1, 1], [], []>} : vector<8x8xf32>, vector<8x8xf32>, vector<8x8xf32> -> vector<8x8xf32>
    %123 = tpu.concatenate %68, %86, %104, %122 in 1 : vector<8x8xf32>, vector<8x8xf32>, vector<8x8xf32>, vector<8x8xf32> -> vector<8x32xf32>
    %124 = vector.extract_strided_slice %41 {offsets = [8, 0], sizes = [8, 96], strides = [1, 1]} : vector<16x96xf32> to vector<8x96xf32>
    %125 = vector.extract_strided_slice %1 {offsets = [1, 0], sizes = [1, 8], strides = [1, 1]} : vector<2x8xf32> to vector<1x8xf32>
    %cst_40 = arith.constant 1.000000e+00 : f32
    %126 = vector.broadcast %cst_40 : f32 to vector<1x8xf32>
    %127 = arith.subf %126, %125 : vector<1x8xf32>
    %cst_41 = arith.constant -1.000000e+09 : f32
    %128 = vector.broadcast %cst_41 : f32 to vector<1x8xf32>
    %129 = arith.mulf %127, %128 : vector<1x8xf32>
    %130 = vector.extract_strided_slice %124 {offsets = [0, 0], sizes = [8, 32], strides = [1, 1]} : vector<8x96xf32> to vector<8x32xf32>
    %131 = vector.extract_strided_slice %124 {offsets = [0, 32], sizes = [8, 32], strides = [1, 1]} : vector<8x96xf32> to vector<8x32xf32>
    %132 = vector.extract_strided_slice %124 {offsets = [0, 64], sizes = [8, 32], strides = [1, 1]} : vector<8x96xf32> to vector<8x32xf32>
    %133 = vector.extract_strided_slice %130 {offsets = [0, 0], sizes = [8, 8], strides = [1, 1]} : vector<8x32xf32> to vector<8x8xf32>
    %134 = vector.extract_strided_slice %131 {offsets = [0, 0], sizes = [8, 8], strides = [1, 1]} : vector<8x32xf32> to vector<8x8xf32>
    %cst_42 = arith.constant dense<0.000000e+00> : vector<8x8xf32>
    %135 = tpu.matmul %133, %134, %cst_42 {dimension_numbers = #tpu.dot_dimension_numbers<[1], [1], [0], [0], [0, 0, 1, 0], [], []>} : vector<8x8xf32>, vector<8x8xf32>, vector<8x8xf32> -> vector<8x8xf32>
    %cst_43 = arith.constant 0.353553385 : f32
    %136 = vector.broadcast %cst_43 : f32 to vector<8x8xf32>
    %137 = arith.mulf %135, %136 : vector<8x8xf32>
    %138 = vector.broadcast %129 : vector<1x8xf32> to vector<8x8xf32>
    %139 = arith.addf %137, %138 : vector<8x8xf32>
    %cst_44 = arith.constant dense<0xFF800000> : vector<8xf32>
    %140 = vector.multi_reduction <maximumf>, %139, %cst_44 [1] : vector<8x8xf32> to vector<8xf32>
    %141 = vector.shape_cast %140 : vector<8xf32> to vector<8x1xf32>
    %142 = vector.broadcast %141 : vector<8x1xf32> to vector<8x8xf32>
    %143 = arith.subf %139, %142 : vector<8x8xf32>
    %144 = math.exp %143 : vector<8x8xf32>
    %cst_45 = arith.constant dense<0.000000e+00> : vector<8xf32>
    %145 = vector.multi_reduction <add>, %144, %cst_45 [1] : vector<8x8xf32> to vector<8xf32>
    %146 = vector.shape_cast %145 : vector<8xf32> to vector<8x1xf32>
    %147 = vector.broadcast %146 : vector<8x1xf32> to vector<8x8xf32>
    %148 = arith.divf %144, %147 : vector<8x8xf32>
    %149 = vector.extract_strided_slice %132 {offsets = [0, 0], sizes = [8, 8], strides = [1, 1]} : vector<8x32xf32> to vector<8x8xf32>
    %cst_46 = arith.constant dense<0.000000e+00> : vector<8x8xf32>
    %150 = tpu.matmul %148, %149, %cst_46 {dimension_numbers = #tpu.dot_dimension_numbers<[1], [0], [0], [1], [0, 0, 1, 1], [], []>} : vector<8x8xf32>, vector<8x8xf32>, vector<8x8xf32> -> vector<8x8xf32>
    %151 = vector.extract_strided_slice %130 {offsets = [0, 8], sizes = [8, 8], strides = [1, 1]} : vector<8x32xf32> to vector<8x8xf32>
    %152 = vector.extract_strided_slice %131 {offsets = [0, 8], sizes = [8, 8], strides = [1, 1]} : vector<8x32xf32> to vector<8x8xf32>
    %cst_47 = arith.constant dense<0.000000e+00> : vector<8x8xf32>
    %153 = tpu.matmul %151, %152, %cst_47 {dimension_numbers = #tpu.dot_dimension_numbers<[1], [1], [0], [0], [0, 0, 1, 0], [], []>} : vector<8x8xf32>, vector<8x8xf32>, vector<8x8xf32> -> vector<8x8xf32>
    %cst_48 = arith.constant 0.353553385 : f32
    %154 = vector.broadcast %cst_48 : f32 to vector<8x8xf32>
    %155 = arith.mulf %153, %154 : vector<8x8xf32>
    %156 = vector.broadcast %129 : vector<1x8xf32> to vector<8x8xf32>
    %157 = arith.addf %155, %156 : vector<8x8xf32>
    %cst_49 = arith.constant dense<0xFF800000> : vector<8xf32>
    %158 = vector.multi_reduction <maximumf>, %157, %cst_49 [1] : vector<8x8xf32> to vector<8xf32>
    %159 = vector.shape_cast %158 : vector<8xf32> to vector<8x1xf32>
    %160 = vector.broadcast %159 : vector<8x1xf32> to vector<8x8xf32>
    %161 = arith.subf %157, %160 : vector<8x8xf32>
    %162 = math.exp %161 : vector<8x8xf32>
    %cst_50 = arith.constant dense<0.000000e+00> : vector<8xf32>
    %163 = vector.multi_reduction <add>, %162, %cst_50 [1] : vector<8x8xf32> to vector<8xf32>
    %164 = vector.shape_cast %163 : vector<8xf32> to vector<8x1xf32>
    %165 = vector.broadcast %164 : vector<8x1xf32> to vector<8x8xf32>
    %166 = arith.divf %162, %165 : vector<8x8xf32>
    %167 = vector.extract_strided_slice %132 {offsets = [0, 8], sizes = [8, 8], strides = [1, 1]} : vector<8x32xf32> to vector<8x8xf32>
    %cst_51 = arith.constant dense<0.000000e+00> : vector<8x8xf32>
    %168 = tpu.matmul %166, %167, %cst_51 {dimension_numbers = #tpu.dot_dimension_numbers<[1], [0], [0], [1], [0, 0, 1, 1], [], []>} : vector<8x8xf32>, vector<8x8xf32>, vector<8x8xf32> -> vector<8x8xf32>
    %169 = vector.extract_strided_slice %130 {offsets = [0, 16], sizes = [8, 8], strides = [1, 1]} : vector<8x32xf32> to vector<8x8xf32>
    %170 = vector.extract_strided_slice %131 {offsets = [0, 16], sizes = [8, 8], strides = [1, 1]} : vector<8x32xf32> to vector<8x8xf32>
    %cst_52 = arith.constant dense<0.000000e+00> : vector<8x8xf32>
    %171 = tpu.matmul %169, %170, %cst_52 {dimension_numbers = #tpu.dot_dimension_numbers<[1], [1], [0], [0], [0, 0, 1, 0], [], []>} : vector<8x8xf32>, vector<8x8xf32>, vector<8x8xf32> -> vector<8x8xf32>
    %cst_53 = arith.constant 0.353553385 : f32
    %172 = vector.broadcast %cst_53 : f32 to vector<8x8xf32>
    %173 = arith.mulf %171, %172 : vector<8x8xf32>
    %174 = vector.broadcast %129 : vector<1x8xf32> to vector<8x8xf32>
    %175 = arith.addf %173, %174 : vector<8x8xf32>
    %cst_54 = arith.constant dense<0xFF800000> : vector<8xf32>
    %176 = vector.multi_reduction <maximumf>, %175, %cst_54 [1] : vector<8x8xf32> to vector<8xf32>
    %177 = vector.shape_cast %176 : vector<8xf32> to vector<8x1xf32>
    %178 = vector.broadcast %177 : vector<8x1xf32> to vector<8x8xf32>
    %179 = arith.subf %175, %178 : vector<8x8xf32>
    %180 = math.exp %179 : vector<8x8xf32>
    %cst_55 = arith.constant dense<0.000000e+00> : vector<8xf32>
    %181 = vector.multi_reduction <add>, %180, %cst_55 [1] : vector<8x8xf32> to vector<8xf32>
    %182 = vector.shape_cast %181 : vector<8xf32> to vector<8x1xf32>
    %183 = vector.broadcast %182 : vector<8x1xf32> to vector<8x8xf32>
    %184 = arith.divf %180, %183 : vector<8x8xf32>
    %185 = vector.extract_strided_slice %132 {offsets = [0, 16], sizes = [8, 8], strides = [1, 1]} : vector<8x32xf32> to vector<8x8xf32>
    %cst_56 = arith.constant dense<0.000000e+00> : vector<8x8xf32>
    %186 = tpu.matmul %184, %185, %cst_56 {dimension_numbers = #tpu.dot_dimension_numbers<[1], [0], [0], [1], [0, 0, 1, 1], [], []>} : vector<8x8xf32>, vector<8x8xf32>, vector<8x8xf32> -> vector<8x8xf32>
    %187 = vector.extract_strided_slice %130 {offsets = [0, 24], sizes = [8, 8], strides = [1, 1]} : vector<8x32xf32> to vector<8x8xf32>
    %188 = vector.extract_strided_slice %131 {offsets = [0, 24], sizes = [8, 8], strides = [1, 1]} : vector<8x32xf32> to vector<8x8xf32>
    %cst_57 = arith.constant dense<0.000000e+00> : vector<8x8xf32>
    %189 = tpu.matmul %187, %188, %cst_57 {dimension_numbers = #tpu.dot_dimension_numbers<[1], [1], [0], [0], [0, 0, 1, 0], [], []>} : vector<8x8xf32>, vector<8x8xf32>, vector<8x8xf32> -> vector<8x8xf32>
    %cst_58 = arith.constant 0.353553385 : f32
    %190 = vector.broadcast %cst_58 : f32 to vector<8x8xf32>
    %191 = arith.mulf %189, %190 : vector<8x8xf32>
    %192 = vector.broadcast %129 : vector<1x8xf32> to vector<8x8xf32>
    %193 = arith.addf %191, %192 : vector<8x8xf32>
    %cst_59 = arith.constant dense<0xFF800000> : vector<8xf32>
    %194 = vector.multi_reduction <maximumf>, %193, %cst_59 [1] : vector<8x8xf32> to vector<8xf32>
    %195 = vector.shape_cast %194 : vector<8xf32> to vector<8x1xf32>
    %196 = vector.broadcast %195 : vector<8x1xf32> to vector<8x8xf32>
    %197 = arith.subf %193, %196 : vector<8x8xf32>
    %198 = math.exp %197 : vector<8x8xf32>
    %cst_60 = arith.constant dense<0.000000e+00> : vector<8xf32>
    %199 = vector.multi_reduction <add>, %198, %cst_60 [1] : vector<8x8xf32> to vector<8xf32>
    %200 = vector.shape_cast %199 : vector<8xf32> to vector<8x1xf32>
    %201 = vector.broadcast %200 : vector<8x1xf32> to vector<8x8xf32>
    %202 = arith.divf %198, %201 : vector<8x8xf32>
    %203 = vector.extract_strided_slice %132 {offsets = [0, 24], sizes = [8, 8], strides = [1, 1]} : vector<8x32xf32> to vector<8x8xf32>
    %cst_61 = arith.constant dense<0.000000e+00> : vector<8x8xf32>
    %204 = tpu.matmul %202, %203, %cst_61 {dimension_numbers = #tpu.dot_dimension_numbers<[1], [0], [0], [1], [0, 0, 1, 1], [], []>} : vector<8x8xf32>, vector<8x8xf32>, vector<8x8xf32> -> vector<8x8xf32>
    %205 = tpu.concatenate %150, %168, %186, %204 in 1 : vector<8x8xf32>, vector<8x8xf32>, vector<8x8xf32>, vector<8x8xf32> -> vector<8x32xf32>
    %206 = tpu.concatenate %123, %205 in 0 : vector<8x32xf32>, vector<8x32xf32> -> vector<16x32xf32>
    %c107 = arith.constant 107 : index
    %c0_62 = arith.constant 0 : index
    %207 = vector.load %arg3[%c107, %c0_62] : memref<442x128xf32, #tpu.memory_space<vmem>>, vector<32x32xf32>
    %cst_63 = arith.constant dense<0.000000e+00> : vector<16x32xf32>
    %208 = tpu.matmul %206, %207, %cst_63 {dimension_numbers = #tpu.dot_dimension_numbers<[1], [0], [0], [1], [0, 0, 1, 1], [], []>} : vector<16x32xf32>, vector<32x32xf32>, vector<16x32xf32> -> vector<16x32xf32>
    %209 = arith.addf %36, %208 : vector<16x32xf32>
    %c139 = arith.constant 139 : index
    %c0_64 = arith.constant 0 : index
    %210 = vector.load %arg3[%c139, %c0_64] : memref<442x128xf32, #tpu.memory_space<vmem>>, vector<1x32xf32>
    %211 = vector.broadcast %210 : vector<1x32xf32> to vector<16x32xf32>
    %212 = arith.addf %209, %211 : vector<16x32xf32>
    %c140 = arith.constant 140 : index
    %c0_65 = arith.constant 0 : index
    %213 = vector.load %arg3[%c140, %c0_65] : memref<442x128xf32, #tpu.memory_space<vmem>>, vector<1x32xf32>
    %c141 = arith.constant 141 : index
    %c0_66 = arith.constant 0 : index
    %214 = vector.load %arg3[%c141, %c0_66] : memref<442x128xf32, #tpu.memory_space<vmem>>, vector<1x32xf32>
    %cst_67 = arith.constant dense<0.000000e+00> : vector<16xf32>
    %215 = vector.multi_reduction <add>, %212, %cst_67 [1] : vector<16x32xf32> to vector<16xf32>
    %216 = vector.shape_cast %215 : vector<16xf32> to vector<16x1xf32>
    %cst_68 = arith.constant 3.200000e+01 : f32
    %217 = vector.broadcast %cst_68 : f32 to vector<16x1xf32>
    %218 = arith.divf %216, %217 : vector<16x1xf32>
    %219 = vector.broadcast %218 : vector<16x1xf32> to vector<16x32xf32>
    %220 = arith.subf %212, %219 : vector<16x32xf32>
    %221 = arith.mulf %220, %220 : vector<16x32xf32>
    %cst_69 = arith.constant dense<0.000000e+00> : vector<16xf32>
    %222 = vector.multi_reduction <add>, %221, %cst_69 [1] : vector<16x32xf32> to vector<16xf32>
    %223 = vector.shape_cast %222 : vector<16xf32> to vector<16x1xf32>
    %cst_70 = arith.constant 3.200000e+01 : f32
    %224 = vector.broadcast %cst_70 : f32 to vector<16x1xf32>
    %225 = arith.divf %223, %224 : vector<16x1xf32>
    %226 = vector.broadcast %218 : vector<16x1xf32> to vector<16x32xf32>
    %227 = arith.subf %212, %226 : vector<16x32xf32>
    %cst_71 = arith.constant 9.99999996E-13 : f32
    %228 = vector.broadcast %cst_71 : f32 to vector<16x1xf32>
    %229 = arith.addf %225, %228 : vector<16x1xf32>
    %230 = math.rsqrt %229 : vector<16x1xf32>
    %231 = vector.broadcast %230 : vector<16x1xf32> to vector<16x32xf32>
    %232 = arith.mulf %227, %231 : vector<16x32xf32>
    %233 = vector.broadcast %213 : vector<1x32xf32> to vector<16x32xf32>
    %234 = arith.mulf %232, %233 : vector<16x32xf32>
    %235 = vector.broadcast %214 : vector<1x32xf32> to vector<16x32xf32>
    %236 = arith.addf %234, %235 : vector<16x32xf32>
    %c243 = arith.constant 243 : index
    %c0_72 = arith.constant 0 : index
    %237 = vector.load %arg3[%c243, %c0_72] : memref<442x128xf32, #tpu.memory_space<vmem>>, vector<32x64xf32>
    %cst_73 = arith.constant dense<0.000000e+00> : vector<16x64xf32>
    %238 = tpu.matmul %236, %237, %cst_73 {dimension_numbers = #tpu.dot_dimension_numbers<[1], [0], [0], [1], [0, 0, 1, 1], [], []>} : vector<16x32xf32>, vector<32x64xf32>, vector<16x64xf32> -> vector<16x64xf32>
    %c275 = arith.constant 275 : index
    %c0_74 = arith.constant 0 : index
    %239 = vector.load %arg3[%c275, %c0_74] : memref<442x128xf32, #tpu.memory_space<vmem>>, vector<1x64xf32>
    %240 = vector.broadcast %239 : vector<1x64xf32> to vector<16x64xf32>
    %241 = arith.addf %238, %240 : vector<16x64xf32>
    %242 = arith.mulf %241, %241 : vector<16x64xf32>
    %243 = arith.mulf %241, %242 : vector<16x64xf32>
    %cst_75 = arith.constant 4.471500e-02 : f32
    %244 = vector.broadcast %cst_75 : f32 to vector<16x64xf32>
    %245 = arith.mulf %244, %243 : vector<16x64xf32>
    %246 = arith.addf %241, %245 : vector<16x64xf32>
    %cst_76 = arith.constant 0.797884583 : f32
    %247 = vector.broadcast %cst_76 : f32 to vector<16x64xf32>
    %248 = arith.mulf %247, %246 : vector<16x64xf32>
    %249 = math.tanh %248 : vector<16x64xf32>
    %cst_77 = arith.constant 1.000000e+00 : f32
    %250 = vector.broadcast %cst_77 : f32 to vector<16x64xf32>
    %251 = arith.addf %250, %249 : vector<16x64xf32>
    %cst_78 = arith.constant 5.000000e-01 : f32
    %252 = vector.broadcast %cst_78 : f32 to vector<16x64xf32>
    %253 = arith.mulf %252, %251 : vector<16x64xf32>
    %254 = arith.mulf %241, %253 : vector<16x64xf32>
    %c276 = arith.constant 276 : index
    %c0_79 = arith.constant 0 : index
    %255 = vector.load %arg3[%c276, %c0_79] : memref<442x128xf32, #tpu.memory_space<vmem>>, vector<64x32xf32>
    %cst_80 = arith.constant dense<0.000000e+00> : vector<16x32xf32>
    %256 = tpu.matmul %254, %255, %cst_80 {dimension_numbers = #tpu.dot_dimension_numbers<[1], [0], [0], [1], [0, 0, 1, 1], [], []>} : vector<16x64xf32>, vector<64x32xf32>, vector<16x32xf32> -> vector<16x32xf32>
    %c340 = arith.constant 340 : index
    %c0_81 = arith.constant 0 : index
    %257 = vector.load %arg3[%c340, %c0_81] : memref<442x128xf32, #tpu.memory_space<vmem>>, vector<1x32xf32>
    %258 = vector.broadcast %257 : vector<1x32xf32> to vector<16x32xf32>
    %259 = arith.addf %256, %258 : vector<16x32xf32>
    %260 = arith.addf %236, %259 : vector<16x32xf32>
    %c341 = arith.constant 341 : index
    %c0_82 = arith.constant 0 : index
    %261 = vector.load %arg3[%c341, %c0_82] : memref<442x128xf32, #tpu.memory_space<vmem>>, vector<1x32xf32>
    %c342 = arith.constant 342 : index
    %c0_83 = arith.constant 0 : index
    %262 = vector.load %arg3[%c342, %c0_83] : memref<442x128xf32, #tpu.memory_space<vmem>>, vector<1x32xf32>
    %cst_84 = arith.constant dense<0.000000e+00> : vector<16xf32>
    %263 = vector.multi_reduction <add>, %260, %cst_84 [1] : vector<16x32xf32> to vector<16xf32>
    %264 = vector.shape_cast %263 : vector<16xf32> to vector<16x1xf32>
    %cst_85 = arith.constant 3.200000e+01 : f32
    %265 = vector.broadcast %cst_85 : f32 to vector<16x1xf32>
    %266 = arith.divf %264, %265 : vector<16x1xf32>
    %267 = vector.broadcast %266 : vector<16x1xf32> to vector<16x32xf32>
    %268 = arith.subf %260, %267 : vector<16x32xf32>
    %269 = arith.mulf %268, %268 : vector<16x32xf32>
    %cst_86 = arith.constant dense<0.000000e+00> : vector<16xf32>
    %270 = vector.multi_reduction <add>, %269, %cst_86 [1] : vector<16x32xf32> to vector<16xf32>
    %271 = vector.shape_cast %270 : vector<16xf32> to vector<16x1xf32>
    %cst_87 = arith.constant 3.200000e+01 : f32
    %272 = vector.broadcast %cst_87 : f32 to vector<16x1xf32>
    %273 = arith.divf %271, %272 : vector<16x1xf32>
    %274 = vector.broadcast %266 : vector<16x1xf32> to vector<16x32xf32>
    %275 = arith.subf %260, %274 : vector<16x32xf32>
    %cst_88 = arith.constant 9.99999996E-13 : f32
    %276 = vector.broadcast %cst_88 : f32 to vector<16x1xf32>
    %277 = arith.addf %273, %276 : vector<16x1xf32>
    %278 = math.rsqrt %277 : vector<16x1xf32>
    %279 = vector.broadcast %278 : vector<16x1xf32> to vector<16x32xf32>
    %280 = arith.mulf %275, %279 : vector<16x32xf32>
    %281 = vector.broadcast %261 : vector<1x32xf32> to vector<16x32xf32>
    %282 = arith.mulf %280, %281 : vector<16x32xf32>
    %283 = vector.broadcast %262 : vector<1x32xf32> to vector<16x32xf32>
    %284 = arith.addf %282, %283 : vector<16x32xf32>
    %285 = vector.extract_strided_slice %284 {offsets = [0, 0], sizes = [1, 32], strides = [1, 1]} : vector<16x32xf32> to vector<1x32xf32>
    %286 = vector.extract_strided_slice %284 {offsets = [8, 0], sizes = [1, 32], strides = [1, 1]} : vector<16x32xf32> to vector<1x32xf32>
    %287 = tpu.concatenate %285, %286 in 0 : vector<1x32xf32>, vector<1x32xf32> -> vector<2x32xf32>
    %c0_89 = arith.constant 0 : index
    %c0_90 = arith.constant 0 : index
    %288 = vector.load %arg2[%c0_89, %c0_90] : memref<16x32xf32, #tpu.memory_space<vmem>>, vector<16x32xf32>
    %289 = vector.extract_strided_slice %288 {offsets = [0, 0], sizes = [1, 32], strides = [1, 1]} : vector<16x32xf32> to vector<1x32xf32>
    %290 = vector.extract_strided_slice %288 {offsets = [8, 0], sizes = [1, 32], strides = [1, 1]} : vector<16x32xf32> to vector<1x32xf32>
    %291 = tpu.concatenate %289, %290 in 0 : vector<1x32xf32>, vector<1x32xf32> -> vector<2x32xf32>
    %c376 = arith.constant 376 : index
    %c0_91 = arith.constant 0 : index
    %292 = vector.load %arg3[%c376, %c0_91] : memref<442x128xf32, #tpu.memory_space<vmem>>, vector<32x32xf32>
    %cst_92 = arith.constant dense<0.000000e+00> : vector<2x32xf32>
    %293 = tpu.matmul %291, %292, %cst_92 {dimension_numbers = #tpu.dot_dimension_numbers<[1], [0], [0], [1], [0, 0, 1, 1], [], []>} : vector<2x32xf32>, vector<32x32xf32>, vector<2x32xf32> -> vector<2x32xf32>
    %c408 = arith.constant 408 : index
    %c0_93 = arith.constant 0 : index
    %294 = vector.load %arg3[%c408, %c0_93] : memref<442x128xf32, #tpu.memory_space<vmem>>, vector<1x32xf32>
    %295 = vector.broadcast %294 : vector<1x32xf32> to vector<2x32xf32>
    %296 = arith.addf %293, %295 : vector<2x32xf32>
    %c409 = arith.constant 409 : index
    %c0_94 = arith.constant 0 : index
    %297 = vector.load %arg3[%c409, %c0_94] : memref<442x128xf32, #tpu.memory_space<vmem>>, vector<32x32xf32>
    %cst_95 = arith.constant dense<0.000000e+00> : vector<2x32xf32>
    %298 = tpu.matmul %287, %297, %cst_95 {dimension_numbers = #tpu.dot_dimension_numbers<[1], [0], [0], [1], [0, 0, 1, 1], [], []>} : vector<2x32xf32>, vector<32x32xf32>, vector<2x32xf32> -> vector<2x32xf32>
    %c441 = arith.constant 441 : index
    %c0_96 = arith.constant 0 : index
    %299 = vector.load %arg3[%c441, %c0_96] : memref<442x128xf32, #tpu.memory_space<vmem>>, vector<1x32xf32>
    %300 = vector.broadcast %299 : vector<1x32xf32> to vector<2x32xf32>
    %301 = arith.addf %298, %300 : vector<2x32xf32>
    %302 = arith.mulf %296, %296 : vector<2x32xf32>
    %cst_97 = arith.constant dense<0.000000e+00> : vector<2xf32>
    %303 = vector.multi_reduction <add>, %302, %cst_97 [1] : vector<2x32xf32> to vector<2xf32>
    %304 = vector.shape_cast %303 : vector<2xf32> to vector<2x1xf32>
    %305 = math.sqrt %304 : vector<2x1xf32>
    %cst_98 = arith.constant 9.99999996E-13 : f32
    %306 = vector.broadcast %cst_98 : f32 to vector<2x1xf32>
    %307 = arith.maximumf %305, %306 : vector<2x1xf32>
    %308 = vector.broadcast %307 : vector<2x1xf32> to vector<2x32xf32>
    %309 = arith.divf %296, %308 : vector<2x32xf32>
    %310 = arith.mulf %301, %301 : vector<2x32xf32>
    %cst_99 = arith.constant dense<0.000000e+00> : vector<2xf32>
    %311 = vector.multi_reduction <add>, %310, %cst_99 [1] : vector<2x32xf32> to vector<2xf32>
    %312 = vector.shape_cast %311 : vector<2xf32> to vector<2x1xf32>
    %313 = math.sqrt %312 : vector<2x1xf32>
    %cst_100 = arith.constant 9.99999996E-13 : f32
    %314 = vector.broadcast %cst_100 : f32 to vector<2x1xf32>
    %315 = arith.maximumf %313, %314 : vector<2x1xf32>
    %316 = vector.broadcast %315 : vector<2x1xf32> to vector<2x32xf32>
    %317 = arith.divf %301, %316 : vector<2x32xf32>
    %cst_101 = arith.constant dense<0.000000e+00> : vector<2x2xf32>
    %318 = tpu.matmul %317, %309, %cst_101 {dimension_numbers = #tpu.dot_dimension_numbers<[1], [1], [0], [0], [0, 0, 1, 0], [], []>} : vector<2x32xf32>, vector<2x32xf32>, vector<2x2xf32> -> vector<2x2xf32>
    %cst_102 = arith.constant dense<0.000000e+00> : vector<2x2xf32>
    %319 = tpu.matmul %317, %317, %cst_102 {dimension_numbers = #tpu.dot_dimension_numbers<[1], [1], [0], [0], [0, 0, 1, 0], [], []>} : vector<2x32xf32>, vector<2x32xf32>, vector<2x2xf32> -> vector<2x2xf32>
    %320 = tpu.iota {dimensions = array<i32: 0>} : vector<2x2xi32>
    %321 = tpu.iota {dimensions = array<i32: 1>} : vector<2x2xi32>
    %322 = arith.cmpi eq, %320, %321 : vector<2x2xi32>
    %cst_103 = arith.constant 1.000000e+00 : f32
    %cst_104 = arith.constant 0.000000e+00 : f32
    %323 = vector.broadcast %cst_103 : f32 to vector<2x2xf32>
    %324 = vector.broadcast %cst_104 : f32 to vector<2x2xf32>
    %325 = arith.select %322, %323, %324 : vector<2x2xi1>, vector<2x2xf32>
    %cst_105 = arith.constant 0.949999988 : f32
    %326 = vector.broadcast %cst_105 : f32 to vector<2x2xf32>
    %327 = arith.cmpf ogt, %319, %326 : vector<2x2xf32>
    %cst_106 = arith.constant 1.000000e+00 : f32
    %cst_107 = arith.constant 0.000000e+00 : f32
    %328 = vector.broadcast %cst_106 : f32 to vector<2x2xf32>
    %329 = vector.broadcast %cst_107 : f32 to vector<2x2xf32>
    %330 = arith.select %327, %328, %329 : vector<2x2xi1>, vector<2x2xf32>
    %cst_108 = arith.constant 1.000000e+00 : f32
    %331 = vector.broadcast %cst_108 : f32 to vector<2x2xf32>
    %332 = arith.subf %331, %325 : vector<2x2xf32>
    %333 = arith.mulf %330, %332 : vector<2x2xf32>
    %cst_109 = arith.constant 1.000000e+00 : f32
    %334 = vector.broadcast %cst_109 : f32 to vector<2x2xf32>
    %335 = arith.subf %334, %333 : vector<2x2xf32>
    %336 = arith.mulf %318, %335 : vector<2x2xf32>
    %cst_110 = arith.constant -1.000000e+04 : f32
    %337 = vector.broadcast %cst_110 : f32 to vector<2x2xf32>
    %338 = arith.mulf %337, %333 : vector<2x2xf32>
    %339 = arith.addf %336, %338 : vector<2x2xf32>
    %cst_111 = arith.constant dense<0xFF800000> : vector<2xf32>
    %340 = vector.multi_reduction <maximumf>, %339, %cst_111 [1] : vector<2x2xf32> to vector<2xf32>
    %341 = vector.shape_cast %340 : vector<2xf32> to vector<2x1xf32>
    %342 = vector.broadcast %341 : vector<2x1xf32> to vector<2x2xf32>
    %343 = arith.subf %339, %342 : vector<2x2xf32>
    %344 = math.exp %343 : vector<2x2xf32>
    %cst_112 = arith.constant dense<0.000000e+00> : vector<2xf32>
    %345 = vector.multi_reduction <add>, %344, %cst_112 [1] : vector<2x2xf32> to vector<2xf32>
    %346 = vector.shape_cast %345 : vector<2xf32> to vector<2x1xf32>
    %347 = math.log %346 : vector<2x1xf32>
    %348 = arith.addf %341, %347 : vector<2x1xf32>
    %349 = arith.mulf %339, %325 : vector<2x2xf32>
    %cst_113 = arith.constant dense<0.000000e+00> : vector<2xf32>
    %350 = vector.multi_reduction <add>, %349, %cst_113 [1] : vector<2x2xf32> to vector<2xf32>
    %351 = vector.shape_cast %350 : vector<2xf32> to vector<2x1xf32>
    %352 = arith.subf %348, %351 : vector<2x1xf32>
    %cst_114 = arith.constant dense<0.000000e+00> : vector<1xf32>
    %353 = vector.multi_reduction <add>, %352, %cst_114 [0] : vector<2x1xf32> to vector<1xf32>
    %354 = vector.shape_cast %353 : vector<1xf32> to vector<1x1xf32>
    %cst_115 = arith.constant 2.000000e+00 : f32
    %355 = vector.broadcast %cst_115 : f32 to vector<1x1xf32>
    %356 = arith.divf %354, %355 : vector<1x1xf32>
    %cst_116 = arith.constant dense<0xFF800000> : vector<2xf32>
    %357 = vector.multi_reduction <maximumf>, %339, %cst_116 [0] : vector<2x2xf32> to vector<2xf32>
    %358 = vector.shape_cast %357 : vector<2xf32> to vector<1x2xf32>
    %359 = vector.broadcast %358 : vector<1x2xf32> to vector<2x2xf32>
    %360 = arith.subf %339, %359 : vector<2x2xf32>
    %361 = math.exp %360 : vector<2x2xf32>
    %cst_117 = arith.constant dense<0.000000e+00> : vector<2xf32>
    %362 = vector.multi_reduction <add>, %361, %cst_117 [0] : vector<2x2xf32> to vector<2xf32>
    %363 = vector.shape_cast %362 : vector<2xf32> to vector<1x2xf32>
    %364 = math.log %363 : vector<1x2xf32>
    %365 = arith.addf %358, %364 : vector<1x2xf32>
    %366 = arith.mulf %339, %325 : vector<2x2xf32>
    %cst_118 = arith.constant dense<0.000000e+00> : vector<2xf32>
    %367 = vector.multi_reduction <add>, %366, %cst_118 [0] : vector<2x2xf32> to vector<2xf32>
    %368 = vector.shape_cast %367 : vector<2xf32> to vector<1x2xf32>
    %369 = arith.subf %365, %368 : vector<1x2xf32>
    %cst_119 = arith.constant dense<0.000000e+00> : vector<1xf32>
    %370 = vector.multi_reduction <add>, %369, %cst_119 [1] : vector<1x2xf32> to vector<1xf32>
    %371 = vector.shape_cast %370 : vector<1xf32> to vector<1x1xf32>
    %cst_120 = arith.constant 2.000000e+00 : f32
    %372 = vector.broadcast %cst_120 : f32 to vector<1x1xf32>
    %373 = arith.divf %371, %372 : vector<1x1xf32>
    %374 = arith.addf %356, %373 : vector<1x1xf32>
    %cst_121 = arith.constant 5.000000e-01 : f32
    %375 = vector.broadcast %cst_121 : f32 to vector<1x1xf32>
    %376 = arith.mulf %374, %375 : vector<1x1xf32>
    %377 = arith.mulf %318, %325 : vector<2x2xf32>
    %cst_122 = arith.constant dense<0.000000e+00> : vector<2xf32>
    %378 = vector.multi_reduction <add>, %377, %cst_122 [1] : vector<2x2xf32> to vector<2xf32>
    %379 = vector.shape_cast %378 : vector<2xf32> to vector<2x1xf32>
    %cst_123 = arith.constant 1.000000e+00 : f32
    %380 = vector.broadcast %cst_123 : f32 to vector<2x2xf32>
    %381 = arith.subf %380, %330 : vector<2x2xf32>
    %cst_124 = arith.constant 2.000000e-01 : f32
    %382 = vector.broadcast %cst_124 : f32 to vector<2x2xf32>
    %383 = arith.addf %318, %382 : vector<2x2xf32>
    %384 = vector.broadcast %379 : vector<2x1xf32> to vector<2x2xf32>
    %385 = arith.cmpf ogt, %383, %384 : vector<2x2xf32>
    %cst_125 = arith.constant 1.000000e+00 : f32
    %cst_126 = arith.constant 0.000000e+00 : f32
    %386 = vector.broadcast %cst_125 : f32 to vector<2x2xf32>
    %387 = vector.broadcast %cst_126 : f32 to vector<2x2xf32>
    %388 = arith.select %385, %386, %387 : vector<2x2xi1>, vector<2x2xf32>
    %389 = arith.mulf %381, %388 : vector<2x2xf32>
    %cst_127 = arith.constant 2.000000e-01 : f32
    %390 = vector.broadcast %cst_127 : f32 to vector<2x2xf32>
    %391 = arith.addf %390, %318 : vector<2x2xf32>
    %392 = vector.broadcast %379 : vector<2x1xf32> to vector<2x2xf32>
    %393 = arith.subf %391, %392 : vector<2x2xf32>
    %cst_128 = arith.constant 0.000000e+00 : f32
    %394 = vector.broadcast %cst_128 : f32 to vector<2x2xf32>
    %395 = arith.maximumf %393, %394 : vector<2x2xf32>
    %396 = arith.mulf %389, %395 : vector<2x2xf32>
    %cst_129 = arith.constant dense<0.000000e+00> : vector<2xf32>
    %397 = vector.multi_reduction <add>, %396, %cst_129 [1] : vector<2x2xf32> to vector<2xf32>
    %398 = vector.shape_cast %397 : vector<2xf32> to vector<2x1xf32>
    %cst_130 = arith.constant dense<0.000000e+00> : vector<1xf32>
    %399 = vector.multi_reduction <add>, %398, %cst_130 [0] : vector<2x1xf32> to vector<1xf32>
    %400 = vector.shape_cast %399 : vector<1xf32> to vector<1x1xf32>
    %cst_131 = arith.constant 2.000000e+00 : f32
    %401 = vector.broadcast %cst_131 : f32 to vector<1x1xf32>
    %402 = arith.divf %400, %401 : vector<1x1xf32>
    %cst_132 = arith.constant 5.000000e-01 : f32
    %403 = vector.broadcast %cst_132 : f32 to vector<1x1xf32>
    %404 = arith.mulf %376, %403 : vector<1x1xf32>
    %cst_133 = arith.constant 5.000000e-01 : f32
    %405 = vector.broadcast %cst_133 : f32 to vector<1x1xf32>
    %406 = arith.mulf %402, %405 : vector<1x1xf32>
    %407 = arith.addf %404, %406 : vector<1x1xf32>
    %cst_134 = arith.constant 0.000000e+00 : f32
    %408 = vector.broadcast %cst_134 : f32 to vector<2x96xf32>
    %409 = tpu.concatenate %287, %408 in 1 : vector<2x32xf32>, vector<2x96xf32> -> vector<2x128xf32>
    %cst_135 = arith.constant 0.000000e+00 : f32
    %410 = vector.broadcast %cst_135 : f32 to vector<2x96xf32>
    %411 = tpu.concatenate %309, %410 in 1 : vector<2x32xf32>, vector<2x96xf32> -> vector<2x128xf32>
    %cst_136 = arith.constant 0.000000e+00 : f32
    %412 = vector.broadcast %cst_136 : f32 to vector<2x96xf32>
    %413 = tpu.concatenate %317, %412 in 1 : vector<2x32xf32>, vector<2x96xf32> -> vector<2x128xf32>
    %cst_137 = arith.constant 0.000000e+00 : f32
    %414 = vector.broadcast %cst_137 : f32 to vector<2x126xf32>
    %415 = tpu.concatenate %318, %414 in 1 : vector<2x2xf32>, vector<2x126xf32> -> vector<2x128xf32>
    %cst_138 = arith.constant 0.000000e+00 : f32
    %416 = vector.broadcast %cst_138 : f32 to vector<1x127xf32>
    %417 = tpu.concatenate %407, %416 in 1 : vector<1x1xf32>, vector<1x127xf32> -> vector<1x128xf32>
    %418 = tpu.concatenate %409, %411, %413, %415, %417 in 0 : vector<2x128xf32>, vector<2x128xf32>, vector<2x128xf32>, vector<2x128xf32>, vector<1x128xf32> -> vector<9x128xf32>
    %c0_139 = arith.constant 0 : index
    %c0_140 = arith.constant 0 : index
    %419 = vector.load %arg4[%c0_139, %c0_140] : memref<9x128xf32, #tpu.memory_space<vmem>>, vector<9x128xf32>
    tpu.vector_store %arg4[%c0_139, %c0_140], %418 {strides = array<i32>} : memref<9x128xf32, #tpu.memory_space<vmem>>, vector<9x128xf32>,
    return
  }
}

</mosaic_0001>

<llo_original>
// kernel: _stage1_impl.2
$region0: #{_stage1_impl.2}
  #allocation0 [shape = 'u32[]', space=smem, size = 0x4, offset = 0x4, fixed_abs, tag = 'smem constant byte address 0x4 - core index']
  #allocation1 [shape = 'u32[144,128]{1,0:T(1,128)}', space=vmem, size = 0x12000, scoped, tag = 'internal scratch']
  %s0 = inlined_call_operand.vmem [shape: f32[16,192], index: 0, kind: input, shape index: {}]
  %s1 = inlined_call_operand.vmem [shape: f32[371,128], index: 1, kind: input, shape index: {}]
  %s2 = inlined_call_operand.vmem [shape: f32[16,32], index: 2, kind: output, shape index: {}]
  %s3 = sld [smem:[#allocation0]]
  $region18: #{_stage1_impl.2} parent=0
    _
  %s5 = ssub.s32 1, %s3
  %s6 = scalar_select 0, %s5, %s3
  // Predicated region
  $region2: #{_stage1_impl.2} parent=0 // pred_check
    _
  $region3: #{_stage1_impl.2} parent=0 // pred_check_branch
    %8 = sbr.rel (0) target = $region5
  $region4: #{_stage1_impl.2} parent=0 // pred_region
    _
  $region5: #{_stage1_impl.2} parent=0 // pred_fallthru
    _
  // Predicated region
  $region6: #{_stage1_impl.2} parent=0 // pred_check
    _
  $region7: #{_stage1_impl.2} parent=0 // pred_check_branch
    %10 = sbr.rel (0) target = $region9
  $region8: #{_stage1_impl.2} parent=0 // pred_region
    _
  $region9: #{_stage1_impl.2} parent=0 // pred_fallthru
    _
  %v11 = vlaneseq
  %v12 = vshrl.u32 %v11, 7
  %vm13 = vcmp.ge.s32.totalorder %v12, 1
  %vm14 = vcmp.lt.s32.totalorder %v12, 5
  %vm15 = vmand %vm13, %vm14
  %v16 = vsel %vm15, 1.0, 0.0
  %v17 = vld [vmem:[%s1 + $0xc1] sm:$0xff]
  %v18 = vld [vmem:[%s0] sm:$0xff]
  %v19 = vld [vmem:[%s0 + $0x8] sm:$0xff]
  %v20 = vld [vmem:[%s0 + $0x10] sm:$0xff]
  %v21 = vld [vmem:[%s0 + $0x18] sm:$0xff]
  %v22 = vld [vmem:[%s1] sm:$0xff]
  %v23 = vld [vmem:[%s1 + $0x8] sm:$0xff]
  %v24 = vld [vmem:[%s1 + $0x10] sm:$0xff]
  %v25 = vld [vmem:[%s1 + $0x18] sm:$0xff]
  %v26 = vld [vmem:[%s1 + $0x20] sm:$0xff]
  %v27 = vld [vmem:[%s1 + $0x28] sm:$0xff]
  %v28 = vld [vmem:[%s1 + $0x30] sm:$0xff]
  %v29 = vld [vmem:[%s1 + $0x38] sm:$0xff]
  %v30 = vld [vmem:[%s1 + $0x40] sm:$0xff]
  %v31 = vld [vmem:[%s1 + $0x48] sm:$0xff]
  %v32 = vld [vmem:[%s1 + $0x50] sm:$0xff]
  %v33 = vld [vmem:[%s1 + $0x58] sm:$0xff]
  %v34 = vld [vmem:[%s1 + $0x60] sm:$0xff]
  %v35 = vld [vmem:[%s1 + $0x68] sm:$0xff]
  %v36 = vld [vmem:[%s1 + $0x70] sm:$0xff]
  %v37 = vld [vmem:[%s1 + $0x78] sm:$0xff]
  %v38 = vld [vmem:[%s1 + $0x80] sm:$0xff]
  %v39 = vld [vmem:[%s1 + $0x88] sm:$0xff]
  %v40 = vld [vmem:[%s1 + $0x90] sm:$0xff]
  %v41 = vld [vmem:[%s1 + $0x98] sm:$0xff]
  %v42 = vld [vmem:[%s1 + $0xa0] sm:$0xff]
  %v43 = vld [vmem:[%s1 + $0xa8] sm:$0xff]
  %v44 = vld [vmem:[%s1 + $0xb0] sm:$0xff]
  %v45 = vld [vmem:[%s1 + $0xb8] sm:$0xff]
  %v46 = vld [vmem:[%s1 + $0xc0] sm:$0x1]
  %v47 = vlaneseq
  %v48 = vshrl.u32 %v47, 7
  %v49 = vsub.s32 0, %v48
  %v50 = vrot.slane %v46, %v49
  %vm51 = vcmask 523264
  %v53 = vsel %vm51, %v19, 0
  %v56 = vsel %vm51, %v21, 0
  %58 = vmatprep.subr.mxu0 0.0
  %59 = vmatpush1.msra.mxu0 %v22
  %60 = vmatprep.subr.mxu0 0.0
  %61 = vmatpush1.msra.mxu0 %v23
  %62 = vmatprep.subr.mxu0 0.0
  %63 = vmatpush1.msra.mxu0 %v24
  %64 = vmatprep.subr.mxu0 0.0
  %65 = vmatpush1.msra.mxu0 %v25
  %66 = vmatprep.subr.mxu0 0.0
  %67 = vmatpush1.msra.mxu0 %v26
  %68 = vmatprep.subr.mxu0 0.0
  %69 = vmatpush1.msra.mxu0 %v27
  %70 = vmatprep.subr.mxu0 0.0
  %71 = vmatpush1.msra.mxu0 %v28
  %72 = vmatprep.subr.mxu0 0.0
  %73 = vmatpush1.msra.mxu0 %v29
  %74 = vmatprep.subr.mxu0 0.0
  %75 = vmatpush1.msra.mxu0 %v30
  %76 = vmatprep.subr.mxu0 0.0
  %77 = vmatpush1.msra.mxu0 %v31
  %78 = vmatprep.subr.mxu0 0.0
  %79 = vmatpush1.msra.mxu0 %v32
  %80 = vmatprep.subr.mxu0 0.0
  %81 = vmatpush1.msra.mxu0 %v33
  %82 = vmatprep.subr.mxu0 0.0
  %83 = vmatpush1.msra.mxu0 %v34
  %84 = vmatprep.subr.mxu0 0.0
  %85 = vmatpush1.msra.mxu0 %v35
  %86 = vmatprep.subr.mxu0 0.0
  %87 = vmatpush1.msra.mxu0 %v36
  %88 = vmatprep.subr.mxu0 0.0
  %89 = vmatpush1.msra.mxu0 %v37
  %90 = vmatprep.subr.mxu0 0.0
  %91 = vmatpush1.msra.mxu0 %v38
  %92 = vmatprep.subr.mxu0 0.0
  %93 = vmatpush1.msra.mxu0 %v39
  %94 = vmatprep.subr.mxu0 0.0
  %95 = vmatpush1.msra.mxu0 %v40
  %96 = vmatprep.subr.mxu0 0.0
  %97 = vmatpush1.msra.mxu0 %v41
  %98 = vmatprep.subr.mxu0 0.0
  %99 = vmatpush1.msra.mxu0 %v42
  %100 = vmatprep.subr.mxu0 0.0
  %101 = vmatpush1.msra.mxu0 %v43
  %102 = vmatprep.subr.mxu0 0.0
  %103 = vmatpush1.msra.mxu0 %v44
  %104 = vmatprep.subr.mxu0 0.0
  %105 = vmatpush1.msra.mxu0 %v45
  %106 = vmatprep.subr.mxu0 0.0
  %107 = vmatpush1.msra.mxu0 0.0
  %108 = vmatprep.subr.mxu0 0.0
  %109 = vmatpush1.msra.mxu0 0.0
  %110 = vmatprep.subr.mxu0 0.0
  %111 = vmatpush1.msra.mxu0 0.0
  %112 = vmatprep.subr.mxu0 0.0
  %113 = vmatpush1.msra.mxu0 0.0
  %114 = vmatprep.subr.mxu0 0.0
  %115 = vmatpush1.msra.mxu0 0.0
  %116 = vmatprep.subr.mxu0 0.0
  %117 = vmatpush1.msra.mxu0 0.0
  %118 = vmatprep.subr.mxu0 0.0
  %119 = vmatpush1.msra.mxu0 0.0
  %120 = vmatprep.subr.mxu0 0.0
  %121 = vmatpush1.msra.mxu0 0.0
  %122 = vmatprep.mubr.f32.mxu0 %v53
  %123 = vmatmul.mubr.f32.gmra.mrb[0].mxu0 %v18
  %v124 = vpop.f32.mrb[0].mxu0
  %v125 = vadd.f32 %v50, %v124
  %v126 = vpop.f32.mrb[0].mxu0
  %127 = vmatprep.mubr.f32.mxu0 %v56
  %128 = vmatmul.mubr.f32.gmra.mrb[0].mxu0 %v20
  %v129 = vpop.f32.mrb[0].mxu0
  %v130 = vadd.f32 %v50, %v129
  %v131 = vpop.f32.mrb[0].mxu0
  %132 = vdwg.mxu0
  %134 = vset.pattern.permute.xlu0 0
  %135 = vperm.xlu0 %134, %v16
  %v136 = vpop.permute.xlu0 %135
  %v138 = vmul.f32 %v125, %v136
  %v139 = vmul.f32 %v130, %v136
  %v140 = vadd.f32 %v138, %v17
  %v141 = vadd.f32 %v139, %v17
  %v142 = vld [vmem:[%s1 + $0xc9] sm:$0x1]
  %v143 = vld [vmem:[%s1 + $0xca] sm:$0x1]
  %vm144 = vcmask 261120
  %v145 = vsel %vm144, %v140, 0.0
  %146 = vadd.xlane.f32.xlu0 %v145
  %v147 = vpop.xlane.xlu0 %146
  %v148 = vsel %vm144, %v141, 0.0
  %149 = vadd.xlane.f32.xlu0 %v148
  %v150 = vpop.xlane.xlu0 %149
  %v151 = vrcp.pop 32.0
  %v152 = vmul.f32 %v147, %v151
  %v153 = vmul.f32 %v150, %v151
  %v154 = vsub.f32 %v140, %v152
  %v155 = vsub.f32 %v141, %v153
  %v156 = vmul.f32 %v154, %v154
  %v157 = vmul.f32 %v155, %v155
  %v158 = vsel %vm144, %v156, 0.0
  %159 = vadd.xlane.f32.xlu0 %v158
  %v160 = vpop.xlane.xlu0 %159
  %v161 = vsel %vm144, %v157, 0.0
  %162 = vadd.xlane.f32.xlu0 %v161
  %v163 = vpop.xlane.xlu0 %162
  %v164 = vmul.f32 %v160, %v151
  %v165 = vmul.f32 %v163, %v151
  %v166 = vadd.f32 %v164, 1e-05
  %v167 = vadd.f32 %v165, 1e-05
  %v168 = vrsqrt.pop %v166
  %v169 = vrsqrt.pop %v167
  %v170 = vmul.f32 %v154, %v168
  %v171 = vmul.f32 %v155, %v169
  %v172 = vlaneseq
  %v173 = vshrl.u32 %v172, 7
  %v174 = vsub.s32 0, %v173
  %v175 = vrot.slane %v142, %v174
  %v176 = vmul.f32 %v170, %v175
  %v177 = vmul.f32 %v171, %v175
  %v178 = vlaneseq
  %v179 = vshrl.u32 %v178, 7
  %v180 = vsub.s32 0, %v179
  %v181 = vrot.slane %v143, %v180
  %v182 = vadd.f32 %v176, %v181
  %v183 = vadd.f32 %v177, %v181
  %v184 = vld [vmem:[%s1 + $0xcb] sm:$0xff]
  %v185 = vld [vmem:[%s1 + $0xd3] sm:$0xff]
  %v186 = vld [vmem:[%s1 + $0xdb] sm:$0xff]
  %v187 = vld [vmem:[%s1 + $0xe3] sm:$0xff]
  %v188 = vld [vmem:[%s1 + $0xeb] sm:$0x1]
  %v189 = vlaneseq
  %v190 = vshrl.u32 %v189, 7
  %v191 = vsub.s32 0, %v190
  %v192 = vrot.slane %v188, %v191
  %v194 = vsel %vm144, %v182, 0
  %v197 = vsel %vm144, %v183, 0
  %199 = vmatprep.subr.mxu0 0.0
  %200 = vmatpush1.msra.mxu0 %v184
  %201 = vmatprep.subr.mxu0 0.0
  %202 = vmatpush1.msra.mxu0 %v185
  %203 = vmatprep.subr.mxu0 0.0
  %204 = vmatpush1.msra.mxu0 %v186
  %205 = vmatprep.subr.mxu0 0.0
  %206 = vmatpush1.msra.mxu0 %v187
  %207 = vmatprep.subr.mxu0 0.0
  %208 = vmatpush1.msra.mxu0 0.0
  %209 = vmatprep.subr.mxu0 0.0
  %210 = vmatpush1.msra.mxu0 0.0
  %211 = vmatprep.subr.mxu0 0.0
  %212 = vmatpush1.msra.mxu0 0.0
  %213 = vmatprep.subr.mxu0 0.0
  %214 = vmatpush1.msra.mxu0 0.0
  %215 = vmatprep.subr.mxu0 0.0
  %216 = vmatpush1.msra.mxu0 0.0
  %217 = vmatprep.subr.mxu0 0.0
  %218 = vmatpush1.msra.mxu0 0.0
  %219 = vmatprep.subr.mxu0 0.0
  %220 = vmatpush1.msra.mxu0 0.0
  %221 = vmatprep.subr.mxu0 0.0
  %222 = vmatpush1.msra.mxu0 0.0
  %223 = vmatprep.subr.mxu0 0.0
  %224 = vmatpush1.msra.mxu0 0.0
  %225 = vmatprep.subr.mxu0 0.0
  %226 = vmatpush1.msra.mxu0 0.0
  %227 = vmatprep.subr.mxu0 0.0
  %228 = vmatpush1.msra.mxu0 0.0
  %229 = vmatprep.subr.mxu0 0.0
  %230 = vmatpush1.msra.mxu0 0.0
  %231 = vmatprep.subr.mxu0 0.0
  %232 = vmatpush1.msra.mxu0 0.0
  %233 = vmatprep.subr.mxu0 0.0
  %234 = vmatpush1.msra.mxu0 0.0
  %235 = vmatprep.subr.mxu0 0.0
  %236 = vmatpush1.msra.mxu0 0.0
  %237 = vmatprep.subr.mxu0 0.0
  %238 = vmatpush1.msra.mxu0 0.0
  %239 = vmatprep.subr.mxu0 0.0
  %240 = vmatpush1.msra.mxu0 0.0
  %241 = vmatprep.subr.mxu0 0.0
  %242 = vmatpush1.msra.mxu0 0.0
  %243 = vmatprep.subr.mxu0 0.0
  %244 = vmatpush1.msra.mxu0 0.0
  %245 = vmatprep.subr.mxu0 0.0
  %246 = vmatpush1.msra.mxu0 0.0
  %247 = vmatprep.subr.mxu0 0.0
  %248 = vmatpush1.msra.mxu0 0.0
  %249 = vmatprep.subr.mxu0 0.0
  %250 = vmatpush1.msra.mxu0 0.0
  %251 = vmatprep.subr.mxu0 0.0
  %252 = vmatpush1.msra.mxu0 0.0
  %253 = vmatprep.subr.mxu0 0.0
  %254 = vmatpush1.msra.mxu0 0.0
  %255 = vmatprep.subr.mxu0 0.0
  %256 = vmatpush1.msra.mxu0 0.0
  %257 = vmatprep.subr.mxu0 0.0
  %258 = vmatpush1.msra.mxu0 0.0
  %259 = vmatprep.subr.mxu0 0.0
  %260 = vmatpush1.msra.mxu0 0.0
  %261 = vmatprep.subr.mxu0 0.0
  %262 = vmatpush1.msra.mxu0 0.0
  %263 = vmatprep.mubr.f32.mxu0 0.0
  %264 = vmatmul.mubr.f32.gmra.mrb[0].mxu0 %v194
  %v265 = vpop.f32.mrb[0].mxu0
  %v266 = vadd.f32 %v192, %v265
  %v267 = vpop.f32.mrb[0].mxu0
  %268 = vmatprep.mubr.f32.mxu0 0.0
  %269 = vmatmul.mubr.f32.gmra.mrb[0].mxu0 %v197
  %v270 = vpop.f32.mrb[0].mxu0
  %v271 = vadd.f32 %v192, %v270
  %v272 = vpop.f32.mrb[0].mxu0
  %273 = vdwg.mxu0
  %v274 = vlaneseq
  %v275 = vand.u32 %v274, 127
  %vm276 = vcmp.lt.s32.totalorder %v275, 5
  %v277 = vsel %vm276, 0.0, -1e+09
  %279 = vrot.lane.b32.xlu0 %v266, 96
  %v280 = vpop.permute.xlu0 %279
  %vm281 = vcmask 64512
  %v282 = vsel %vm281, %v266, 0
  %v284 = vsel %vm281, %v280, 0
  %286 = vmatprep.subr.mxu0 0.0
  %287 = vmatpush1.xpose.msra.mxu0 %v284
  %288 = vmatprep.subr.mxu0 0.0
  %289 = vmatpush1.xpose.msra.mxu0 0.0
  %290 = vmatprep.subr.mxu0 0.0
  %291 = vmatpush1.xpose.msra.mxu0 0.0
  %292 = vmatprep.subr.mxu0 0.0
  %293 = vmatpush1.xpose.msra.mxu0 0.0
  %294 = vmatprep.subr.mxu0 0.0
  %295 = vmatpush1.xpose.msra.mxu0 0.0
  %296 = vmatprep.subr.mxu0 0.0
  %297 = vmatpush1.xpose.msra.mxu0 0.0
  %298 = vmatprep.subr.mxu0 0.0
  %299 = vmatpush1.xpose.msra.mxu0 0.0
  %300 = vmatprep.subr.mxu0 0.0
  %301 = vmatpush1.xpose.msra.mxu0 0.0
  %302 = vmatprep.subr.mxu0 0.0
  %303 = vmatpush1.xpose.msra.mxu0 0.0
  %304 = vmatprep.subr.mxu0 0.0
  %305 = vmatpush1.xpose.msra.mxu0 0.0
  %306 = vmatprep.subr.mxu0 0.0
  %307 = vmatpush1.xpose.msra.mxu0 0.0
  %308 = vmatprep.subr.mxu0 0.0
  %309 = vmatpush1.xpose.msra.mxu0 0.0
  %310 = vmatprep.subr.mxu0 0.0
  %311 = vmatpush1.xpose.msra.mxu0 0.0
  %312 = vmatprep.subr.mxu0 0.0
  %313 = vmatpush1.xpose.msra.mxu0 0.0
  %314 = vmatprep.subr.mxu0 0.0
  %315 = vmatpush1.xpose.msra.mxu0 0.0
  %316 = vmatprep.subr.mxu0 0.0
  %317 = vmatpush1.xpose.msra.mxu0 0.0
  %318 = vmatprep.subr.mxu0 0.0
  %319 = vmatpush1.xpose.msra.mxu0 0.0
  %320 = vmatprep.subr.mxu0 0.0
  %321 = vmatpush1.xpose.msra.mxu0 0.0
  %322 = vmatprep.subr.mxu0 0.0
  %323 = vmatpush1.xpose.msra.mxu0 0.0
  %324 = vmatprep.subr.mxu0 0.0
  %325 = vmatpush1.xpose.msra.mxu0 0.0
  %326 = vmatprep.subr.mxu0 0.0
  %327 = vmatpush1.xpose.msra.mxu0 0.0
  %328 = vmatprep.subr.mxu0 0.0
  %329 = vmatpush1.xpose.msra.mxu0 0.0
  %330 = vmatprep.subr.mxu0 0.0
  %331 = vmatpush1.xpose.msra.mxu0 0.0
  %332 = vmatprep.subr.mxu0 0.0
  %333 = vmatpush1.xpose.msra.mxu0 0.0
  %334 = vmatprep.subr.mxu0 0.0
  %335 = vmatpush1.xpose.msra.mxu0 0.0
  %336 = vmatprep.subr.mxu0 0.0
  %337 = vmatpush1.xpose.msra.mxu0 0.0
  %338 = vmatprep.subr.mxu0 0.0
  %339 = vmatpush1.xpose.msra.mxu0 0.0
  %340 = vmatprep.subr.mxu0 0.0
  %341 = vmatpush1.xpose.msra.mxu0 0.0
  %342 = vmatprep.subr.mxu0 0.0
  %343 = vmatpush1.xpose.msra.mxu0 0.0
  %344 = vmatprep.subr.mxu0 0.0
  %345 = vmatpush1.xpose.msra.mxu0 0.0
  %346 = vmatprep.subr.mxu0 0.0
  %347 = vmatpush1.xpose.msra.mxu0 0.0
  %348 = vmatprep.subr.mxu0 0.0
  %349 = vmatpush1.xpose.msra.mxu0 0.0
  %350 = vmatprep.mubr.f32.mxu0 0.0
  %351 = vmatmul.mubr.f32.gmra.mrb[0].mxu0 %v282
  %v352 = vpop.f32.mrb[0].mxu0
  %v353 = vadd.f32 0.0, %v352
  %v354 = vpop.f32.mrb[0].mxu0
  %355 = vdwg.mxu0
  %v356 = vmul.f32 %v353, 0.35355338
  %v357 = vadd.f32 %v356, %v277
  %v358 = vsel %vm281, %v357, -inf
  %359 = vmax.xlane.f32.xlu0 %v358
  %v360 = vpop.xlane.xlu0 %359
  %v361 = vsub.f32 %v357, %v360
  %v362 = vmul.f32 %v361, 1.442695
  %v363 = vpow.pop %v362
  %v364 = vsel %vm281, %v363, 0.0
  %365 = vadd.xlane.f32.xlu0 %v364
  %v366 = vpop.xlane.xlu0 %365
  %v367 = vrcp.pop %v366
  %v368 = vmul.f32 %v363, %v367
  %369 = vrot.lane.b32.xlu0 %v266, 64
  %v370 = vpop.permute.xlu0 %369
  %v373 = vsel %vm281, %v368, 0
  %375 = vmatprep.subr.mxu0 0.0
  %376 = vmatpush1.msra.mxu0 %v370
  %377 = vmatprep.subr.mxu0 0.0
  %378 = vmatpush1.msra.mxu0 0.0
  %379 = vmatprep.subr.mxu0 0.0
  %380 = vmatpush1.msra.mxu0 0.0
  %381 = vmatprep.subr.mxu0 0.0
  %382 = vmatpush1.msra.mxu0 0.0
  %383 = vmatprep.subr.mxu0 0.0
  %384 = vmatpush1.msra.mxu0 0.0
  %385 = vmatprep.subr.mxu0 0.0
  %386 = vmatpush1.msra.mxu0 0.0
  %387 = vmatprep.subr.mxu0 0.0
  %388 = vmatpush1.msra.mxu0 0.0
  %389 = vmatprep.subr.mxu0 0.0
  %390 = vmatpush1.msra.mxu0 0.0
  %391 = vmatprep.subr.mxu0 0.0
  %392 = vmatpush1.msra.mxu0 0.0
  %393 = vmatprep.subr.mxu0 0.0
  %394 = vmatpush1.msra.mxu0 0.0
  %395 = vmatprep.subr.mxu0 0.0
  %396 = vmatpush1.msra.mxu0 0.0
  %397 = vmatprep.subr.mxu0 0.0
  %398 = vmatpush1.msra.mxu0 0.0
  %399 = vmatprep.subr.mxu0 0.0
  %400 = vmatpush1.msra.mxu0 0.0
  %401 = vmatprep.subr.mxu0 0.0
  %402 = vmatpush1.msra.mxu0 0.0
  %403 = vmatprep.subr.mxu0 0.0
  %404 = vmatpush1.msra.mxu0 0.0
  %405 = vmatprep.subr.mxu0 0.0
  %406 = vmatpush1.msra.mxu0 0.0
  %407 = vmatprep.subr.mxu0 0.0
  %408 = vmatpush1.msra.mxu0 0.0
  %409 = vmatprep.subr.mxu0 0.0
  %410 = vmatpush1.msra.mxu0 0.0
  %411 = vmatprep.subr.mxu0 0.0
  %412 = vmatpush1.msra.mxu0 0.0
  %413 = vmatprep.subr.mxu0 0.0
  %414 = vmatpush1.msra.mxu0 0.0
  %415 = vmatprep.subr.mxu0 0.0
  %416 = vmatpush1.msra.mxu0 0.0
  %417 = vmatprep.subr.mxu0 0.0
  %418 = vmatpush1.msra.mxu0 0.0
  %419 = vmatprep.subr.mxu0 0.0
  %420 = vmatpush1.msra.mxu0 0.0
  %421 = vmatprep.subr.mxu0 0.0
  %422 = vmatpush1.msra.mxu0 0.0
  %423 = vmatprep.subr.mxu0 0.0
  %424 = vmatpush1.msra.mxu0 0.0
  %425 = vmatprep.subr.mxu0 0.0
  %426 = vmatpush1.msra.mxu0 0.0
  %427 = vmatprep.subr.mxu0 0.0
  %428 = vmatpush1.msra.mxu0 0.0
  %429 = vmatprep.subr.mxu0 0.0
  %430 = vmatpush1.msra.mxu0 0.0
  %431 = vmatprep.subr.mxu0 0.0
  %432 = vmatpush1.msra.mxu0 0.0
  %433 = vmatprep.subr.mxu0 0.0
  %434 = vmatpush1.msra.mxu0 0.0
  %435 = vmatprep.subr.mxu0 0.0
  %436 = vmatpush1.msra.mxu0 0.0
  %437 = vmatprep.subr.mxu0 0.0
  %438 = vmatpush1.msra.mxu0 0.0
  %439 = vmatprep.mubr.f32.mxu0 0.0
  %440 = vmatmul.mubr.f32.gmra.mrb[0].mxu0 %v373
  %v441 = vpop.f32.mrb[0].mxu0
  %v442 = vadd.f32 0.0, %v441
  %v443 = vpop.f32.mrb[0].mxu0
  %444 = vdwg.mxu0
  %445 = vrot.lane.b32.xlu0 %v266, 120
  %v446 = vpop.permute.xlu0 %445
  %447 = vrot.lane.b32.xlu0 %v266, 88
  %v448 = vpop.permute.xlu0 %447
  %v449 = vsel %vm281, %v446, 0
  %v451 = vsel %vm281, %v448, 0
  %453 = vmatprep.subr.mxu0 0.0
  %454 = vmatpush1.xpose.msra.mxu0 %v451
  %455 = vmatprep.subr.mxu0 0.0
  %456 = vmatpush1.xpose.msra.mxu0 0.0
  %457 = vmatprep.subr.mxu0 0.0
  %458 = vmatpush1.xpose.msra.mxu0 0.0
  %459 = vmatprep.subr.mxu0 0.0
  %460 = vmatpush1.xpose.msra.mxu0 0.0
  %461 = vmatprep.subr.mxu0 0.0
  %462 = vmatpush1.xpose.msra.mxu0 0.0
  %463 = vmatprep.subr.mxu0 0.0
  %464 = vmatpush1.xpose.msra.mxu0 0.0
  %465 = vmatprep.subr.mxu0 0.0
  %466 = vmatpush1.xpose.msra.mxu0 0.0
  %467 = vmatprep.subr.mxu0 0.0
  %468 = vmatpush1.xpose.msra.mxu0 0.0
  %469 = vmatprep.subr.mxu0 0.0
  %470 = vmatpush1.xpose.msra.mxu0 0.0
  %471 = vmatprep.subr.mxu0 0.0
  %472 = vmatpush1.xpose.msra.mxu0 0.0
  %473 = vmatprep.subr.mxu0 0.0
  %474 = vmatpush1.xpose.msra.mxu0 0.0
  %475 = vmatprep.subr.mxu0 0.0
  %476 = vmatpush1.xpose.msra.mxu0 0.0
  %477 = vmatprep.subr.mxu0 0.0
  %478 = vmatpush1.xpose.msra.mxu0 0.0
  %479 = vmatprep.subr.mxu0 0.0
  %480 = vmatpush1.xpose.msra.mxu0 0.0
  %481 = vmatprep.subr.mxu0 0.0
  %482 = vmatpush1.xpose.msra.mxu0 0.0
  %483 = vmatprep.subr.mxu0 0.0
  %484 = vmatpush1.xpose.msra.mxu0 0.0
  %485 = vmatprep.subr.mxu0 0.0
  %486 = vmatpush1.xpose.msra.mxu0 0.0
  %487 = vmatprep.subr.mxu0 0.0
  %488 = vmatpush1.xpose.msra.mxu0 0.0
  %489 = vmatprep.subr.mxu0 0.0
  %490 = vmatpush1.xpose.msra.mxu0 0.0
  %491 = vmatprep.subr.mxu0 0.0
  %492 = vmatpush1.xpose.msra.mxu0 0.0
  %493 = vmatprep.subr.mxu0 0.0
  %494 = vmatpush1.xpose.msra.mxu0 0.0
  %495 = vmatprep.subr.mxu0 0.0
  %496 = vmatpush1.xpose.msra.mxu0 0.0
  %497 = vmatprep.subr.mxu0 0.0
  %498 = vmatpush1.xpose.msra.mxu0 0.0
  %499 = vmatprep.subr.mxu0 0.0
  %500 = vmatpush1.xpose.msra.mxu0 0.0
  %501 = vmatprep.subr.mxu0 0.0
  %502 = vmatpush1.xpose.msra.mxu0 0.0
  %503 = vmatprep.subr.mxu0 0.0
  %504 = vmatpush1.xpose.msra.mxu0 0.0
  %505 = vmatprep.subr.mxu0 0.0
  %506 = vmatpush1.xpose.msra.mxu0 0.0
  %507 = vmatprep.subr.mxu0 0.0
  %508 = vmatpush1.xpose.msra.mxu0 0.0
  %509 = vmatprep.subr.mxu0 0.0
  %510 = vmatpush1.xpose.msra.mxu0 0.0
  %511 = vmatprep.subr.mxu0 0.0
  %512 = vmatpush1.xpose.msra.mxu0 0.0
  %513 = vmatprep.subr.mxu0 0.0
  %514 = vmatpush1.xpose.msra.mxu0 0.0
  %515 = vmatprep.subr.mxu0 0.0
  %516 = vmatpush1.xpose.msra.mxu0 0.0
  %517 = vmatprep.mubr.f32.mxu0 0.0
  %518 = vmatmul.mubr.f32.gmra.mrb[0].mxu0 %v449
  %v519 = vpop.f32.mrb[0].mxu0
  %v520 = vadd.f32 0.0, %v519
  %v521 = vpop.f32.mrb[0].mxu0
  %522 = vdwg.mxu0
  %v523 = vmul.f32 %v520, 0.35355338
  %v524 = vadd.f32 %v523, %v277
  %v525 = vsel %vm281, %v524, -inf
  %526 = vmax.xlane.f32.xlu0 %v525
  %v527 = vpop.xlane.xlu0 %526
  %v528 = vsub.f32 %v524, %v527
  %v529 = vmul.f32 %v528, 1.442695
  %v530 = vpow.pop %v529
  %v531 = vsel %vm281, %v530, 0.0
  %532 = vadd.xlane.f32.xlu0 %v531
  %v533 = vpop.xlane.xlu0 %532
  %v534 = vrcp.pop %v533
  %v535 = vmul.f32 %v530, %v534
  %536 = vrot.lane.b32.xlu0 %v266, 56
  %v537 = vpop.permute.xlu0 %536
  %v540 = vsel %vm281, %v535, 0
  %542 = vmatprep.subr.mxu0 0.0
  %543 = vmatpush1.msra.mxu0 %v537
  %544 = vmatprep.subr.mxu0 0.0
  %545 = vmatpush1.msra.mxu0 0.0
  %546 = vmatprep.subr.mxu0 0.0
  %547 = vmatpush1.msra.mxu0 0.0
  %548 = vmatprep.subr.mxu0 0.0
  %549 = vmatpush1.msra.mxu0 0.0
  %550 = vmatprep.subr.mxu0 0.0
  %551 = vmatpush1.msra.mxu0 0.0
  %552 = vmatprep.subr.mxu0 0.0
  %553 = vmatpush1.msra.mxu0 0.0
  %554 = vmatprep.subr.mxu0 0.0
  %555 = vmatpush1.msra.mxu0 0.0
  %556 = vmatprep.subr.mxu0 0.0
  %557 = vmatpush1.msra.mxu0 0.0
  %558 = vmatprep.subr.mxu0 0.0
  %559 = vmatpush1.msra.mxu0 0.0
  %560 = vmatprep.subr.mxu0 0.0
  %561 = vmatpush1.msra.mxu0 0.0
  %562 = vmatprep.subr.mxu0 0.0
  %563 = vmatpush1.msra.mxu0 0.0
  %564 = vmatprep.subr.mxu0 0.0
  %565 = vmatpush1.msra.mxu0 0.0
  %566 = vmatprep.subr.mxu0 0.0
  %567 = vmatpush1.msra.mxu0 0.0
  %568 = vmatprep.subr.mxu0 0.0
  %569 = vmatpush1.msra.mxu0 0.0
  %570 = vmatprep.subr.mxu0 0.0
  %571 = vmatpush1.msra.mxu0 0.0
  %572 = vmatprep.subr.mxu0 0.0
  %573 = vmatpush1.msra.mxu0 0.0
  %574 = vmatprep.subr.mxu0 0.0
  %575 = vmatpush1.msra.mxu0 0.0
  %576 = vmatprep.subr.mxu0 0.0
  %577 = vmatpush1.msra.mxu0 0.0
  %578 = vmatprep.subr.mxu0 0.0
  %579 = vmatpush1.msra.mxu0 0.0
  %580 = vmatprep.subr.mxu0 0.0
  %581 = vmatpush1.msra.mxu0 0.0
  %582 = vmatprep.subr.mxu0 0.0
  %583 = vmatpush1.msra.mxu0 0.0
  %584 = vmatprep.subr.mxu0 0.0
  %585 = vmatpush1.msra.mxu0 0.0
  %586 = vmatprep.subr.mxu0 0.0
  %587 = vmatpush1.msra.mxu0 0.0
  %588 = vmatprep.subr.mxu0 0.0
  %589 = vmatpush1.msra.mxu0 0.0
  %590 = vmatprep.subr.mxu0 0.0
  %591 = vmatpush1.msra.mxu0 0.0
  %592 = vmatprep.subr.mxu0 0.0
  %593 = vmatpush1.msra.mxu0 0.0
  %594 = vmatprep.subr.mxu0 0.0
  %595 = vmatpush1.msra.mxu0 0.0
  %596 = vmatprep.subr.mxu0 0.0
  %597 = vmatpush1.msra.mxu0 0.0
  %598 = vmatprep.subr.mxu0 0.0
  %599 = vmatpush1.msra.mxu0 0.0
  %600 = vmatprep.subr.mxu0 0.0
  %601 = vmatpush1.msra.mxu0 0.0
  %602 = vmatprep.subr.mxu0 0.0
  %603 = vmatpush1.msra.mxu0 0.0
  %604 = vmatprep.subr.mxu0 0.0
  %605 = vmatpush1.msra.mxu0 0.0
  %606 = vmatprep.mubr.f32.mxu0 0.0
  %607 = vmatmul.mubr.f32.gmra.mrb[0].mxu0 %v540
  %v608 = vpop.f32.mrb[0].mxu0
  %v609 = vadd.f32 0.0, %v608
  %v610 = vpop.f32.mrb[0].mxu0
  %611 = vdwg.mxu0
  %612 = vrot.lane.b32.xlu0 %v266, 112
  %v613 = vpop.permute.xlu0 %612
  %614 = vrot.lane.b32.xlu0 %v266, 80
  %v615 = vpop.permute.xlu0 %614
  %v616 = vsel %vm281, %v613, 0
  %v618 = vsel %vm281, %v615, 0
  %620 = vmatprep.subr.mxu0 0.0
  %621 = vmatpush1.xpose.msra.mxu0 %v618
  %622 = vmatprep.subr.mxu0 0.0
  %623 = vmatpush1.xpose.msra.mxu0 0.0
  %624 = vmatprep.subr.mxu0 0.0
  %625 = vmatpush1.xpose.msra.mxu0 0.0
  %626 = vmatprep.subr.mxu0 0.0
  %627 = vmatpush1.xpose.msra.mxu0 0.0
  %628 = vmatprep.subr.mxu0 0.0
  %629 = vmatpush1.xpose.msra.mxu0 0.0
  %630 = vmatprep.subr.mxu0 0.0
  %631 = vmatpush1.xpose.msra.mxu0 0.0
  %632 = vmatprep.subr.mxu0 0.0
  %633 = vmatpush1.xpose.msra.mxu0 0.0
  %634 = vmatprep.subr.mxu0 0.0
  %635 = vmatpush1.xpose.msra.mxu0 0.0
  %636 = vmatprep.subr.mxu0 0.0
  %637 = vmatpush1.xpose.msra.mxu0 0.0
  %638 = vmatprep.subr.mxu0 0.0
  %639 = vmatpush1.xpose.msra.mxu0 0.0
  %640 = vmatprep.subr.mxu0 0.0
  %641 = vmatpush1.xpose.msra.mxu0 0.0
  %642 = vmatprep.subr.mxu0 0.0
  %643 = vmatpush1.xpose.msra.mxu0 0.0
  %644 = vmatprep.subr.mxu0 0.0
  %645 = vmatpush1.xpose.msra.mxu0 0.0
  %646 = vmatprep.subr.mxu0 0.0
  %647 = vmatpush1.xpose.msra.mxu0 0.0
  %648 = vmatprep.subr.mxu0 0.0
  %649 = vmatpush1.xpose.msra.mxu0 0.0
  %650 = vmatprep.subr.mxu0 0.0
  %651 = vmatpush1.xpose.msra.mxu0 0.0
  %652 = vmatprep.subr.mxu0 0.0
  %653 = vmatpush1.xpose.msra.mxu0 0.0
  %654 = vmatprep.subr.mxu0 0.0
  %655 = vmatpush1.xpose.msra.mxu0 0.0
  %656 = vmatprep.subr.mxu0 0.0
  %657 = vmatpush1.xpose.msra.mxu0 0.0
  %658 = vmatprep.subr.mxu0 0.0
  %659 = vmatpush1.xpose.msra.mxu0 0.0
  %660 = vmatprep.subr.mxu0 0.0
  %661 = vmatpush1.xpose.msra.mxu0 0.0
  %662 = vmatprep.subr.mxu0 0.0
  %663 = vmatpush1.xpose.msra.mxu0 0.0
  %664 = vmatprep.subr.mxu0 0.0
  %665 = vmatpush1.xpose.msra.mxu0 0.0
  %666 = vmatprep.subr.mxu0 0.0
  %667 = vmatpush1.xpose.msra.mxu0 0.0
  %668 = vmatprep.subr.mxu0 0.0
  %669 = vmatpush1.xpose.msra.mxu0 0.0
  %670 = vmatprep.subr.mxu0 0.0
  %671 = vmatpush1.xpose.msra.mxu0 0.0
  %672 = vmatprep.subr.mxu0 0.0
  %673 = vmatpush1.xpose.msra.mxu0 0.0
  %674 = vmatprep.subr.mxu0 0.0
  %675 = vmatpush1.xpose.msra.mxu0 0.0
  %676 = vmatprep.subr.mxu0 0.0
  %677 = vmatpush1.xpose.msra.mxu0 0.0
  %678 = vmatprep.subr.mxu0 0.0
  %679 = vmatpush1.xpose.msra.mxu0 0.0
  %680 = vmatprep.subr.mxu0 0.0
  %681 = vmatpush1.xpose.msra.mxu0 0.0
  %682 = vmatprep.subr.mxu0 0.0
  %683 = vmatpush1.xpose.msra.mxu0 0.0
  %684 = vmatprep.mubr.f32.mxu0 0.0
  %685 = vmatmul.mubr.f32.gmra.mrb[0].mxu0 %v616
  %v686 = vpop.f32.mrb[0].mxu0
  %v687 = vadd.f32 0.0, %v686
  %v688 = vpop.f32.mrb[0].mxu0
  %689 = vdwg.mxu0
  %v690 = vmul.f32 %v687, 0.35355338
  %v691 = vadd.f32 %v690, %v277
  %v692 = vsel %vm281, %v691, -inf
  %693 = vmax.xlane.f32.xlu0 %v692
  %v694 = vpop.xlane.xlu0 %693
  %v695 = vsub.f32 %v691, %v694
  %v696 = vmul.f32 %v695, 1.442695
  %v697 = vpow.pop %v696
  %v698 = vsel %vm281, %v697, 0.0
  %699 = vadd.xlane.f32.xlu0 %v698
  %v700 = vpop.xlane.xlu0 %699
  %v701 = vrcp.pop %v700
  %v702 = vmul.f32 %v697, %v701
  %703 = vrot.lane.b32.xlu0 %v266, 48
  %v704 = vpop.permute.xlu0 %703
  %v707 = vsel %vm281, %v702, 0
  %709 = vmatprep.subr.mxu0 0.0
  %710 = vmatpush1.msra.mxu0 %v704
  %711 = vmatprep.subr.mxu0 0.0
  %712 = vmatpush1.msra.mxu0 0.0
  %713 = vmatprep.subr.mxu0 0.0
  %714 = vmatpush1.msra.mxu0 0.0
  %715 = vmatprep.subr.mxu0 0.0
  %716 = vmatpush1.msra.mxu0 0.0
  %717 = vmatprep.subr.mxu0 0.0
  %718 = vmatpush1.msra.mxu0 0.0
  %719 = vmatprep.subr.mxu0 0.0
  %720 = vmatpush1.msra.mxu0 0.0
  %721 = vmatprep.subr.mxu0 0.0
  %722 = vmatpush1.msra.mxu0 0.0
  %723 = vmatprep.subr.mxu0 0.0
  %724 = vmatpush1.msra.mxu0 0.0
  %725 = vmatprep.subr.mxu0 0.0
  %726 = vmatpush1.msra.mxu0 0.0
  %727 = vmatprep.subr.mxu0 0.0
  %728 = vmatpush1.msra.mxu0 0.0
  %729 = vmatprep.subr.mxu0 0.0
  %730 = vmatpush1.msra.mxu0 0.0
  %731 = vmatprep.subr.mxu0 0.0
  %732 = vmatpush1.msra.mxu0 0.0
  %733 = vmatprep.subr.mxu0 0.0
  %734 = vmatpush1.msra.mxu0 0.0
  %735 = vmatprep.subr.mxu0 0.0
  %736 = vmatpush1.msra.mxu0 0.0
  %737 = vmatprep.subr.mxu0 0.0
  %738 = vmatpush1.msra.mxu0 0.0
  %739 = vmatprep.subr.mxu0 0.0
  %740 = vmatpush1.msra.mxu0 0.0
  %741 = vmatprep.subr.mxu0 0.0
  %742 = vmatpush1.msra.mxu0 0.0
  %743 = vmatprep.subr.mxu0 0.0
  %744 = vmatpush1.msra.mxu0 0.0
  %745 = vmatprep.subr.mxu0 0.0
  %746 = vmatpush1.msra.mxu0 0.0
  %747 = vmatprep.subr.mxu0 0.0
  %748 = vmatpush1.msra.mxu0 0.0
  %749 = vmatprep.subr.mxu0 0.0
  %750 = vmatpush1.msra.mxu0 0.0
  %751 = vmatprep.subr.mxu0 0.0
  %752 = vmatpush1.msra.mxu0 0.0
  %753 = vmatprep.subr.mxu0 0.0
  %754 = vmatpush1.msra.mxu0 0.0
  %755 = vmatprep.subr.mxu0 0.0
  %756 = vmatpush1.msra.mxu0 0.0
  %757 = vmatprep.subr.mxu0 0.0
  %758 = vmatpush1.msra.mxu0 0.0
  %759 = vmatprep.subr.mxu0 0.0
  %760 = vmatpush1.msra.mxu0 0.0
  %761 = vmatprep.subr.mxu0 0.0
  %762 = vmatpush1.msra.mxu0 0.0
  %763 = vmatprep.subr.mxu0 0.0
  %764 = vmatpush1.msra.mxu0 0.0
  %765 = vmatprep.subr.mxu0 0.0
  %766 = vmatpush1.msra.mxu0 0.0
  %767 = vmatprep.subr.mxu0 0.0
  %768 = vmatpush1.msra.mxu0 0.0
  %769 = vmatprep.subr.mxu0 0.0
  %770 = vmatpush1.msra.mxu0 0.0
  %771 = vmatprep.subr.mxu0 0.0
  %772 = vmatpush1.msra.mxu0 0.0
  %773 = vmatprep.mubr.f32.mxu0 0.0
  %774 = vmatmul.mubr.f32.gmra.mrb[0].mxu0 %v707
  %v775 = vpop.f32.mrb[0].mxu0
  %v776 = vadd.f32 0.0, %v775
  %v777 = vpop.f32.mrb[0].mxu0
  %778 = vdwg.mxu0
  %779 = vrot.lane.b32.xlu0 %v266, 104
  %v780 = vpop.permute.xlu0 %779
  %781 = vrot.lane.b32.xlu0 %v266, 72
  %v782 = vpop.permute.xlu0 %781
  %v783 = vsel %vm281, %v780, 0
  %v785 = vsel %vm281, %v782, 0
  %787 = vmatprep.subr.mxu0 0.0
  %788 = vmatpush1.xpose.msra.mxu0 %v785
  %789 = vmatprep.subr.mxu0 0.0
  %790 = vmatpush1.xpose.msra.mxu0 0.0
  %791 = vmatprep.subr.mxu0 0.0
  %792 = vmatpush1.xpose.msra.mxu0 0.0
  %793 = vmatprep.subr.mxu0 0.0
  %794 = vmatpush1.xpose.msra.mxu0 0.0
  %795 = vmatprep.subr.mxu0 0.0
  %796 = vmatpush1.xpose.msra.mxu0 0.0
  %797 = vmatprep.subr.mxu0 0.0
  %798 = vmatpush1.xpose.msra.mxu0 0.0
  %799 = vmatprep.subr.mxu0 0.0
  %800 = vmatpush1.xpose.msra.mxu0 0.0
  %801 = vmatprep.subr.mxu0 0.0
  %802 = vmatpush1.xpose.msra.mxu0 0.0
  %803 = vmatprep.subr.mxu0 0.0
  %804 = vmatpush1.xpose.msra.mxu0 0.0
  %805 = vmatprep.subr.mxu0 0.0
  %806 = vmatpush1.xpose.msra.mxu0 0.0
  %807 = vmatprep.subr.mxu0 0.0
  %808 = vmatpush1.xpose.msra.mxu0 0.0
  %809 = vmatprep.subr.mxu0 0.0
  %810 = vmatpush1.xpose.msra.mxu0 0.0
  %811 = vmatprep.subr.mxu0 0.0
  %812 = vmatpush1.xpose.msra.mxu0 0.0
  %813 = vmatprep.subr.mxu0 0.0
  %814 = vmatpush1.xpose.msra.mxu0 0.0
  %815 = vmatprep.subr.mxu0 0.0
  %816 = vmatpush1.xpose.msra.mxu0 0.0
  %817 = vmatprep.subr.mxu0 0.0
  %818 = vmatpush1.xpose.msra.mxu0 0.0
  %819 = vmatprep.subr.mxu0 0.0
  %820 = vmatpush1.xpose.msra.mxu0 0.0
  %821 = vmatprep.subr.mxu0 0.0
  %822 = vmatpush1.xpose.msra.mxu0 0.0
  %823 = vmatprep.subr.mxu0 0.0
  %824 = vmatpush1.xpose.msra.mxu0 0.0
  %825 = vmatprep.subr.mxu0 0.0
  %826 = vmatpush1.xpose.msra.mxu0 0.0
  %827 = vmatprep.subr.mxu0 0.0
  %828 = vmatpush1.xpose.msra.mxu0 0.0
  %829 = vmatprep.subr.mxu0 0.0
  %830 = vmatpush1.xpose.msra.mxu0 0.0
  %831 = vmatprep.subr.mxu0 0.0
  %832 = vmatpush1.xpose.msra.mxu0 0.0
  %833 = vmatprep.subr.mxu0 0.0
  %834 = vmatpush1.xpose.msra.mxu0 0.0
  %835 = vmatprep.subr.mxu0 0.0
  %836 = vmatpush1.xpose.msra.mxu0 0.0
  %837 = vmatprep.subr.mxu0 0.0
  %838 = vmatpush1.xpose.msra.mxu0 0.0
  %839 = vmatprep.subr.mxu0 0.0
  %840 = vmatpush1.xpose.msra.mxu0 0.0
  %841 = vmatprep.subr.mxu0 0.0
  %842 = vmatpush1.xpose.msra.mxu0 0.0
  %843 = vmatprep.subr.mxu0 0.0
  %844 = vmatpush1.xpose.msra.mxu0 0.0
  %845 = vmatprep.subr.mxu0 0.0
  %846 = vmatpush1.xpose.msra.mxu0 0.0
  %847 = vmatprep.subr.mxu0 0.0
  %848 = vmatpush1.xpose.msra.mxu0 0.0
  %849 = vmatprep.subr.mxu0 0.0
  %850 = vmatpush1.xpose.msra.mxu0 0.0
  %851 = vmatprep.mubr.f32.mxu0 0.0
  %852 = vmatmul.mubr.f32.gmra.mrb[0].mxu0 %v783
  %v853 = vpop.f32.mrb[0].mxu0
  %v854 = vadd.f32 0.0, %v853
  %v855 = vpop.f32.mrb[0].mxu0
  %856 = vdwg.mxu0
  %v857 = vmul.f32 %v854, 0.35355338
  %v858 = vadd.f32 %v857, %v277
  %v859 = vsel %vm281, %v858, -inf
  %860 = vmax.xlane.f32.xlu0 %v859
  %v861 = vpop.xlane.xlu0 %860
  %v862 = vsub.f32 %v858, %v861
  %v863 = vmul.f32 %v862, 1.442695
  %v864 = vpow.pop %v863
  %v865 = vsel %vm281, %v864, 0.0
  %866 = vadd.xlane.f32.xlu0 %v865
  %v867 = vpop.xlane.xlu0 %866
  %v868 = vrcp.pop %v867
  %v869 = vmul.f32 %v864, %v868
  %870 = vrot.lane.b32.xlu0 %v266, 40
  %v871 = vpop.permute.xlu0 %870
  %v874 = vsel %vm281, %v869, 0
  %876 = vmatprep.subr.mxu0 0.0
  %877 = vmatpush1.msra.mxu0 %v871
  %878 = vmatprep.subr.mxu0 0.0
  %879 = vmatpush1.msra.mxu0 0.0
  %880 = vmatprep.subr.mxu0 0.0
  %881 = vmatpush1.msra.mxu0 0.0
  %882 = vmatprep.subr.mxu0 0.0
  %883 = vmatpush1.msra.mxu0 0.0
  %884 = vmatprep.subr.mxu0 0.0
  %885 = vmatpush1.msra.mxu0 0.0
  %886 = vmatprep.subr.mxu0 0.0
  %887 = vmatpush1.msra.mxu0 0.0
  %888 = vmatprep.subr.mxu0 0.0
  %889 = vmatpush1.msra.mxu0 0.0
  %890 = vmatprep.subr.mxu0 0.0
  %891 = vmatpush1.msra.mxu0 0.0
  %892 = vmatprep.subr.mxu0 0.0
  %893 = vmatpush1.msra.mxu0 0.0
  %894 = vmatprep.subr.mxu0 0.0
  %895 = vmatpush1.msra.mxu0 0.0
  %896 = vmatprep.subr.mxu0 0.0
  %897 = vmatpush1.msra.mxu0 0.0
  %898 = vmatprep.subr.mxu0 0.0
  %899 = vmatpush1.msra.mxu0 0.0
  %900 = vmatprep.subr.mxu0 0.0
  %901 = vmatpush1.msra.mxu0 0.0
  %902 = vmatprep.subr.mxu0 0.0
  %903 = vmatpush1.msra.mxu0 0.0
  %904 = vmatprep.subr.mxu0 0.0
  %905 = vmatpush1.msra.mxu0 0.0
  %906 = vmatprep.subr.mxu0 0.0
  %907 = vmatpush1.msra.mxu0 0.0
  %908 = vmatprep.subr.mxu0 0.0
  %909 = vmatpush1.msra.mxu0 0.0
  %910 = vmatprep.subr.mxu0 0.0
  %911 = vmatpush1.msra.mxu0 0.0
  %912 = vmatprep.subr.mxu0 0.0
  %913 = vmatpush1.msra.mxu0 0.0
  %914 = vmatprep.subr.mxu0 0.0
  %915 = vmatpush1.msra.mxu0 0.0
  %916 = vmatprep.subr.mxu0 0.0
  %917 = vmatpush1.msra.mxu0 0.0
  %918 = vmatprep.subr.mxu0 0.0
  %919 = vmatpush1.msra.mxu0 0.0
  %920 = vmatprep.subr.mxu0 0.0
  %921 = vmatpush1.msra.mxu0 0.0
  %922 = vmatprep.subr.mxu0 0.0
  %923 = vmatpush1.msra.mxu0 0.0
  %924 = vmatprep.subr.mxu0 0.0
  %925 = vmatpush1.msra.mxu0 0.0
  %926 = vmatprep.subr.mxu0 0.0
  %927 = vmatpush1.msra.mxu0 0.0
  %928 = vmatprep.subr.mxu0 0.0
  %929 = vmatpush1.msra.mxu0 0.0
  %930 = vmatprep.subr.mxu0 0.0
  %931 = vmatpush1.msra.mxu0 0.0
  %932 = vmatprep.subr.mxu0 0.0
  %933 = vmatpush1.msra.mxu0 0.0
  %934 = vmatprep.subr.mxu0 0.0
  %935 = vmatpush1.msra.mxu0 0.0
  %936 = vmatprep.subr.mxu0 0.0
  %937 = vmatpush1.msra.mxu0 0.0
  %938 = vmatprep.subr.mxu0 0.0
  %939 = vmatpush1.msra.mxu0 0.0
  %940 = vmatprep.mubr.f32.mxu0 0.0
  %941 = vmatmul.mubr.f32.gmra.mrb[0].mxu0 %v874
  %v942 = vpop.f32.mrb[0].mxu0
  %v943 = vadd.f32 0.0, %v942
  %v944 = vpop.f32.mrb[0].mxu0
  %945 = vdwg.mxu0
  %947 = vrot.lane.b32.xlu0 %v609, 8
  %v948 = vpop.permute.xlu0 %947
  %951 = vrot.lane.b32.xlu0 %v776, 16
  %v952 = vpop.permute.xlu0 %951
  %955 = vrot.lane.b32.xlu0 %v943, 24
  %v956 = vpop.permute.xlu0 %955
  %v958 = vsel %vm281, %v442, %v948
  %vm959 = vcmask 130048
  %v960 = vsel %vm959, %v958, %v952
  %vm961 = vcmask 195584
  %v962 = vsel %vm961, %v960, %v956
  %964 = vrot.lane.b32.xlu0 %v271, 96
  %v965 = vpop.permute.xlu0 %964
  %v966 = vsel %vm281, %v271, 0
  %v968 = vsel %vm281, %v965, 0
  %970 = vmatprep.subr.mxu0 0.0
  %971 = vmatpush1.xpose.msra.mxu0 %v968
  %972 = vmatprep.subr.mxu0 0.0
  %973 = vmatpush1.xpose.msra.mxu0 0.0
  %974 = vmatprep.subr.mxu0 0.0
  %975 = vmatpush1.xpose.msra.mxu0 0.0
  %976 = vmatprep.subr.mxu0 0.0
  %977 = vmatpush1.xpose.msra.mxu0 0.0
  %978 = vmatprep.subr.mxu0 0.0
  %979 = vmatpush1.xpose.msra.mxu0 0.0
  %980 = vmatprep.subr.mxu0 0.0
  %981 = vmatpush1.xpose.msra.mxu0 0.0
  %982 = vmatprep.subr.mxu0 0.0
  %983 = vmatpush1.xpose.msra.mxu0 0.0
  %984 = vmatprep.subr.mxu0 0.0
  %985 = vmatpush1.xpose.msra.mxu0 0.0
  %986 = vmatprep.subr.mxu0 0.0
  %987 = vmatpush1.xpose.msra.mxu0 0.0
  %988 = vmatprep.subr.mxu0 0.0
  %989 = vmatpush1.xpose.msra.mxu0 0.0
  %990 = vmatprep.subr.mxu0 0.0
  %991 = vmatpush1.xpose.msra.mxu0 0.0
  %992 = vmatprep.subr.mxu0 0.0
  %993 = vmatpush1.xpose.msra.mxu0 0.0
  %994 = vmatprep.subr.mxu0 0.0
  %995 = vmatpush1.xpose.msra.mxu0 0.0
  %996 = vmatprep.subr.mxu0 0.0
  %997 = vmatpush1.xpose.msra.mxu0 0.0
  %998 = vmatprep.subr.mxu0 0.0
  %999 = vmatpush1.xpose.msra.mxu0 0.0
  %1000 = vmatprep.subr.mxu0 0.0
  %1001 = vmatpush1.xpose.msra.mxu0 0.0
  %1002 = vmatprep.subr.mxu0 0.0
  %1003 = vmatpush1.xpose.msra.mxu0 0.0
  %1004 = vmatprep.subr.mxu0 0.0
  %1005 = vmatpush1.xpose.msra.mxu0 0.0
  %1006 = vmatprep.subr.mxu0 0.0
  %1007 = vmatpush1.xpose.msra.mxu0 0.0
  %1008 = vmatprep.subr.mxu0 0.0
  %1009 = vmatpush1.xpose.msra.mxu0 0.0
  %1010 = vmatprep.subr.mxu0 0.0
  %1011 = vmatpush1.xpose.msra.mxu0 0.0
  %1012 = vmatprep.subr.mxu0 0.0
  %1013 = vmatpush1.xpose.msra.mxu0 0.0
  %1014 = vmatprep.subr.mxu0 0.0
  %1015 = vmatpush1.xpose.msra.mxu0 0.0
  %1016 = vmatprep.subr.mxu0 0.0
  %1017 = vmatpush1.xpose.msra.mxu0 0.0
  %1018 = vmatprep.subr.mxu0 0.0
  %1019 = vmatpush1.xpose.msra.mxu0 0.0
  %1020 = vmatprep.subr.mxu0 0.0
  %1021 = vmatpush1.xpose.msra.mxu0 0.0
  %1022 = vmatprep.subr.mxu0 0.0
  %1023 = vmatpush1.xpose.msra.mxu0 0.0
  %1024 = vmatprep.subr.mxu0 0.0
  %1025 = vmatpush1.xpose.msra.mxu0 0.0
  %1026 = vmatprep.subr.mxu0 0.0
  %1027 = vmatpush1.xpose.msra.mxu0 0.0
  %1028 = vmatprep.subr.mxu0 0.0
  %1029 = vmatpush1.xpose.msra.mxu0 0.0
  %1030 = vmatprep.subr.mxu0 0.0
  %1031 = vmatpush1.xpose.msra.mxu0 0.0
  %1032 = vmatprep.subr.mxu0 0.0
  %1033 = vmatpush1.xpose.msra.mxu0 0.0
  %1034 = vmatprep.mubr.f32.mxu0 0.0
  %1035 = vmatmul.mubr.f32.gmra.mrb[0].mxu0 %v966
  %v1036 = vpop.f32.mrb[0].mxu0
  %v1037 = vadd.f32 0.0, %v1036
  %v1038 = vpop.f32.mrb[0].mxu0
  %1039 = vdwg.mxu0
  %v1040 = vmul.f32 %v1037, 0.35355338
  %v1041 = vadd.f32 %v1040, %v277
  %v1042 = vsel %vm281, %v1041, -inf
  %1043 = vmax.xlane.f32.xlu0 %v1042
  %v1044 = vpop.xlane.xlu0 %1043
  %v1045 = vsub.f32 %v1041, %v1044
  %v1046 = vmul.f32 %v1045, 1.442695
  %v1047 = vpow.pop %v1046
  %v1048 = vsel %vm281, %v1047, 0.0
  %1049 = vadd.xlane.f32.xlu0 %v1048
  %v1050 = vpop.xlane.xlu0 %1049
  %v1051 = vrcp.pop %v1050
  %v1052 = vmul.f32 %v1047, %v1051
  %1053 = vrot.lane.b32.xlu0 %v271, 64
  %v1054 = vpop.permute.xlu0 %1053
  %v1057 = vsel %vm281, %v1052, 0
  %1059 = vmatprep.subr.mxu0 0.0
  %1060 = vmatpush1.msra.mxu0 %v1054
  %1061 = vmatprep.subr.mxu0 0.0
  %1062 = vmatpush1.msra.mxu0 0.0
  %1063 = vmatprep.subr.mxu0 0.0
  %1064 = vmatpush1.msra.mxu0 0.0
  %1065 = vmatprep.subr.mxu0 0.0
  %1066 = vmatpush1.msra.mxu0 0.0
  %1067 = vmatprep.subr.mxu0 0.0
  %1068 = vmatpush1.msra.mxu0 0.0
  %1069 = vmatprep.subr.mxu0 0.0
  %1070 = vmatpush1.msra.mxu0 0.0
  %1071 = vmatprep.subr.mxu0 0.0
  %1072 = vmatpush1.msra.mxu0 0.0
  %1073 = vmatprep.subr.mxu0 0.0
  %1074 = vmatpush1.msra.mxu0 0.0
  %1075 = vmatprep.subr.mxu0 0.0
  %1076 = vmatpush1.msra.mxu0 0.0
  %1077 = vmatprep.subr.mxu0 0.0
  %1078 = vmatpush1.msra.mxu0 0.0
  %1079 = vmatprep.subr.mxu0 0.0
  %1080 = vmatpush1.msra.mxu0 0.0
  %1081 = vmatprep.subr.mxu0 0.0
  %1082 = vmatpush1.msra.mxu0 0.0
  %1083 = vmatprep.subr.mxu0 0.0
  %1084 = vmatpush1.msra.mxu0 0.0
  %1085 = vmatprep.subr.mxu0 0.0
  %1086 = vmatpush1.msra.mxu0 0.0
  %1087 = vmatprep.subr.mxu0 0.0
  %1088 = vmatpush1.msra.mxu0 0.0
  %1089 = vmatprep.subr.mxu0 0.0
  %1090 = vmatpush1.msra.mxu0 0.0
  %1091 = vmatprep.subr.mxu0 0.0
  %1092 = vmatpush1.msra.mxu0 0.0
  %1093 = vmatprep.subr.mxu0 0.0
  %1094 = vmatpush1.msra.mxu0 0.0
  %1095 = vmatprep.subr.mxu0 0.0
  %1096 = vmatpush1.msra.mxu0 0.0
  %1097 = vmatprep.subr.mxu0 0.0
  %1098 = vmatpush1.msra.mxu0 0.0
  %1099 = vmatprep.subr.mxu0 0.0
  %1100 = vmatpush1.msra.mxu0 0.0
  %1101 = vmatprep.subr.mxu0 0.0
  %1102 = vmatpush1.msra.mxu0 0.0
  %1103 = vmatprep.subr.mxu0 0.0
  %1104 = vmatpush1.msra.mxu0 0.0
  %1105 = vmatprep.subr.mxu0 0.0
  %1106 = vmatpush1.msra.mxu0 0.0
  %1107 = vmatprep.subr.mxu0 0.0
  %1108 = vmatpush1.msra.mxu0 0.0
  %1109 = vmatprep.subr.mxu0 0.0
  %1110 = vmatpush1.msra.mxu0 0.0
  %1111 = vmatprep.subr.mxu0 0.0
  %1112 = vmatpush1.msra.mxu0 0.0
  %1113 = vmatprep.subr.mxu0 0.0
  %1114 = vmatpush1.msra.mxu0 0.0
  %1115 = vmatprep.subr.mxu0 0.0
  %1116 = vmatpush1.msra.mxu0 0.0
  %1117 = vmatprep.subr.mxu0 0.0
  %1118 = vmatpush1.msra.mxu0 0.0
  %1119 = vmatprep.subr.mxu0 0.0
  %1120 = vmatpush1.msra.mxu0 0.0
  %1121 = vmatprep.subr.mxu0 0.0
  %1122 = vmatpush1.msra.mxu0 0.0
  %1123 = vmatprep.mubr.f32.mxu0 0.0
  %1124 = vmatmul.mubr.f32.gmra.mrb[0].mxu0 %v1057
  %v1125 = vpop.f32.mrb[0].mxu0
  %v1126 = vadd.f32 0.0, %v1125
  %v1127 = vpop.f32.mrb[0].mxu0
  %1128 = vdwg.mxu0
  %1129 = vrot.lane.b32.xlu0 %v271, 120
  %v1130 = vpop.permute.xlu0 %1129
  %1131 = vrot.lane.b32.xlu0 %v271, 88
  %v1132 = vpop.permute.xlu0 %1131
  %v1133 = vsel %vm281, %v1130, 0
  %v1135 = vsel %vm281, %v1132, 0
  %1137 = vmatprep.subr.mxu0 0.0
  %1138 = vmatpush1.xpose.msra.mxu0 %v1135
  %1139 = vmatprep.subr.mxu0 0.0
  %1140 = vmatpush1.xpose.msra.mxu0 0.0
  %1141 = vmatprep.subr.mxu0 0.0
  %1142 = vmatpush1.xpose.msra.mxu0 0.0
  %1143 = vmatprep.subr.mxu0 0.0
  %1144 = vmatpush1.xpose.msra.mxu0 0.0
  %1145 = vmatprep.subr.mxu0 0.0
  %1146 = vmatpush1.xpose.msra.mxu0 0.0
  %1147 = vmatprep.subr.mxu0 0.0
  %1148 = vmatpush1.xpose.msra.mxu0 0.0
  %1149 = vmatprep.subr.mxu0 0.0
  %1150 = vmatpush1.xpose.msra.mxu0 0.0
  %1151 = vmatprep.subr.mxu0 0.0
  %1152 = vmatpush1.xpose.msra.mxu0 0.0
  %1153 = vmatprep.subr.mxu0 0.0
  %1154 = vmatpush1.xpose.msra.mxu0 0.0
  %1155 = vmatprep.subr.mxu0 0.0
  %1156 = vmatpush1.xpose.msra.mxu0 0.0
  %1157 = vmatprep.subr.mxu0 0.0
  %1158 = vmatpush1.xpose.msra.mxu0 0.0
  %1159 = vmatprep.subr.mxu0 0.0
  %1160 = vmatpush1.xpose.msra.mxu0 0.0
  %1161 = vmatprep.subr.mxu0 0.0
  %1162 = vmatpush1.xpose.msra.mxu0 0.0
  %1163 = vmatprep.subr.mxu0 0.0
  %1164 = vmatpush1.xpose.msra.mxu0 0.0
  %1165 = vmatprep.subr.mxu0 0.0
  %1166 = vmatpush1.xpose.msra.mxu0 0.0
  %1167 = vmatprep.subr.mxu0 0.0
  %1168 = vmatpush1.xpose.msra.mxu0 0.0
  %1169 = vmatprep.subr.mxu0 0.0
  %1170 = vmatpush1.xpose.msra.mxu0 0.0
  %1171 = vmatprep.subr.mxu0 0.0
  %1172 = vmatpush1.xpose.msra.mxu0 0.0
  %1173 = vmatprep.subr.mxu0 0.0
  %1174 = vmatpush1.xpose.msra.mxu0 0.0
  %1175 = vmatprep.subr.mxu0 0.0
  %1176 = vmatpush1.xpose.msra.mxu0 0.0
  %1177 = vmatprep.subr.mxu0 0.0
  %1178 = vmatpush1.xpose.msra.mxu0 0.0
  %1179 = vmatprep.subr.mxu0 0.0
  %1180 = vmatpush1.xpose.msra.mxu0 0.0
  %1181 = vmatprep.subr.mxu0 0.0
  %1182 = vmatpush1.xpose.msra.mxu0 0.0
  %1183 = vmatprep.subr.mxu0 0.0
  %1184 = vmatpush1.xpose.msra.mxu0 0.0
  %1185 = vmatprep.subr.mxu0 0.0
  %1186 = vmatpush1.xpose.msra.mxu0 0.0
  %1187 = vmatprep.subr.mxu0 0.0
  %1188 = vmatpush1.xpose.msra.mxu0 0.0
  %1189 = vmatprep.subr.mxu0 0.0
  %1190 = vmatpush1.xpose.msra.mxu0 0.0
  %1191 = vmatprep.subr.mxu0 0.0
  %1192 = vmatpush1.xpose.msra.mxu0 0.0
  %1193 = vmatprep.subr.mxu0 0.0
  %1194 = vmatpush1.xpose.msra.mxu0 0.0
  %1195 = vmatprep.subr.mxu0 0.0
  %1196 = vmatpush1.xpose.msra.mxu0 0.0
  %1197 = vmatprep.subr.mxu0 0.0
  %1198 = vmatpush1.xpose.msra.mxu0 0.0
  %1199 = vmatprep.subr.mxu0 0.0
  %1200 = vmatpush1.xpose.msra.mxu0 0.0
  %1201 = vmatprep.mubr.f32.mxu0 0.0
  %1202 = vmatmul.mubr.f32.gmra.mrb[0].mxu0 %v1133
  %v1203 = vpop.f32.mrb[0].mxu0
  %v1204 = vadd.f32 0.0, %v1203
  %v1205 = vpop.f32.mrb[0].mxu0
  %1206 = vdwg.mxu0
  %v1207 = vmul.f32 %v1204, 0.35355338
  %v1208 = vadd.f32 %v1207, %v277
  %v1209 = vsel %vm281, %v1208, -inf
  %1210 = vmax.xlane.f32.xlu0 %v1209
  %v1211 = vpop.xlane.xlu0 %1210
  %v1212 = vsub.f32 %v1208, %v1211
  %v1213 = vmul.f32 %v1212, 1.442695
  %v1214 = vpow.pop %v1213
  %v1215 = vsel %vm281, %v1214, 0.0
  %1216 = vadd.xlane.f32.xlu0 %v1215
  %v1217 = vpop.xlane.xlu0 %1216
  %v1218 = vrcp.pop %v1217
  %v1219 = vmul.f32 %v1214, %v1218
  %1220 = vrot.lane.b32.xlu0 %v271, 56
  %v1221 = vpop.permute.xlu0 %1220
  %v1224 = vsel %vm281, %v1219, 0
  %1226 = vmatprep.subr.mxu0 0.0
  %1227 = vmatpush1.msra.mxu0 %v1221
  %1228 = vmatprep.subr.mxu0 0.0
  %1229 = vmatpush1.msra.mxu0 0.0
  %1230 = vmatprep.subr.mxu0 0.0
  %1231 = vmatpush1.msra.mxu0 0.0
  %1232 = vmatprep.subr.mxu0 0.0
  %1233 = vmatpush1.msra.mxu0 0.0
  %1234 = vmatprep.subr.mxu0 0.0
  %1235 = vmatpush1.msra.mxu0 0.0
  %1236 = vmatprep.subr.mxu0 0.0
  %1237 = vmatpush1.msra.mxu0 0.0
  %1238 = vmatprep.subr.mxu0 0.0
  %1239 = vmatpush1.msra.mxu0 0.0
  %1240 = vmatprep.subr.mxu0 0.0
  %1241 = vmatpush1.msra.mxu0 0.0
  %1242 = vmatprep.subr.mxu0 0.0
  %1243 = vmatpush1.msra.mxu0 0.0
  %1244 = vmatprep.subr.mxu0 0.0
  %1245 = vmatpush1.msra.mxu0 0.0
  %1246 = vmatprep.subr.mxu0 0.0
  %1247 = vmatpush1.msra.mxu0 0.0
  %1248 = vmatprep.subr.mxu0 0.0
  %1249 = vmatpush1.msra.mxu0 0.0
  %1250 = vmatprep.subr.mxu0 0.0
  %1251 = vmatpush1.msra.mxu0 0.0
  %1252 = vmatprep.subr.mxu0 0.0
  %1253 = vmatpush1.msra.mxu0 0.0
  %1254 = vmatprep.subr.mxu0 0.0
  %1255 = vmatpush1.msra.mxu0 0.0
  %1256 = vmatprep.subr.mxu0 0.0
  %1257 = vmatpush1.msra.mxu0 0.0
  %1258 = vmatprep.subr.mxu0 0.0
  %1259 = vmatpush1.msra.mxu0 0.0
  %1260 = vmatprep.subr.mxu0 0.0
  %1261 = vmatpush1.msra.mxu0 0.0
  %1262 = vmatprep.subr.mxu0 0.0
  %1263 = vmatpush1.msra.mxu0 0.0
  %1264 = vmatprep.subr.mxu0 0.0
  %1265 = vmatpush1.msra.mxu0 0.0
  %1266 = vmatprep.subr.mxu0 0.0
  %1267 = vmatpush1.msra.mxu0 0.0
  %1268 = vmatprep.subr.mxu0 0.0
  %1269 = vmatpush1.msra.mxu0 0.0
  %1270 = vmatprep.subr.mxu0 0.0
  %1271 = vmatpush1.msra.mxu0 0.0
  %1272 = vmatprep.subr.mxu0 0.0
  %1273 = vmatpush1.msra.mxu0 0.0
  %1274 = vmatprep.subr.mxu0 0.0
  %1275 = vmatpush1.msra.mxu0 0.0
  %1276 = vmatprep.subr.mxu0 0.0
  %1277 = vmatpush1.msra.mxu0 0.0
  %1278 = vmatprep.subr.mxu0 0.0
  %1279 = vmatpush1.msra.mxu0 0.0
  %1280 = vmatprep.subr.mxu0 0.0
  %1281 = vmatpush1.msra.mxu0 0.0
  %1282 = vmatprep.subr.mxu0 0.0
  %1283 = vmatpush1.msra.mxu0 0.0
  %1284 = vmatprep.subr.mxu0 0.0
  %1285 = vmatpush1.msra.mxu0 0.0
  %1286 = vmatprep.subr.mxu0 0.0
  %1287 = vmatpush1.msra.mxu0 0.0
  %1288 = vmatprep.subr.mxu0 0.0
  %1289 = vmatpush1.msra.mxu0 0.0
  %1290 = vmatprep.mubr.f32.mxu0 0.0
  %1291 = vmatmul.mubr.f32.gmra.mrb[0].mxu0 %v1224
  %v1292 = vpop.f32.mrb[0].mxu0
  %v1293 = vadd.f32 0.0, %v1292
  %v1294 = vpop.f32.mrb[0].mxu0
  %1295 = vdwg.mxu0
  %1296 = vrot.lane.b32.xlu0 %v271, 112
  %v1297 = vpop.permute.xlu0 %1296
  %1298 = vrot.lane.b32.xlu0 %v271, 80
  %v1299 = vpop.permute.xlu0 %1298
  %v1300 = vsel %vm281, %v1297, 0
  %v1302 = vsel %vm281, %v1299, 0
  %1304 = vmatprep.subr.mxu0 0.0
  %1305 = vmatpush1.xpose.msra.mxu0 %v1302
  %1306 = vmatprep.subr.mxu0 0.0
  %1307 = vmatpush1.xpose.msra.mxu0 0.0
  %1308 = vmatprep.subr.mxu0 0.0
  %1309 = vmatpush1.xpose.msra.mxu0 0.0
  %1310 = vmatprep.subr.mxu0 0.0
  %1311 = vmatpush1.xpose.msra.mxu0 0.0
  %1312 = vmatprep.subr.mxu0 0.0
  %1313 = vmatpush1.xpose.msra.mxu0 0.0
  %1314 = vmatprep.subr.mxu0 0.0
  %1315 = vmatpush1.xpose.msra.mxu0 0.0
  %1316 = vmatprep.subr.mxu0 0.0
  %1317 = vmatpush1.xpose.msra.mxu0 0.0
  %1318 = vmatprep.subr.mxu0 0.0
  %1319 = vmatpush1.xpose.msra.mxu0 0.0
  %1320 = vmatprep.subr.mxu0 0.0
  %1321 = vmatpush1.xpose.msra.mxu0 0.0
  %1322 = vmatprep.subr.mxu0 0.0
  %1323 = vmatpush1.xpose.msra.mxu0 0.0
  %1324 = vmatprep.subr.mxu0 0.0
  %1325 = vmatpush1.xpose.msra.mxu0 0.0
  %1326 = vmatprep.subr.mxu0 0.0
  %1327 = vmatpush1.xpose.msra.mxu0 0.0
  %1328 = vmatprep.subr.mxu0 0.0
  %1329 = vmatpush1.xpose.msra.mxu0 0.0
  %1330 = vmatprep.subr.mxu0 0.0
  %1331 = vmatpush1.xpose.msra.mxu0 0.0
  %1332 = vmatprep.subr.mxu0 0.0
  %1333 = vmatpush1.xpose.msra.mxu0 0.0
  %1334 = vmatprep.subr.mxu0 0.0
  %1335 = vmatpush1.xpose.msra.mxu0 0.0
  %1336 = vmatprep.subr.mxu0 0.0
  %1337 = vmatpush1.xpose.msra.mxu0 0.0
  %1338 = vmatprep.subr.mxu0 0.0
  %1339 = vmatpush1.xpose.msra.mxu0 0.0
  %1340 = vmatprep.subr.mxu0 0.0
  %1341 = vmatpush1.xpose.msra.mxu0 0.0
  %1342 = vmatprep.subr.mxu0 0.0
  %1343 = vmatpush1.xpose.msra.mxu0 0.0
  %1344 = vmatprep.subr.mxu0 0.0
  %1345 = vmatpush1.xpose.msra.mxu0 0.0
  %1346 = vmatprep.subr.mxu0 0.0
  %1347 = vmatpush1.xpose.msra.mxu0 0.0
  %1348 = vmatprep.subr.mxu0 0.0
  %1349 = vmatpush1.xpose.msra.mxu0 0.0
  %1350 = vmatprep.subr.mxu0 0.0
  %1351 = vmatpush1.xpose.msra.mxu0 0.0
  %1352 = vmatprep.subr.mxu0 0.0
  %1353 = vmatpush1.xpose.msra.mxu0 0.0
  %1354 = vmatprep.subr.mxu0 0.0
  %1355 = vmatpush1.xpose.msra.mxu0 0.0
  %1356 = vmatprep.subr.mxu0 0.0
  %1357 = vmatpush1.xpose.msra.mxu0 0.0
  %1358 = vmatprep.subr.mxu0 0.0
  %1359 = vmatpush1.xpose.msra.mxu0 0.0
  %1360 = vmatprep.subr.mxu0 0.0
  %1361 = vmatpush1.xpose.msra.mxu0 0.0
  %1362 = vmatprep.subr.mxu0 0.0
  %1363 = vmatpush1.xpose.msra.mxu0 0.0
  %1364 = vmatprep.subr.mxu0 0.0
  %1365 = vmatpush1.xpose.msra.mxu0 0.0
  %1366 = vmatprep.subr.mxu0 0.0
  %1367 = vmatpush1.xpose.msra.mxu0 0.0
  %1368 = vmatprep.mubr.f32.mxu0 0.0
  %1369 = vmatmul.mubr.f32.gmra.mrb[0].mxu0 %v1300
  %v1370 = vpop.f32.mrb[0].mxu0
  %v1371 = vadd.f32 0.0, %v1370
  %v1372 = vpop.f32.mrb[0].mxu0
  %1373 = vdwg.mxu0
  %v1374 = vmul.f32 %v1371, 0.35355338
  %v1375 = vadd.f32 %v1374, %v277
  %v1376 = vsel %vm281, %v1375, -inf
  %1377 = vmax.xlane.f32.xlu0 %v1376
  %v1378 = vpop.xlane.xlu0 %1377
  %v1379 = vsub.f32 %v1375, %v1378
  %v1380 = vmul.f32 %v1379, 1.442695
  %v1381 = vpow.pop %v1380
  %v1382 = vsel %vm281, %v1381, 0.0
  %1383 = vadd.xlane.f32.xlu0 %v1382
  %v1384 = vpop.xlane.xlu0 %1383
  %v1385 = vrcp.pop %v1384
  %v1386 = vmul.f32 %v1381, %v1385
  %1387 = vrot.lane.b32.xlu0 %v271, 48
  %v1388 = vpop.permute.xlu0 %1387
  %v1391 = vsel %vm281, %v1386, 0
  %1393 = vmatprep.subr.mxu0 0.0
  %1394 = vmatpush1.msra.mxu0 %v1388
  %1395 = vmatprep.subr.mxu0 0.0
  %1396 = vmatpush1.msra.mxu0 0.0
  %1397 = vmatprep.subr.mxu0 0.0
  %1398 = vmatpush1.msra.mxu0 0.0
  %1399 = vmatprep.subr.mxu0 0.0
  %1400 = vmatpush1.msra.mxu0 0.0
  %1401 = vmatprep.subr.mxu0 0.0
  %1402 = vmatpush1.msra.mxu0 0.0
  %1403 = vmatprep.subr.mxu0 0.0
  %1404 = vmatpush1.msra.mxu0 0.0
  %1405 = vmatprep.subr.mxu0 0.0
  %1406 = vmatpush1.msra.mxu0 0.0
  %1407 = vmatprep.subr.mxu0 0.0
  %1408 = vmatpush1.msra.mxu0 0.0
  %1409 = vmatprep.subr.mxu0 0.0
  %1410 = vmatpush1.msra.mxu0 0.0
  %1411 = vmatprep.subr.mxu0 0.0
  %1412 = vmatpush1.msra.mxu0 0.0
  %1413 = vmatprep.subr.mxu0 0.0
  %1414 = vmatpush1.msra.mxu0 0.0
  %1415 = vmatprep.subr.mxu0 0.0
  %1416 = vmatpush1.msra.mxu0 0.0
  %1417 = vmatprep.subr.mxu0 0.0
  %1418 = vmatpush1.msra.mxu0 0.0
  %1419 = vmatprep.subr.mxu0 0.0
  %1420 = vmatpush1.msra.mxu0 0.0
  %1421 = vmatprep.subr.mxu0 0.0
  %1422 = vmatpush1.msra.mxu0 0.0
  %1423 = vmatprep.subr.mxu0 0.0
  %1424 = vmatpush1.msra.mxu0 0.0
  %1425 = vmatprep.subr.mxu0 0.0
  %1426 = vmatpush1.msra.mxu0 0.0
  %1427 = vmatprep.subr.mxu0 0.0
  %1428 = vmatpush1.msra.mxu0 0.0
  %1429 = vmatprep.subr.mxu0 0.0
  %1430 = vmatpush1.msra.mxu0 0.0
  %1431 = vmatprep.subr.mxu0 0.0
  %1432 = vmatpush1.msra.mxu0 0.0
  %1433 = vmatprep.subr.mxu0 0.0
  %1434 = vmatpush1.msra.mxu0 0.0
  %1435 = vmatprep.subr.mxu0 0.0
  %1436 = vmatpush1.msra.mxu0 0.0
  %1437 = vmatprep.subr.mxu0 0.0
  %1438 = vmatpush1.msra.mxu0 0.0
  %1439 = vmatprep.subr.mxu0 0.0
  %1440 = vmatpush1.msra.mxu0 0.0
  %1441 = vmatprep.subr.mxu0 0.0
  %1442 = vmatpush1.msra.mxu0 0.0
  %1443 = vmatprep.subr.mxu0 0.0
  %1444 = vmatpush1.msra.mxu0 0.0
  %1445 = vmatprep.subr.mxu0 0.0
  %1446 = vmatpush1.msra.mxu0 0.0
  %1447 = vmatprep.subr.mxu0 0.0
  %1448 = vmatpush1.msra.mxu0 0.0
  %1449 = vmatprep.subr.mxu0 0.0
  %1450 = vmatpush1.msra.mxu0 0.0
  %1451 = vmatprep.subr.mxu0 0.0
  %1452 = vmatpush1.msra.mxu0 0.0
  %1453 = vmatprep.subr.mxu0 0.0
  %1454 = vmatpush1.msra.mxu0 0.0
  %1455 = vmatprep.subr.mxu0 0.0
  %1456 = vmatpush1.msra.mxu0 0.0
  %1457 = vmatprep.mubr.f32.mxu0 0.0
  %1458 = vmatmul.mubr.f32.gmra.mrb[0].mxu0 %v1391
  %v1459 = vpop.f32.mrb[0].mxu0
  %v1460 = vadd.f32 0.0, %v1459
  %v1461 = vpop.f32.mrb[0].mxu0
  %1462 = vdwg.mxu0
  %1463 = vrot.lane.b32.xlu0 %v271, 104
  %v1464 = vpop.permute.xlu0 %1463
  %1465 = vrot.lane.b32.xlu0 %v271, 72
  %v1466 = vpop.permute.xlu0 %1465
  %v1467 = vsel %vm281, %v1464, 0
  %v1469 = vsel %vm281, %v1466, 0
  %1471 = vmatprep.subr.mxu0 0.0
  %1472 = vmatpush1.xpose.msra.mxu0 %v1469
  %1473 = vmatprep.subr.mxu0 0.0
  %1474 = vmatpush1.xpose.msra.mxu0 0.0
  %1475 = vmatprep.subr.mxu0 0.0
  %1476 = vmatpush1.xpose.msra.mxu0 0.0
  %1477 = vmatprep.subr.mxu0 0.0
  %1478 = vmatpush1.xpose.msra.mxu0 0.0
  %1479 = vmatprep.subr.mxu0 0.0
  %1480 = vmatpush1.xpose.msra.mxu0 0.0
  %1481 = vmatprep.subr.mxu0 0.0
  %1482 = vmatpush1.xpose.msra.mxu0 0.0
  %1483 = vmatprep.subr.mxu0 0.0
  %1484 = vmatpush1.xpose.msra.mxu0 0.0
  %1485 = vmatprep.subr.mxu0 0.0
  %1486 = vmatpush1.xpose.msra.mxu0 0.0
  %1487 = vmatprep.subr.mxu0 0.0
  %1488 = vmatpush1.xpose.msra.mxu0 0.0
  %1489 = vmatprep.subr.mxu0 0.0
  %1490 = vmatpush1.xpose.msra.mxu0 0.0
  %1491 = vmatprep.subr.mxu0 0.0
  %1492 = vmatpush1.xpose.msra.mxu0 0.0
  %1493 = vmatprep.subr.mxu0 0.0
  %1494 = vmatpush1.xpose.msra.mxu0 0.0
  %1495 = vmatprep.subr.mxu0 0.0
  %1496 = vmatpush1.xpose.msra.mxu0 0.0
  %1497 = vmatprep.subr.mxu0 0.0
  %1498 = vmatpush1.xpose.msra.mxu0 0.0
  %1499 = vmatprep.subr.mxu0 0.0
  %1500 = vmatpush1.xpose.msra.mxu0 0.0
  %1501 = vmatprep.subr.mxu0 0.0
  %1502 = vmatpush1.xpose.msra.mxu0 0.0
  %1503 = vmatprep.subr.mxu0 0.0
  %1504 = vmatpush1.xpose.msra.mxu0 0.0
  %1505 = vmatprep.subr.mxu0 0.0
  %1506 = vmatpush1.xpose.msra.mxu0 0.0
  %1507 = vmatprep.subr.mxu0 0.0
  %1508 = vmatpush1.xpose.msra.mxu0 0.0
  %1509 = vmatprep.subr.mxu0 0.0
  %1510 = vmatpush1.xpose.msra.mxu0 0.0
  %1511 = vmatprep.subr.mxu0 0.0
  %1512 = vmatpush1.xpose.msra.mxu0 0.0
  %1513 = vmatprep.subr.mxu0 0.0
  %1514 = vmatpush1.xpose.msra.mxu0 0.0
  %1515 = vmatprep.subr.mxu0 0.0
  %1516 = vmatpush1.xpose.msra.mxu0 0.0
  %1517 = vmatprep.subr.mxu0 0.0
  %1518 = vmatpush1.xpose.msra.mxu0 0.0
  %1519 = vmatprep.subr.mxu0 0.0
  %1520 = vmatpush1.xpose.msra.mxu0 0.0
  %1521 = vmatprep.subr.mxu0 0.0
  %1522 = vmatpush1.xpose.msra.mxu0 0.0
  %1523 = vmatprep.subr.mxu0 0.0
  %1524 = vmatpush1.xpose.msra.mxu0 0.0
  %1525 = vmatprep.subr.mxu0 0.0
  %1526 = vmatpush1.xpose.msra.mxu0 0.0
  %1527 = vmatprep.subr.mxu0 0.0
  %1528 = vmatpush1.xpose.msra.mxu0 0.0
  %1529 = vmatprep.subr.mxu0 0.0
  %1530 = vmatpush1.xpose.msra.mxu0 0.0
  %1531 = vmatprep.subr.mxu0 0.0
  %1532 = vmatpush1.xpose.msra.mxu0 0.0
  %1533 = vmatprep.subr.mxu0 0.0
  %1534 = vmatpush1.xpose.msra.mxu0 0.0
  %1535 = vmatprep.mubr.f32.mxu0 0.0
  %1536 = vmatmul.mubr.f32.gmra.mrb[0].mxu0 %v1467
  %v1537 = vpop.f32.mrb[0].mxu0
  %v1538 = vadd.f32 0.0, %v1537
  %v1539 = vpop.f32.mrb[0].mxu0
  %1540 = vdwg.mxu0
  %v1541 = vmul.f32 %v1538, 0.35355338
  %v1542 = vadd.f32 %v1541, %v277
  %v1543 = vsel %vm281, %v1542, -inf
  %1544 = vmax.xlane.f32.xlu0 %v1543
  %v1545 = vpop.xlane.xlu0 %1544
  %v1546 = vsub.f32 %v1542, %v1545
  %v1547 = vmul.f32 %v1546, 1.442695
  %v1548 = vpow.pop %v1547
  %v1549 = vsel %vm281, %v1548, 0.0
  %1550 = vadd.xlane.f32.xlu0 %v1549
  %v1551 = vpop.xlane.xlu0 %1550
  %v1552 = vrcp.pop %v1551
  %v1553 = vmul.f32 %v1548, %v1552
  %1554 = vrot.lane.b32.xlu0 %v271, 40
  %v1555 = vpop.permute.xlu0 %1554
  %v1558 = vsel %vm281, %v1553, 0
  %1560 = vmatprep.subr.mxu0 0.0
  %1561 = vmatpush1.msra.mxu0 %v1555
  %1562 = vmatprep.subr.mxu0 0.0
  %1563 = vmatpush1.msra.mxu0 0.0
  %1564 = vmatprep.subr.mxu0 0.0
  %1565 = vmatpush1.msra.mxu0 0.0
  %1566 = vmatprep.subr.mxu0 0.0
  %1567 = vmatpush1.msra.mxu0 0.0
  %1568 = vmatprep.subr.mxu0 0.0
  %1569 = vmatpush1.msra.mxu0 0.0
  %1570 = vmatprep.subr.mxu0 0.0
  %1571 = vmatpush1.msra.mxu0 0.0
  %1572 = vmatprep.subr.mxu0 0.0
  %1573 = vmatpush1.msra.mxu0 0.0
  %1574 = vmatprep.subr.mxu0 0.0
  %1575 = vmatpush1.msra.mxu0 0.0
  %1576 = vmatprep.subr.mxu0 0.0
  %1577 = vmatpush1.msra.mxu0 0.0
  %1578 = vmatprep.subr.mxu0 0.0
  %1579 = vmatpush1.msra.mxu0 0.0
  %1580 = vmatprep.subr.mxu0 0.0
  %1581 = vmatpush1.msra.mxu0 0.0
  %1582 = vmatprep.subr.mxu0 0.0
  %1583 = vmatpush1.msra.mxu0 0.0
  %1584 = vmatprep.subr.mxu0 0.0
  %1585 = vmatpush1.msra.mxu0 0.0
  %1586 = vmatprep.subr.mxu0 0.0
  %1587 = vmatpush1.msra.mxu0 0.0
  %1588 = vmatprep.subr.mxu0 0.0
  %1589 = vmatpush1.msra.mxu0 0.0
  %1590 = vmatprep.subr.mxu0 0.0
  %1591 = vmatpush1.msra.mxu0 0.0
  %1592 = vmatprep.subr.mxu0 0.0
  %1593 = vmatpush1.msra.mxu0 0.0
  %1594 = vmatprep.subr.mxu0 0.0
  %1595 = vmatpush1.msra.mxu0 0.0
  %1596 = vmatprep.subr.mxu0 0.0
  %1597 = vmatpush1.msra.mxu0 0.0
  %1598 = vmatprep.subr.mxu0 0.0
  %1599 = vmatpush1.msra.mxu0 0.0
  %1600 = vmatprep.subr.mxu0 0.0
  %1601 = vmatpush1.msra.mxu0 0.0
  %1602 = vmatprep.subr.mxu0 0.0
  %1603 = vmatpush1.msra.mxu0 0.0
  %1604 = vmatprep.subr.mxu0 0.0
  %1605 = vmatpush1.msra.mxu0 0.0
  %1606 = vmatprep.subr.mxu0 0.0
  %1607 = vmatpush1.msra.mxu0 0.0
  %1608 = vmatprep.subr.mxu0 0.0
  %1609 = vmatpush1.msra.mxu0 0.0
  %1610 = vmatprep.subr.mxu0 0.0
  %1611 = vmatpush1.msra.mxu0 0.0
  %1612 = vmatprep.subr.mxu0 0.0
  %1613 = vmatpush1.msra.mxu0 0.0
  %1614 = vmatprep.subr.mxu0 0.0
  %1615 = vmatpush1.msra.mxu0 0.0
  %1616 = vmatprep.subr.mxu0 0.0
  %1617 = vmatpush1.msra.mxu0 0.0
  %1618 = vmatprep.subr.mxu0 0.0
  %1619 = vmatpush1.msra.mxu0 0.0
  %1620 = vmatprep.subr.mxu0 0.0
  %1621 = vmatpush1.msra.mxu0 0.0
  %1622 = vmatprep.subr.mxu0 0.0
  %1623 = vmatpush1.msra.mxu0 0.0
  %1624 = vmatprep.mubr.f32.mxu0 0.0
  %1625 = vmatmul.mubr.f32.gmra.mrb[0].mxu0 %v1558
  %v1626 = vpop.f32.mrb[0].mxu0
  %v1627 = vadd.f32 0.0, %v1626
  %v1628 = vpop.f32.mrb[0].mxu0
  %1629 = vdwg.mxu0
  %1631 = vrot.lane.b32.xlu0 %v1293, 8
  %v1632 = vpop.permute.xlu0 %1631
  %1635 = vrot.lane.b32.xlu0 %v1460, 16
  %v1636 = vpop.permute.xlu0 %1635
  %1639 = vrot.lane.b32.xlu0 %v1627, 24
  %v1640 = vpop.permute.xlu0 %1639
  %v1642 = vsel %vm281, %v1126, %v1632
  %v1643 = vsel %vm959, %v1642, %v1636
  %v1644 = vsel %vm961, %v1643, %v1640
  %v1645 = vld [vmem:[%s1 + $0xec] sm:$0xff]
  %v1646 = vld [vmem:[%s1 + $0xf4] sm:$0xff]
  %v1647 = vld [vmem:[%s1 + $0xfc] sm:$0xff]
  %v1648 = vld [vmem:[%s1 + $0x104] sm:$0xff]
  %v1650 = vsel %vm144, %v962, 0
  %v1653 = vsel %vm144, %v1644, 0
  %1655 = vmatprep.subr.mxu0 0.0
  %1656 = vmatpush1.msra.mxu0 %v1645
  %1657 = vmatprep.subr.mxu0 0.0
  %1658 = vmatpush1.msra.mxu0 %v1646
  %1659 = vmatprep.subr.mxu0 0.0
  %1660 = vmatpush1.msra.mxu0 %v1647
  %1661 = vmatprep.subr.mxu0 0.0
  %1662 = vmatpush1.msra.mxu0 %v1648
  %1663 = vmatprep.subr.mxu0 0.0
  %1664 = vmatpush1.msra.mxu0 0.0
  %1665 = vmatprep.subr.mxu0 0.0
  %1666 = vmatpush1.msra.mxu0 0.0
  %1667 = vmatprep.subr.mxu0 0.0
  %1668 = vmatpush1.msra.mxu0 0.0
  %1669 = vmatprep.subr.mxu0 0.0
  %1670 = vmatpush1.msra.mxu0 0.0
  %1671 = vmatprep.subr.mxu0 0.0
  %1672 = vmatpush1.msra.mxu0 0.0
  %1673 = vmatprep.subr.mxu0 0.0
  %1674 = vmatpush1.msra.mxu0 0.0
  %1675 = vmatprep.subr.mxu0 0.0
  %1676 = vmatpush1.msra.mxu0 0.0
  %1677 = vmatprep.subr.mxu0 0.0
  %1678 = vmatpush1.msra.mxu0 0.0
  %1679 = vmatprep.subr.mxu0 0.0
  %1680 = vmatpush1.msra.mxu0 0.0
  %1681 = vmatprep.subr.mxu0 0.0
  %1682 = vmatpush1.msra.mxu0 0.0
  %1683 = vmatprep.subr.mxu0 0.0
  %1684 = vmatpush1.msra.mxu0 0.0
  %1685 = vmatprep.subr.mxu0 0.0
  %1686 = vmatpush1.msra.mxu0 0.0
  %1687 = vmatprep.subr.mxu0 0.0
  %1688 = vmatpush1.msra.mxu0 0.0
  %1689 = vmatprep.subr.mxu0 0.0
  %1690 = vmatpush1.msra.mxu0 0.0
  %1691 = vmatprep.subr.mxu0 0.0
  %1692 = vmatpush1.msra.mxu0 0.0
  %1693 = vmatprep.subr.mxu0 0.0
  %1694 = vmatpush1.msra.mxu0 0.0
  %1695 = vmatprep.subr.mxu0 0.0
  %1696 = vmatpush1.msra.mxu0 0.0
  %1697 = vmatprep.subr.mxu0 0.0
  %1698 = vmatpush1.msra.mxu0 0.0
  %1699 = vmatprep.subr.mxu0 0.0
  %1700 = vmatpush1.msra.mxu0 0.0
  %1701 = vmatprep.subr.mxu0 0.0
  %1702 = vmatpush1.msra.mxu0 0.0
  %1703 = vmatprep.subr.mxu0 0.0
  %1704 = vmatpush1.msra.mxu0 0.0
  %1705 = vmatprep.subr.mxu0 0.0
  %1706 = vmatpush1.msra.mxu0 0.0
  %1707 = vmatprep.subr.mxu0 0.0
  %1708 = vmatpush1.msra.mxu0 0.0
  %1709 = vmatprep.subr.mxu0 0.0
  %1710 = vmatpush1.msra.mxu0 0.0
  %1711 = vmatprep.subr.mxu0 0.0
  %1712 = vmatpush1.msra.mxu0 0.0
  %1713 = vmatprep.subr.mxu0 0.0
  %1714 = vmatpush1.msra.mxu0 0.0
  %1715 = vmatprep.subr.mxu0 0.0
  %1716 = vmatpush1.msra.mxu0 0.0
  %1717 = vmatprep.subr.mxu0 0.0
  %1718 = vmatpush1.msra.mxu0 0.0
  %1719 = vmatprep.mubr.f32.mxu0 0.0
  %1720 = vmatmul.mubr.f32.gmra.mrb[0].mxu0 %v1650
  %v1721 = vpop.f32.mrb[0].mxu0
  %v1722 = vadd.f32 0.0, %v1721
  %v1723 = vpop.f32.mrb[0].mxu0
  %1724 = vmatprep.mubr.f32.mxu0 0.0
  %1725 = vmatmul.mubr.f32.gmra.mrb[0].mxu0 %v1653
  %v1726 = vpop.f32.mrb[0].mxu0
  %v1727 = vadd.f32 0.0, %v1726
  %v1728 = vpop.f32.mrb[0].mxu0
  %1729 = vdwg.mxu0
  %v1730 = vadd.f32 %v140, %v1722
  %v1731 = vadd.f32 %v141, %v1727
  %v1732 = vld [vmem:[%s1 + $0x10c] sm:$0x1]
  %v1733 = vlaneseq
  %v1734 = vshrl.u32 %v1733, 7
  %v1735 = vsub.s32 0, %v1734
  %v1736 = vrot.slane %v1732, %v1735
  %v1737 = vadd.f32 %v1730, %v1736
  %v1738 = vadd.f32 %v1731, %v1736
  %v1739 = vld [vmem:[%s1 + $0x10d] sm:$0x1]
  %v1740 = vld [vmem:[%s1 + $0x10e] sm:$0x1]
  %v1741 = vsel %vm144, %v1737, 0.0
  %1742 = vadd.xlane.f32.xlu0 %v1741
  %v1743 = vpop.xlane.xlu0 %1742
  %v1744 = vsel %vm144, %v1738, 0.0
  %1745 = vadd.xlane.f32.xlu0 %v1744
  %v1746 = vpop.xlane.xlu0 %1745
  %v1747 = vmul.f32 %v1743, %v151
  %v1748 = vmul.f32 %v1746, %v151
  %v1749 = vsub.f32 %v1737, %v1747
  %v1750 = vsub.f32 %v1738, %v1748
  %v1751 = vmul.f32 %v1749, %v1749
  %v1752 = vmul.f32 %v1750, %v1750
  %v1753 = vsel %vm144, %v1751, 0.0
  %1754 = vadd.xlane.f32.xlu0 %v1753
  %v1755 = vpop.xlane.xlu0 %1754
  %v1756 = vsel %vm144, %v1752, 0.0
  %1757 = vadd.xlane.f32.xlu0 %v1756
  %v1758 = vpop.xlane.xlu0 %1757
  %v1759 = vmul.f32 %v1755, %v151
  %v1760 = vmul.f32 %v1758, %v151
  %v1761 = vadd.f32 %v1759, 1e-05
  %v1762 = vadd.f32 %v1760, 1e-05
  %v1763 = vrsqrt.pop %v1761
  %v1764 = vrsqrt.pop %v1762
  %v1765 = vmul.f32 %v1749, %v1763
  %v1766 = vmul.f32 %v1750, %v1764
  %v1767 = vlaneseq
  %v1768 = vshrl.u32 %v1767, 7
  %v1769 = vsub.s32 0, %v1768
  %v1770 = vrot.slane %v1739, %v1769
  %v1771 = vmul.f32 %v1765, %v1770
  %v1772 = vmul.f32 %v1766, %v1770
  %v1773 = vlaneseq
  %v1774 = vshrl.u32 %v1773, 7
  %v1775 = vsub.s32 0, %v1774
  %v1776 = vrot.slane %v1740, %v1775
  %v1777 = vadd.f32 %v1771, %v1776
  %v1778 = vadd.f32 %v1772, %v1776
  %v1779 = vld [vmem:[%s1 + $0x10f] sm:$0xff]
  %v1780 = vld [vmem:[%s1 + $0x117] sm:$0xff]
  %v1781 = vld [vmem:[%s1 + $0x11f] sm:$0xff]
  %v1782 = vld [vmem:[%s1 + $0x127] sm:$0xff]
  %v1783 = vld [vmem:[%s1 + $0x12f] sm:$0x1]
  %v1784 = vlaneseq
  %v1785 = vshrl.u32 %v1784, 7
  %v1786 = vsub.s32 0, %v1785
  %v1787 = vrot.slane %v1783, %v1786
  %v1789 = vsel %vm144, %v1777, 0
  %v1792 = vsel %vm144, %v1778, 0
  %1794 = vmatprep.subr.mxu0 0.0
  %1795 = vmatpush1.msra.mxu0 %v1779
  %1796 = vmatprep.subr.mxu0 0.0
  %1797 = vmatpush1.msra.mxu0 %v1780
  %1798 = vmatprep.subr.mxu0 0.0
  %1799 = vmatpush1.msra.mxu0 %v1781
  %1800 = vmatprep.subr.mxu0 0.0
  %1801 = vmatpush1.msra.mxu0 %v1782
  %1802 = vmatprep.subr.mxu0 0.0
  %1803 = vmatpush1.msra.mxu0 0.0
  %1804 = vmatprep.subr.mxu0 0.0
  %1805 = vmatpush1.msra.mxu0 0.0
  %1806 = vmatprep.subr.mxu0 0.0
  %1807 = vmatpush1.msra.mxu0 0.0
  %1808 = vmatprep.subr.mxu0 0.0
  %1809 = vmatpush1.msra.mxu0 0.0
  %1810 = vmatprep.subr.mxu0 0.0
  %1811 = vmatpush1.msra.mxu0 0.0
  %1812 = vmatprep.subr.mxu0 0.0
  %1813 = vmatpush1.msra.mxu0 0.0
  %1814 = vmatprep.subr.mxu0 0.0
  %1815 = vmatpush1.msra.mxu0 0.0
  %1816 = vmatprep.subr.mxu0 0.0
  %1817 = vmatpush1.msra.mxu0 0.0
  %1818 = vmatprep.subr.mxu0 0.0
  %1819 = vmatpush1.msra.mxu0 0.0
  %1820 = vmatprep.subr.mxu0 0.0
  %1821 = vmatpush1.msra.mxu0 0.0
  %1822 = vmatprep.subr.mxu0 0.0
  %1823 = vmatpush1.msra.mxu0 0.0
  %1824 = vmatprep.subr.mxu0 0.0
  %1825 = vmatpush1.msra.mxu0 0.0
  %1826 = vmatprep.subr.mxu0 0.0
  %1827 = vmatpush1.msra.mxu0 0.0
  %1828 = vmatprep.subr.mxu0 0.0
  %1829 = vmatpush1.msra.mxu0 0.0
  %1830 = vmatprep.subr.mxu0 0.0
  %1831 = vmatpush1.msra.mxu0 0.0
  %1832 = vmatprep.subr.mxu0 0.0
  %1833 = vmatpush1.msra.mxu0 0.0
  %1834 = vmatprep.subr.mxu0 0.0
  %1835 = vmatpush1.msra.mxu0 0.0
  %1836 = vmatprep.subr.mxu0 0.0
  %1837 = vmatpush1.msra.mxu0 0.0
  %1838 = vmatprep.subr.mxu0 0.0
  %1839 = vmatpush1.msra.mxu0 0.0
  %1840 = vmatprep.subr.mxu0 0.0
  %1841 = vmatpush1.msra.mxu0 0.0
  %1842 = vmatprep.subr.mxu0 0.0
  %1843 = vmatpush1.msra.mxu0 0.0
  %1844 = vmatprep.subr.mxu0 0.0
  %1845 = vmatpush1.msra.mxu0 0.0
  %1846 = vmatprep.subr.mxu0 0.0
  %1847 = vmatpush1.msra.mxu0 0.0
  %1848 = vmatprep.subr.mxu0 0.0
  %1849 = vmatpush1.msra.mxu0 0.0
  %1850 = vmatprep.subr.mxu0 0.0
  %1851 = vmatpush1.msra.mxu0 0.0
  %1852 = vmatprep.subr.mxu0 0.0
  %1853 = vmatpush1.msra.mxu0 0.0
  %1854 = vmatprep.subr.mxu0 0.0
  %1855 = vmatpush1.msra.mxu0 0.0
  %1856 = vmatprep.subr.mxu0 0.0
  %1857 = vmatpush1.msra.mxu0 0.0
  %1858 = vmatprep.mubr.f32.mxu0 0.0
  %1859 = vmatmul.mubr.f32.gmra.mrb[0].mxu0 %v1789
  %v1860 = vpop.f32.mrb[0].mxu0
  %v1861 = vadd.f32 %v1787, %v1860
  %v1862 = vpop.f32.mrb[0].mxu0
  %1863 = vmatprep.mubr.f32.mxu0 0.0
  %1864 = vmatmul.mubr.f32.gmra.mrb[0].mxu0 %v1792
  %v1865 = vpop.f32.mrb[0].mxu0
  %v1866 = vadd.f32 %v1787, %v1865
  %v1867 = vpop.f32.mrb[0].mxu0
  %1868 = vdwg.mxu0
  %v1869 = vmul.f32 %v1861, %v1861
  %v1870 = vmul.f32 %v1866, %v1866
  %v1871 = vmul.f32 %v1861, %v1869
  %v1872 = vmul.f32 %v1866, %v1870
  %v1873 = vmul.f32 %v1871, 0.044715
  %v1874 = vmul.f32 %v1872, 0.044715
  %v1875 = vadd.f32 %v1861, %v1873
  %v1876 = vadd.f32 %v1866, %v1874
  %v1877 = vmul.f32 %v1875, 0.7978846
  %v1878 = vmul.f32 %v1876, 0.7978846
  %v1879 = vtanh.pop %v1877
  %v1880 = vtanh.pop %v1878
  %v1881 = vadd.f32 %v1879, 1.0
  %v1882 = vadd.f32 %v1880, 1.0
  %v1883 = vmul.f32 %v1881, 0.5
  %v1884 = vmul.f32 %v1882, 0.5
  %v1885 = vmul.f32 %v1861, %v1883
  %v1886 = vmul.f32 %v1866, %v1884
  %v1887 = vld [vmem:[%s1 + $0x130] sm:$0xff]
  %v1888 = vld [vmem:[%s1 + $0x138] sm:$0xff]
  %v1889 = vld [vmem:[%s1 + $0x140] sm:$0xff]
  %v1890 = vld [vmem:[%s1 + $0x148] sm:$0xff]
  %v1891 = vld [vmem:[%s1 + $0x150] sm:$0xff]
  %v1892 = vld [vmem:[%s1 + $0x158] sm:$0xff]
  %v1893 = vld [vmem:[%s1 + $0x160] sm:$0xff]
  %v1894 = vld [vmem:[%s1 + $0x168] sm:$0xff]
  %v1895 = vld [vmem:[%s1 + $0x170] sm:$0x1]
  %v1896 = vlaneseq
  %v1897 = vshrl.u32 %v1896, 7
  %v1898 = vsub.s32 0, %v1897
  %v1899 = vrot.slane %v1895, %v1898
  %v1901 = vsel %vm51, %v1885, 0
  %v1904 = vsel %vm51, %v1886, 0
  %1906 = vmatprep.subr.mxu0 0.0
  %1907 = vmatpush1.msra.mxu0 %v1887
  %1908 = vmatprep.subr.mxu0 0.0
  %1909 = vmatpush1.msra.mxu0 %v1888
  %1910 = vmatprep.subr.mxu0 0.0
  %1911 = vmatpush1.msra.mxu0 %v1889
  %1912 = vmatprep.subr.mxu0 0.0
  %1913 = vmatpush1.msra.mxu0 %v1890
  %1914 = vmatprep.subr.mxu0 0.0
  %1915 = vmatpush1.msra.mxu0 %v1891
  %1916 = vmatprep.subr.mxu0 0.0
  %1917 = vmatpush1.msra.mxu0 %v1892
  %1918 = vmatprep.subr.mxu0 0.0
  %1919 = vmatpush1.msra.mxu0 %v1893
  %1920 = vmatprep.subr.mxu0 0.0
  %1921 = vmatpush1.msra.mxu0 %v1894
  %1922 = vmatprep.subr.mxu0 0.0
  %1923 = vmatpush1.msra.mxu0 0.0
  %1924 = vmatprep.subr.mxu0 0.0
  %1925 = vmatpush1.msra.mxu0 0.0
  %1926 = vmatprep.subr.mxu0 0.0
  %1927 = vmatpush1.msra.mxu0 0.0
  %1928 = vmatprep.subr.mxu0 0.0
  %1929 = vmatpush1.msra.mxu0 0.0
  %1930 = vmatprep.subr.mxu0 0.0
  %1931 = vmatpush1.msra.mxu0 0.0
  %1932 = vmatprep.subr.mxu0 0.0
  %1933 = vmatpush1.msra.mxu0 0.0
  %1934 = vmatprep.subr.mxu0 0.0
  %1935 = vmatpush1.msra.mxu0 0.0
  %1936 = vmatprep.subr.mxu0 0.0
  %1937 = vmatpush1.msra.mxu0 0.0
  %1938 = vmatprep.subr.mxu0 0.0
  %1939 = vmatpush1.msra.mxu0 0.0
  %1940 = vmatprep.subr.mxu0 0.0
  %1941 = vmatpush1.msra.mxu0 0.0
  %1942 = vmatprep.subr.mxu0 0.0
  %1943 = vmatpush1.msra.mxu0 0.0
  %1944 = vmatprep.subr.mxu0 0.0
  %1945 = vmatpush1.msra.mxu0 0.0
  %1946 = vmatprep.subr.mxu0 0.0
  %1947 = vmatpush1.msra.mxu0 0.0
  %1948 = vmatprep.subr.mxu0 0.0
  %1949 = vmatpush1.msra.mxu0 0.0
  %1950 = vmatprep.subr.mxu0 0.0
  %1951 = vmatpush1.msra.mxu0 0.0
  %1952 = vmatprep.subr.mxu0 0.0
  %1953 = vmatpush1.msra.mxu0 0.0
  %1954 = vmatprep.subr.mxu0 0.0
  %1955 = vmatpush1.msra.mxu0 0.0
  %1956 = vmatprep.subr.mxu0 0.0
  %1957 = vmatpush1.msra.mxu0 0.0
  %1958 = vmatprep.subr.mxu0 0.0
  %1959 = vmatpush1.msra.mxu0 0.0
  %1960 = vmatprep.subr.mxu0 0.0
  %1961 = vmatpush1.msra.mxu0 0.0
  %1962 = vmatprep.subr.mxu0 0.0
  %1963 = vmatpush1.msra.mxu0 0.0
  %1964 = vmatprep.subr.mxu0 0.0
  %1965 = vmatpush1.msra.mxu0 0.0
  %1966 = vmatprep.subr.mxu0 0.0
  %1967 = vmatpush1.msra.mxu0 0.0
  %1968 = vmatprep.subr.mxu0 0.0
  %1969 = vmatpush1.msra.mxu0 0.0
  %1970 = vmatprep.mubr.f32.mxu0 0.0
  %1971 = vmatmul.mubr.f32.gmra.mrb[0].mxu0 %v1901
  %v1972 = vpop.f32.mrb[0].mxu0
  %v1973 = vadd.f32 %v1899, %v1972
  %v1974 = vpop.f32.mrb[0].mxu0
  %1975 = vmatprep.mubr.f32.mxu0 0.0
  %1976 = vmatmul.mubr.f32.gmra.mrb[0].mxu0 %v1904
  %v1977 = vpop.f32.mrb[0].mxu0
  %v1978 = vadd.f32 %v1899, %v1977
  %v1979 = vpop.f32.mrb[0].mxu0
  %1980 = vdwg.mxu0
  %v1981 = vadd.f32 %v1737, %v1973
  %v1982 = vadd.f32 %v1738, %v1978
  %v1983 = vld [vmem:[%s1 + $0x171] sm:$0x1]
  %v1984 = vld [vmem:[%s1 + $0x172] sm:$0x1]
  %v1985 = vsel %vm144, %v1981, 0.0
  %1986 = vadd.xlane.f32.xlu0 %v1985
  %v1987 = vpop.xlane.xlu0 %1986
  %v1988 = vsel %vm144, %v1982, 0.0
  %1989 = vadd.xlane.f32.xlu0 %v1988
  %v1990 = vpop.xlane.xlu0 %1989
  %v1991 = vmul.f32 %v1987, %v151
  %v1992 = vmul.f32 %v1990, %v151
  %v1993 = vsub.f32 %v1981, %v1991
  %v1994 = vsub.f32 %v1982, %v1992
  %v1995 = vmul.f32 %v1993, %v1993
  %v1996 = vmul.f32 %v1994, %v1994
  %v1997 = vsel %vm144, %v1995, 0.0
  %1998 = vadd.xlane.f32.xlu0 %v1997
  %v1999 = vpop.xlane.xlu0 %1998
  %v2000 = vsel %vm144, %v1996, 0.0
  %2001 = vadd.xlane.f32.xlu0 %v2000
  %v2002 = vpop.xlane.xlu0 %2001
  %v2003 = vmul.f32 %v1999, %v151
  %v2004 = vmul.f32 %v2002, %v151
  %v2005 = vadd.f32 %v2003, 1e-05
  %v2006 = vadd.f32 %v2004, 1e-05
  %v2007 = vrsqrt.pop %v2005
  %v2008 = vrsqrt.pop %v2006
  %v2009 = vmul.f32 %v1993, %v2007
  %v2010 = vmul.f32 %v1994, %v2008
  %v2011 = vlaneseq
  %v2012 = vshrl.u32 %v2011, 7
  %v2013 = vsub.s32 0, %v2012
  %v2014 = vrot.slane %v1983, %v2013
  %v2015 = vmul.f32 %v2009, %v2014
  %v2016 = vmul.f32 %v2010, %v2014
  %v2017 = vlaneseq
  %v2018 = vshrl.u32 %v2017, 7
  %v2019 = vsub.s32 0, %v2018
  %v2020 = vrot.slane %v1984, %v2019
  %v2021 = vadd.f32 %v2015, %v2020
  %v2022 = vadd.f32 %v2016, %v2020
  %2023 = vst.msk [vmem:[%s2] sm:$0xff] %vm144, %v2021
  %2024 = vst.msk [vmem:[%s2 + $0x8] sm:$0xff] %vm144, %v2022
  // Predicated region
  $region10: #{_stage1_impl.2} parent=0 // pred_check
    _
  $region11: #{_stage1_impl.2} parent=0 // pred_check_branch
    %2026 = sbr.rel (0) target = $region13
  $region12: #{_stage1_impl.2} parent=0 // pred_region
    _
  $region13: #{_stage1_impl.2} parent=0 // pred_fallthru
    _
  // Predicated region
  $region14: #{_stage1_impl.2} parent=0 // pred_check
    _
  $region15: #{_stage1_impl.2} parent=0 // pred_check_branch
    %2028 = sbr.rel (0) target = $region17
  $region16: #{_stage1_impl.2} parent=0 // pred_region
    _
  $region17: #{_stage1_impl.2} parent=0 // pred_fallthru
    _

// kernel: _stage1_impl.3
$region0: #{_stage1_impl.3}
  #allocation0 [shape = 'u32[]', space=smem, size = 0x4, offset = 0x4, fixed_abs, tag = 'smem constant byte address 0x4 - core index']
  #allocation1 [shape = 'u32[144,128]{1,0:T(1,128)}', space=vmem, size = 0x12000, scoped, tag = 'internal scratch']
  %s0 = inlined_call_operand.vmem [shape: s32[16,1], index: 0, kind: input, shape index: {}]
  %s1 = inlined_call_operand.vmem [shape: f32[2,8], index: 1, kind: input, shape index: {}]
  %s2 = inlined_call_operand.vmem [shape: f32[16,32], index: 2, kind: input, shape index: {}]
  %s3 = inlined_call_operand.vmem [shape: f32[442,128], index: 3, kind: input, shape index: {}]
  %s4 = inlined_call_operand.vmem [shape: f32[9,128], index: 4, kind: output, shape index: {}]
  %s5 = sld [smem:[#allocation0]]
  $region26: #{_stage1_impl.3} parent=0
    _
  %s7 = ssub.s32 1, %s5
  %s8 = scalar_select 0, %s7, %s5
  // Predicated region
  $region2: #{_stage1_impl.3} parent=0 // pred_check
    _
  $region3: #{_stage1_impl.3} parent=0 // pred_check_branch
    %10 = sbr.rel (0) target = $region5
  $region4: #{_stage1_impl.3} parent=0 // pred_region
    _
  $region5: #{_stage1_impl.3} parent=0 // pred_fallthru
    _
  // Predicated region
  $region6: #{_stage1_impl.3} parent=0 // pred_check
    _
  $region7: #{_stage1_impl.3} parent=0 // pred_check_branch
    %12 = sbr.rel (0) target = $region9
  $region8: #{_stage1_impl.3} parent=0 // pred_region
    _
  $region9: #{_stage1_impl.3} parent=0 // pred_fallthru
    _
  // Predicated region
  $region10: #{_stage1_impl.3} parent=0 // pred_check
    _
  $region11: #{_stage1_impl.3} parent=0 // pred_check_branch
    %14 = sbr.rel (0) target = $region13
  $region12: #{_stage1_impl.3} parent=0 // pred_region
    _
  $region13: #{_stage1_impl.3} parent=0 // pred_fallthru
    _
  // Predicated region
  $region14: #{_stage1_impl.3} parent=0 // pred_check
    _
  $region15: #{_stage1_impl.3} parent=0 // pred_check_branch
    %16 = sbr.rel (0) target = $region17
  $region16: #{_stage1_impl.3} parent=0 // pred_region
    _
  $region17: #{_stage1_impl.3} parent=0 // pred_fallthru
    _
  %v17 = vld [vmem:[%s0] sm:$0xff]
  %v18 = vld [vmem:[%s0 + $0x8] sm:$0xff]
  %v19 = vld [vmem:[%s1] sm:$0x3]
  %v20 = vlaneseq
  %v21 = vand.u32 %v20, 127
  %22 = vset.pattern.permute.xlu0 0
  %23 = vperm.xlu0 %22, %v17
  %v24 = vpop.permute.xlu0 %23
  %25 = vset.pattern.permute.xlu0 0
  %26 = vperm.xlu0 %25, %v18
  %v27 = vpop.permute.xlu0 %26
  %vm28 = vcmp.eq.s32.totalorder %v21, %v24
  %vm29 = vcmp.eq.s32.totalorder %v21, %v27
  %v30 = vsel %vm28, 1.0, 0.0
  %v31 = vsel %vm29, 1.0, 0.0
  %v32 = vld [vmem:[%s3 + $0x40] sm:$0xff]
  %v33 = vld [vmem:[%s3] sm:$0xff]
  %v34 = vld [vmem:[%s3 + $0x8] sm:$0xff]
  %v35 = vld [vmem:[%s3 + $0x10] sm:$0xff]
  %v36 = vld [vmem:[%s3 + $0x18] sm:$0xff]
  %v37 = vld [vmem:[%s3 + $0x20] sm:$0xff]
  %v38 = vld [vmem:[%s3 + $0x28] sm:$0xff]
  %v39 = vld [vmem:[%s3 + $0x30] sm:$0xff]
  %v40 = vld [vmem:[%s3 + $0x38] sm:$0xff]
  %vm41 = vcmask 523264
  %v43 = vsel %vm41, %v30, 0
  %v46 = vsel %vm41, %v31, 0
  %48 = vmatprep.subr.mxu0 0.0
  %49 = vmatpush1.msra.mxu0 %v33
  %50 = vmatprep.subr.mxu0 0.0
  %51 = vmatpush1.msra.mxu0 %v34
  %52 = vmatprep.subr.mxu0 0.0
  %53 = vmatpush1.msra.mxu0 %v35
  %54 = vmatprep.subr.mxu0 0.0
  %55 = vmatpush1.msra.mxu0 %v36
  %56 = vmatprep.subr.mxu0 0.0
  %57 = vmatpush1.msra.mxu0 %v37
  %58 = vmatprep.subr.mxu0 0.0
  %59 = vmatpush1.msra.mxu0 %v38
  %60 = vmatprep.subr.mxu0 0.0
  %61 = vmatpush1.msra.mxu0 %v39
  %62 = vmatprep.subr.mxu0 0.0
  %63 = vmatpush1.msra.mxu0 %v40
  %64 = vmatprep.subr.mxu0 0.0
  %65 = vmatpush1.msra.mxu0 0.0
  %66 = vmatprep.subr.mxu0 0.0
  %67 = vmatpush1.msra.mxu0 0.0
  %68 = vmatprep.subr.mxu0 0.0
  %69 = vmatpush1.msra.mxu0 0.0
  %70 = vmatprep.subr.mxu0 0.0
  %71 = vmatpush1.msra.mxu0 0.0
  %72 = vmatprep.subr.mxu0 0.0
  %73 = vmatpush1.msra.mxu0 0.0
  %74 = vmatprep.subr.mxu0 0.0
  %75 = vmatpush1.msra.mxu0 0.0
  %76 = vmatprep.subr.mxu0 0.0
  %77 = vmatpush1.msra.mxu0 0.0
  %78 = vmatprep.subr.mxu0 0.0
  %79 = vmatpush1.msra.mxu0 0.0
  %80 = vmatprep.subr.mxu0 0.0
  %81 = vmatpush1.msra.mxu0 0.0
  %82 = vmatprep.subr.mxu0 0.0
  %83 = vmatpush1.msra.mxu0 0.0
  %84 = vmatprep.subr.mxu0 0.0
  %85 = vmatpush1.msra.mxu0 0.0
  %86 = vmatprep.subr.mxu0 0.0
  %87 = vmatpush1.msra.mxu0 0.0
  %88 = vmatprep.subr.mxu0 0.0
  %89 = vmatpush1.msra.mxu0 0.0
  %90 = vmatprep.subr.mxu0 0.0
  %91 = vmatpush1.msra.mxu0 0.0
  %92 = vmatprep.subr.mxu0 0.0
  %93 = vmatpush1.msra.mxu0 0.0
  %94 = vmatprep.subr.mxu0 0.0
  %95 = vmatpush1.msra.mxu0 0.0
  %96 = vmatprep.subr.mxu0 0.0
  %97 = vmatpush1.msra.mxu0 0.0
  %98 = vmatprep.subr.mxu0 0.0
  %99 = vmatpush1.msra.mxu0 0.0
  %100 = vmatprep.subr.mxu0 0.0
  %101 = vmatpush1.msra.mxu0 0.0
  %102 = vmatprep.subr.mxu0 0.0
  %103 = vmatpush1.msra.mxu0 0.0
  %104 = vmatprep.subr.mxu0 0.0
  %105 = vmatpush1.msra.mxu0 0.0
  %106 = vmatprep.subr.mxu0 0.0
  %107 = vmatpush1.msra.mxu0 0.0
  %108 = vmatprep.subr.mxu0 0.0
  %109 = vmatpush1.msra.mxu0 0.0
  %110 = vmatprep.subr.mxu0 0.0
  %111 = vmatpush1.msra.mxu0 0.0
  %112 = vmatprep.mubr.f32.mxu0 0.0
  %113 = vmatmul.mubr.f32.gmra.mrb[0].mxu0 %v43
  %v114 = vpop.f32.mrb[0].mxu0
  %v115 = vadd.f32 %v32, %v114
  %v116 = vpop.f32.mrb[0].mxu0
  %117 = vmatprep.mubr.f32.mxu0 0.0
  %118 = vmatmul.mubr.f32.gmra.mrb[0].mxu0 %v46
  %v119 = vpop.f32.mrb[0].mxu0
  %v120 = vadd.f32 %v32, %v119
  %v121 = vpop.f32.mrb[0].mxu0
  %122 = vdwg.mxu0
  %v123 = vld [vmem:[%s3 + $0x48] sm:$0x1]
  %v124 = vld [vmem:[%s3 + $0x49] sm:$0x1]
  %vm125 = vcmask 261120
  %v126 = vsel %vm125, %v115, 0.0
  %127 = vadd.xlane.f32.xlu0 %v126
  %v128 = vpop.xlane.xlu0 %127
  %v129 = vsel %vm125, %v120, 0.0
  %130 = vadd.xlane.f32.xlu0 %v129
  %v131 = vpop.xlane.xlu0 %130
  %v132 = vrcp.pop 32.0
  %v133 = vmul.f32 %v128, %v132
  %v134 = vmul.f32 %v131, %v132
  %v135 = vsub.f32 %v115, %v133
  %v136 = vsub.f32 %v120, %v134
  %v137 = vmul.f32 %v135, %v135
  %v138 = vmul.f32 %v136, %v136
  %v139 = vsel %vm125, %v137, 0.0
  %140 = vadd.xlane.f32.xlu0 %v139
  %v141 = vpop.xlane.xlu0 %140
  %v142 = vsel %vm125, %v138, 0.0
  %143 = vadd.xlane.f32.xlu0 %v142
  %v144 = vpop.xlane.xlu0 %143
  %v145 = vmul.f32 %v141, %v132
  %v146 = vmul.f32 %v144, %v132
  %v147 = vadd.f32 %v145, 1e-12
  %v148 = vadd.f32 %v146, 1e-12
  %v149 = vrsqrt.pop %v147
  %v150 = vrsqrt.pop %v148
  %v151 = vmul.f32 %v135, %v149
  %v152 = vmul.f32 %v136, %v150
  %v153 = vlaneseq
  %v154 = vshrl.u32 %v153, 7
  %v155 = vsub.s32 0, %v154
  %v156 = vrot.slane %v123, %v155
  %v157 = vmul.f32 %v151, %v156
  %v158 = vmul.f32 %v152, %v156
  %v159 = vlaneseq
  %v160 = vshrl.u32 %v159, 7
  %v161 = vsub.s32 0, %v160
  %v162 = vrot.slane %v124, %v161
  %v163 = vadd.f32 %v157, %v162
  %v164 = vadd.f32 %v158, %v162
  %v165 = vld [vmem:[%s3 + $0x4a] sm:$0xff]
  %v166 = vld [vmem:[%s3 + $0x52] sm:$0xff]
  %v167 = vld [vmem:[%s3 + $0x5a] sm:$0xff]
  %v168 = vld [vmem:[%s3 + $0x62] sm:$0xff]
  %v169 = vld [vmem:[%s3 + $0x6a] sm:$0x1]
  %v170 = vlaneseq
  %v171 = vshrl.u32 %v170, 7
  %v172 = vsub.s32 0, %v171
  %v173 = vrot.slane %v169, %v172
  %v175 = vsel %vm125, %v163, 0
  %v178 = vsel %vm125, %v164, 0
  %180 = vmatprep.subr.mxu0 0.0
  %181 = vmatpush1.msra.mxu0 %v165
  %182 = vmatprep.subr.mxu0 0.0
  %183 = vmatpush1.msra.mxu0 %v166
  %184 = vmatprep.subr.mxu0 0.0
  %185 = vmatpush1.msra.mxu0 %v167
  %186 = vmatprep.subr.mxu0 0.0
  %187 = vmatpush1.msra.mxu0 %v168
  %188 = vmatprep.subr.mxu0 0.0
  %189 = vmatpush1.msra.mxu0 0.0
  %190 = vmatprep.subr.mxu0 0.0
  %191 = vmatpush1.msra.mxu0 0.0
  %192 = vmatprep.subr.mxu0 0.0
  %193 = vmatpush1.msra.mxu0 0.0
  %194 = vmatprep.subr.mxu0 0.0
  %195 = vmatpush1.msra.mxu0 0.0
  %196 = vmatprep.subr.mxu0 0.0
  %197 = vmatpush1.msra.mxu0 0.0
  %198 = vmatprep.subr.mxu0 0.0
  %199 = vmatpush1.msra.mxu0 0.0
  %200 = vmatprep.subr.mxu0 0.0
  %201 = vmatpush1.msra.mxu0 0.0
  %202 = vmatprep.subr.mxu0 0.0
  %203 = vmatpush1.msra.mxu0 0.0
  %204 = vmatprep.subr.mxu0 0.0
  %205 = vmatpush1.msra.mxu0 0.0
  %206 = vmatprep.subr.mxu0 0.0
  %207 = vmatpush1.msra.mxu0 0.0
  %208 = vmatprep.subr.mxu0 0.0
  %209 = vmatpush1.msra.mxu0 0.0
  %210 = vmatprep.subr.mxu0 0.0
  %211 = vmatpush1.msra.mxu0 0.0
  %212 = vmatprep.subr.mxu0 0.0
  %213 = vmatpush1.msra.mxu0 0.0
  %214 = vmatprep.subr.mxu0 0.0
  %215 = vmatpush1.msra.mxu0 0.0
  %216 = vmatprep.subr.mxu0 0.0
  %217 = vmatpush1.msra.mxu0 0.0
  %218 = vmatprep.subr.mxu0 0.0
  %219 = vmatpush1.msra.mxu0 0.0
  %220 = vmatprep.subr.mxu0 0.0
  %221 = vmatpush1.msra.mxu0 0.0
  %222 = vmatprep.subr.mxu0 0.0
  %223 = vmatpush1.msra.mxu0 0.0
  %224 = vmatprep.subr.mxu0 0.0
  %225 = vmatpush1.msra.mxu0 0.0
  %226 = vmatprep.subr.mxu0 0.0
  %227 = vmatpush1.msra.mxu0 0.0
  %228 = vmatprep.subr.mxu0 0.0
  %229 = vmatpush1.msra.mxu0 0.0
  %230 = vmatprep.subr.mxu0 0.0
  %231 = vmatpush1.msra.mxu0 0.0
  %232 = vmatprep.subr.mxu0 0.0
  %233 = vmatpush1.msra.mxu0 0.0
  %234 = vmatprep.subr.mxu0 0.0
  %235 = vmatpush1.msra.mxu0 0.0
  %236 = vmatprep.subr.mxu0 0.0
  %237 = vmatpush1.msra.mxu0 0.0
  %238 = vmatprep.subr.mxu0 0.0
  %239 = vmatpush1.msra.mxu0 0.0
  %240 = vmatprep.subr.mxu0 0.0
  %241 = vmatpush1.msra.mxu0 0.0
  %242 = vmatprep.subr.mxu0 0.0
  %243 = vmatpush1.msra.mxu0 0.0
  %244 = vmatprep.mubr.f32.mxu0 0.0
  %245 = vmatmul.mubr.f32.gmra.mrb[0].mxu0 %v175
  %v246 = vpop.f32.mrb[0].mxu0
  %v247 = vadd.f32 %v173, %v246
  %v248 = vpop.f32.mrb[0].mxu0
  %249 = vmatprep.mubr.f32.mxu0 0.0
  %250 = vmatmul.mubr.f32.gmra.mrb[0].mxu0 %v178
  %v251 = vpop.f32.mrb[0].mxu0
  %v252 = vadd.f32 %v173, %v251
  %v253 = vpop.f32.mrb[0].mxu0
  %254 = vdwg.mxu0
  %v255 = vsub.f32 1.0, %v19
  %v256 = vmul.f32 %v255, -1e+09
  %258 = vrot.lane.b32.xlu0 %v247, 96
  %v259 = vpop.permute.xlu0 %258
  %vm260 = vcmask 64512
  %v261 = vsel %vm260, %v247, 0
  %v263 = vsel %vm260, %v259, 0
  %265 = vmatprep.subr.mxu0 0.0
  %266 = vmatpush1.xpose.msra.mxu0 %v263
  %267 = vmatprep.subr.mxu0 0.0
  %268 = vmatpush1.xpose.msra.mxu0 0.0
  %269 = vmatprep.subr.mxu0 0.0
  %270 = vmatpush1.xpose.msra.mxu0 0.0
  %271 = vmatprep.subr.mxu0 0.0
  %272 = vmatpush1.xpose.msra.mxu0 0.0
  %273 = vmatprep.subr.mxu0 0.0
  %274 = vmatpush1.xpose.msra.mxu0 0.0
  %275 = vmatprep.subr.mxu0 0.0
  %276 = vmatpush1.xpose.msra.mxu0 0.0
  %277 = vmatprep.subr.mxu0 0.0
  %278 = vmatpush1.xpose.msra.mxu0 0.0
  %279 = vmatprep.subr.mxu0 0.0
  %280 = vmatpush1.xpose.msra.mxu0 0.0
  %281 = vmatprep.subr.mxu0 0.0
  %282 = vmatpush1.xpose.msra.mxu0 0.0
  %283 = vmatprep.subr.mxu0 0.0
  %284 = vmatpush1.xpose.msra.mxu0 0.0
  %285 = vmatprep.subr.mxu0 0.0
  %286 = vmatpush1.xpose.msra.mxu0 0.0
  %287 = vmatprep.subr.mxu0 0.0
  %288 = vmatpush1.xpose.msra.mxu0 0.0
  %289 = vmatprep.subr.mxu0 0.0
  %290 = vmatpush1.xpose.msra.mxu0 0.0
  %291 = vmatprep.subr.mxu0 0.0
  %292 = vmatpush1.xpose.msra.mxu0 0.0
  %293 = vmatprep.subr.mxu0 0.0
  %294 = vmatpush1.xpose.msra.mxu0 0.0
  %295 = vmatprep.subr.mxu0 0.0
  %296 = vmatpush1.xpose.msra.mxu0 0.0
  %297 = vmatprep.subr.mxu0 0.0
  %298 = vmatpush1.xpose.msra.mxu0 0.0
  %299 = vmatprep.subr.mxu0 0.0
  %300 = vmatpush1.xpose.msra.mxu0 0.0
  %301 = vmatprep.subr.mxu0 0.0
  %302 = vmatpush1.xpose.msra.mxu0 0.0
  %303 = vmatprep.subr.mxu0 0.0
  %304 = vmatpush1.xpose.msra.mxu0 0.0
  %305 = vmatprep.subr.mxu0 0.0
  %306 = vmatpush1.xpose.msra.mxu0 0.0
  %307 = vmatprep.subr.mxu0 0.0
  %308 = vmatpush1.xpose.msra.mxu0 0.0
  %309 = vmatprep.subr.mxu0 0.0
  %310 = vmatpush1.xpose.msra.mxu0 0.0
  %311 = vmatprep.subr.mxu0 0.0
  %312 = vmatpush1.xpose.msra.mxu0 0.0
  %313 = vmatprep.subr.mxu0 0.0
  %314 = vmatpush1.xpose.msra.mxu0 0.0
  %315 = vmatprep.subr.mxu0 0.0
  %316 = vmatpush1.xpose.msra.mxu0 0.0
  %317 = vmatprep.subr.mxu0 0.0
  %318 = vmatpush1.xpose.msra.mxu0 0.0
  %319 = vmatprep.subr.mxu0 0.0
  %320 = vmatpush1.xpose.msra.mxu0 0.0
  %321 = vmatprep.subr.mxu0 0.0
  %322 = vmatpush1.xpose.msra.mxu0 0.0
  %323 = vmatprep.subr.mxu0 0.0
  %324 = vmatpush1.xpose.msra.mxu0 0.0
  %325 = vmatprep.subr.mxu0 0.0
  %326 = vmatpush1.xpose.msra.mxu0 0.0
  %327 = vmatprep.subr.mxu0 0.0
  %328 = vmatpush1.xpose.msra.mxu0 0.0
  %329 = vmatprep.mubr.f32.mxu0 0.0
  %330 = vmatmul.mubr.f32.gmra.mrb[0].mxu0 %v261
  %v331 = vpop.f32.mrb[0].mxu0
  %v332 = vadd.f32 0.0, %v331
  %v333 = vpop.f32.mrb[0].mxu0
  %334 = vdwg.mxu0
  %v335 = vmul.f32 %v332, 0.35355338
  %v336 = vlaneseq
  %v337 = vshrl.u32 %v336, 7
  %v338 = vsub.s32 0, %v337
  %v339 = vrot.slane %v256, %v338
  %v340 = vadd.f32 %v335, %v339
  %v341 = vsel %vm260, %v340, -inf
  %342 = vmax.xlane.f32.xlu0 %v341
  %v343 = vpop.xlane.xlu0 %342
  %v344 = vsub.f32 %v340, %v343
  %v345 = vmul.f32 %v344, 1.442695
  %v346 = vpow.pop %v345
  %v347 = vsel %vm260, %v346, 0.0
  %348 = vadd.xlane.f32.xlu0 %v347
  %v349 = vpop.xlane.xlu0 %348
  %v350 = vrcp.pop %v349
  %v351 = vmul.f32 %v346, %v350
  %352 = vrot.lane.b32.xlu0 %v247, 64
  %v353 = vpop.permute.xlu0 %352
  %v356 = vsel %vm260, %v351, 0
  %358 = vmatprep.subr.mxu0 0.0
  %359 = vmatpush1.msra.mxu0 %v353
  %360 = vmatprep.subr.mxu0 0.0
  %361 = vmatpush1.msra.mxu0 0.0
  %362 = vmatprep.subr.mxu0 0.0
  %363 = vmatpush1.msra.mxu0 0.0
  %364 = vmatprep.subr.mxu0 0.0
  %365 = vmatpush1.msra.mxu0 0.0
  %366 = vmatprep.subr.mxu0 0.0
  %367 = vmatpush1.msra.mxu0 0.0
  %368 = vmatprep.subr.mxu0 0.0
  %369 = vmatpush1.msra.mxu0 0.0
  %370 = vmatprep.subr.mxu0 0.0
  %371 = vmatpush1.msra.mxu0 0.0
  %372 = vmatprep.subr.mxu0 0.0
  %373 = vmatpush1.msra.mxu0 0.0
  %374 = vmatprep.subr.mxu0 0.0
  %375 = vmatpush1.msra.mxu0 0.0
  %376 = vmatprep.subr.mxu0 0.0
  %377 = vmatpush1.msra.mxu0 0.0
  %378 = vmatprep.subr.mxu0 0.0
  %379 = vmatpush1.msra.mxu0 0.0
  %380 = vmatprep.subr.mxu0 0.0
  %381 = vmatpush1.msra.mxu0 0.0
  %382 = vmatprep.subr.mxu0 0.0
  %383 = vmatpush1.msra.mxu0 0.0
  %384 = vmatprep.subr.mxu0 0.0
  %385 = vmatpush1.msra.mxu0 0.0
  %386 = vmatprep.subr.mxu0 0.0
  %387 = vmatpush1.msra.mxu0 0.0
  %388 = vmatprep.subr.mxu0 0.0
  %389 = vmatpush1.msra.mxu0 0.0
  %390 = vmatprep.subr.mxu0 0.0
  %391 = vmatpush1.msra.mxu0 0.0
  %392 = vmatprep.subr.mxu0 0.0
  %393 = vmatpush1.msra.mxu0 0.0
  %394 = vmatprep.subr.mxu0 0.0
  %395 = vmatpush1.msra.mxu0 0.0
  %396 = vmatprep.subr.mxu0 0.0
  %397 = vmatpush1.msra.mxu0 0.0
  %398 = vmatprep.subr.mxu0 0.0
  %399 = vmatpush1.msra.mxu0 0.0
  %400 = vmatprep.subr.mxu0 0.0
  %401 = vmatpush1.msra.mxu0 0.0
  %402 = vmatprep.subr.mxu0 0.0
  %403 = vmatpush1.msra.mxu0 0.0
  %404 = vmatprep.subr.mxu0 0.0
  %405 = vmatpush1.msra.mxu0 0.0
  %406 = vmatprep.subr.mxu0 0.0
  %407 = vmatpush1.msra.mxu0 0.0
  %408 = vmatprep.subr.mxu0 0.0
  %409 = vmatpush1.msra.mxu0 0.0
  %410 = vmatprep.subr.mxu0 0.0
  %411 = vmatpush1.msra.mxu0 0.0
  %412 = vmatprep.subr.mxu0 0.0
  %413 = vmatpush1.msra.mxu0 0.0
  %414 = vmatprep.subr.mxu0 0.0
  %415 = vmatpush1.msra.mxu0 0.0
  %416 = vmatprep.subr.mxu0 0.0
  %417 = vmatpush1.msra.mxu0 0.0
  %418 = vmatprep.subr.mxu0 0.0
  %419 = vmatpush1.msra.mxu0 0.0
  %420 = vmatprep.subr.mxu0 0.0
  %421 = vmatpush1.msra.mxu0 0.0
  %422 = vmatprep.mubr.f32.mxu0 0.0
  %423 = vmatmul.mubr.f32.gmra.mrb[0].mxu0 %v356
  %v424 = vpop.f32.mrb[0].mxu0
  %v425 = vadd.f32 0.0, %v424
  %v426 = vpop.f32.mrb[0].mxu0
  %427 = vdwg.mxu0
  %428 = vrot.lane.b32.xlu0 %v247, 120
  %v429 = vpop.permute.xlu0 %428
  %430 = vrot.lane.b32.xlu0 %v247, 88
  %v431 = vpop.permute.xlu0 %430
  %v432 = vsel %vm260, %v429, 0
  %v434 = vsel %vm260, %v431, 0
  %436 = vmatprep.subr.mxu0 0.0
  %437 = vmatpush1.xpose.msra.mxu0 %v434
  %438 = vmatprep.subr.mxu0 0.0
  %439 = vmatpush1.xpose.msra.mxu0 0.0
  %440 = vmatprep.subr.mxu0 0.0
  %441 = vmatpush1.xpose.msra.mxu0 0.0
  %442 = vmatprep.subr.mxu0 0.0
  %443 = vmatpush1.xpose.msra.mxu0 0.0
  %444 = vmatprep.subr.mxu0 0.0
  %445 = vmatpush1.xpose.msra.mxu0 0.0
  %446 = vmatprep.subr.mxu0 0.0
  %447 = vmatpush1.xpose.msra.mxu0 0.0
  %448 = vmatprep.subr.mxu0 0.0
  %449 = vmatpush1.xpose.msra.mxu0 0.0
  %450 = vmatprep.subr.mxu0 0.0
  %451 = vmatpush1.xpose.msra.mxu0 0.0
  %452 = vmatprep.subr.mxu0 0.0
  %453 = vmatpush1.xpose.msra.mxu0 0.0
  %454 = vmatprep.subr.mxu0 0.0
  %455 = vmatpush1.xpose.msra.mxu0 0.0
  %456 = vmatprep.subr.mxu0 0.0
  %457 = vmatpush1.xpose.msra.mxu0 0.0
  %458 = vmatprep.subr.mxu0 0.0
  %459 = vmatpush1.xpose.msra.mxu0 0.0
  %460 = vmatprep.subr.mxu0 0.0
  %461 = vmatpush1.xpose.msra.mxu0 0.0
  %462 = vmatprep.subr.mxu0 0.0
  %463 = vmatpush1.xpose.msra.mxu0 0.0
  %464 = vmatprep.subr.mxu0 0.0
  %465 = vmatpush1.xpose.msra.mxu0 0.0
  %466 = vmatprep.subr.mxu0 0.0
  %467 = vmatpush1.xpose.msra.mxu0 0.0
  %468 = vmatprep.subr.mxu0 0.0
  %469 = vmatpush1.xpose.msra.mxu0 0.0
  %470 = vmatprep.subr.mxu0 0.0
  %471 = vmatpush1.xpose.msra.mxu0 0.0
  %472 = vmatprep.subr.mxu0 0.0
  %473 = vmatpush1.xpose.msra.mxu0 0.0
  %474 = vmatprep.subr.mxu0 0.0
  %475 = vmatpush1.xpose.msra.mxu0 0.0
  %476 = vmatprep.subr.mxu0 0.0
  %477 = vmatpush1.xpose.msra.mxu0 0.0
  %478 = vmatprep.subr.mxu0 0.0
  %479 = vmatpush1.xpose.msra.mxu0 0.0
  %480 = vmatprep.subr.mxu0 0.0
  %481 = vmatpush1.xpose.msra.mxu0 0.0
  %482 = vmatprep.subr.mxu0 0.0
  %483 = vmatpush1.xpose.msra.mxu0 0.0
  %484 = vmatprep.subr.mxu0 0.0
  %485 = vmatpush1.xpose.msra.mxu0 0.0
  %486 = vmatprep.subr.mxu0 0.0
  %487 = vmatpush1.xpose.msra.mxu0 0.0
  %488 = vmatprep.subr.mxu0 0.0
  %489 = vmatpush1.xpose.msra.mxu0 0.0
  %490 = vmatprep.subr.mxu0 0.0
  %491 = vmatpush1.xpose.msra.mxu0 0.0
  %492 = vmatprep.subr.mxu0 0.0
  %493 = vmatpush1.xpose.msra.mxu0 0.0
  %494 = vmatprep.subr.mxu0 0.0
  %495 = vmatpush1.xpose.msra.mxu0 0.0
  %496 = vmatprep.subr.mxu0 0.0
  %497 = vmatpush1.xpose.msra.mxu0 0.0
  %498 = vmatprep.subr.mxu0 0.0
  %499 = vmatpush1.xpose.msra.mxu0 0.0
  %500 = vmatprep.mubr.f32.mxu0 0.0
  %501 = vmatmul.mubr.f32.gmra.mrb[0].mxu0 %v432
  %v502 = vpop.f32.mrb[0].mxu0
  %v503 = vadd.f32 0.0, %v502
  %v504 = vpop.f32.mrb[0].mxu0
  %505 = vdwg.mxu0
  %v506 = vmul.f32 %v503, 0.35355338
  %v507 = vadd.f32 %v506, %v339
  %v508 = vsel %vm260, %v507, -inf
  %509 = vmax.xlane.f32.xlu0 %v508
  %v510 = vpop.xlane.xlu0 %509
  %v511 = vsub.f32 %v507, %v510
  %v512 = vmul.f32 %v511, 1.442695
  %v513 = vpow.pop %v512
  %v514 = vsel %vm260, %v513, 0.0
  %515 = vadd.xlane.f32.xlu0 %v514
  %v516 = vpop.xlane.xlu0 %515
  %v517 = vrcp.pop %v516
  %v518 = vmul.f32 %v513, %v517
  %519 = vrot.lane.b32.xlu0 %v247, 56
  %v520 = vpop.permute.xlu0 %519
  %v523 = vsel %vm260, %v518, 0
  %525 = vmatprep.subr.mxu0 0.0
  %526 = vmatpush1.msra.mxu0 %v520
  %527 = vmatprep.subr.mxu0 0.0
  %528 = vmatpush1.msra.mxu0 0.0
  %529 = vmatprep.subr.mxu0 0.0
  %530 = vmatpush1.msra.mxu0 0.0
  %531 = vmatprep.subr.mxu0 0.0
  %532 = vmatpush1.msra.mxu0 0.0
  %533 = vmatprep.subr.mxu0 0.0
  %534 = vmatpush1.msra.mxu0 0.0
  %535 = vmatprep.subr.mxu0 0.0
  %536 = vmatpush1.msra.mxu0 0.0
  %537 = vmatprep.subr.mxu0 0.0
  %538 = vmatpush1.msra.mxu0 0.0
  %539 = vmatprep.subr.mxu0 0.0
  %540 = vmatpush1.msra.mxu0 0.0
  %541 = vmatprep.subr.mxu0 0.0
  %542 = vmatpush1.msra.mxu0 0.0
  %543 = vmatprep.subr.mxu0 0.0
  %544 = vmatpush1.msra.mxu0 0.0
  %545 = vmatprep.subr.mxu0 0.0
  %546 = vmatpush1.msra.mxu0 0.0
  %547 = vmatprep.subr.mxu0 0.0
  %548 = vmatpush1.msra.mxu0 0.0
  %549 = vmatprep.subr.mxu0 0.0
  %550 = vmatpush1.msra.mxu0 0.0
  %551 = vmatprep.subr.mxu0 0.0
  %552 = vmatpush1.msra.mxu0 0.0
  %553 = vmatprep.subr.mxu0 0.0
  %554 = vmatpush1.msra.mxu0 0.0
  %555 = vmatprep.subr.mxu0 0.0
  %556 = vmatpush1.msra.mxu0 0.0
  %557 = vmatprep.subr.mxu0 0.0
  %558 = vmatpush1.msra.mxu0 0.0
  %559 = vmatprep.subr.mxu0 0.0
  %560 = vmatpush1.msra.mxu0 0.0
  %561 = vmatprep.subr.mxu0 0.0
  %562 = vmatpush1.msra.mxu0 0.0
  %563 = vmatprep.subr.mxu0 0.0
  %564 = vmatpush1.msra.mxu0 0.0
  %565 = vmatprep.subr.mxu0 0.0
  %566 = vmatpush1.msra.mxu0 0.0
  %567 = vmatprep.subr.mxu0 0.0
  %568 = vmatpush1.msra.mxu0 0.0
  %569 = vmatprep.subr.mxu0 0.0
  %570 = vmatpush1.msra.mxu0 0.0
  %571 = vmatprep.subr.mxu0 0.0
  %572 = vmatpush1.msra.mxu0 0.0
  %573 = vmatprep.subr.mxu0 0.0
  %574 = vmatpush1.msra.mxu0 0.0
  %575 = vmatprep.subr.mxu0 0.0
  %576 = vmatpush1.msra.mxu0 0.0
  %577 = vmatprep.subr.mxu0 0.0
  %578 = vmatpush1.msra.mxu0 0.0
  %579 = vmatprep.subr.mxu0 0.0
  %580 = vmatpush1.msra.mxu0 0.0
  %581 = vmatprep.subr.mxu0 0.0
  %582 = vmatpush1.msra.mxu0 0.0
  %583 = vmatprep.subr.mxu0 0.0
  %584 = vmatpush1.msra.mxu0 0.0
  %585 = vmatprep.subr.mxu0 0.0
  %586 = vmatpush1.msra.mxu0 0.0
  %587 = vmatprep.subr.mxu0 0.0
  %588 = vmatpush1.msra.mxu0 0.0
  %589 = vmatprep.mubr.f32.mxu0 0.0
  %590 = vmatmul.mubr.f32.gmra.mrb[0].mxu0 %v523
  %v591 = vpop.f32.mrb[0].mxu0
  %v592 = vadd.f32 0.0, %v591
  %v593 = vpop.f32.mrb[0].mxu0
  %594 = vdwg.mxu0
  %595 = vrot.lane.b32.xlu0 %v247, 112
  %v596 = vpop.permute.xlu0 %595
  %597 = vrot.lane.b32.xlu0 %v247, 80
  %v598 = vpop.permute.xlu0 %597
  %v599 = vsel %vm260, %v596, 0
  %v601 = vsel %vm260, %v598, 0
  %603 = vmatprep.subr.mxu0 0.0
  %604 = vmatpush1.xpose.msra.mxu0 %v601
  %605 = vmatprep.subr.mxu0 0.0
  %606 = vmatpush1.xpose.msra.mxu0 0.0
  %607 = vmatprep.subr.mxu0 0.0
  %608 = vmatpush1.xpose.msra.mxu0 0.0
  %609 = vmatprep.subr.mxu0 0.0
  %610 = vmatpush1.xpose.msra.mxu0 0.0
  %611 = vmatprep.subr.mxu0 0.0
  %612 = vmatpush1.xpose.msra.mxu0 0.0
  %613 = vmatprep.subr.mxu0 0.0
  %614 = vmatpush1.xpose.msra.mxu0 0.0
  %615 = vmatprep.subr.mxu0 0.0
  %616 = vmatpush1.xpose.msra.mxu0 0.0
  %617 = vmatprep.subr.mxu0 0.0
  %618 = vmatpush1.xpose.msra.mxu0 0.0
  %619 = vmatprep.subr.mxu0 0.0
  %620 = vmatpush1.xpose.msra.mxu0 0.0
  %621 = vmatprep.subr.mxu0 0.0
  %622 = vmatpush1.xpose.msra.mxu0 0.0
  %623 = vmatprep.subr.mxu0 0.0
  %624 = vmatpush1.xpose.msra.mxu0 0.0
  %625 = vmatprep.subr.mxu0 0.0
  %626 = vmatpush1.xpose.msra.mxu0 0.0
  %627 = vmatprep.subr.mxu0 0.0
  %628 = vmatpush1.xpose.msra.mxu0 0.0
  %629 = vmatprep.subr.mxu0 0.0
  %630 = vmatpush1.xpose.msra.mxu0 0.0
  %631 = vmatprep.subr.mxu0 0.0
  %632 = vmatpush1.xpose.msra.mxu0 0.0
  %633 = vmatprep.subr.mxu0 0.0
  %634 = vmatpush1.xpose.msra.mxu0 0.0
  %635 = vmatprep.subr.mxu0 0.0
  %636 = vmatpush1.xpose.msra.mxu0 0.0
  %637 = vmatprep.subr.mxu0 0.0
  %638 = vmatpush1.xpose.msra.mxu0 0.0
  %639 = vmatprep.subr.mxu0 0.0
  %640 = vmatpush1.xpose.msra.mxu0 0.0
  %641 = vmatprep.subr.mxu0 0.0
  %642 = vmatpush1.xpose.msra.mxu0 0.0
  %643 = vmatprep.subr.mxu0 0.0
  %644 = vmatpush1.xpose.msra.mxu0 0.0
  %645 = vmatprep.subr.mxu0 0.0
  %646 = vmatpush1.xpose.msra.mxu0 0.0
  %647 = vmatprep.subr.mxu0 0.0
  %648 = vmatpush1.xpose.msra.mxu0 0.0
  %649 = vmatprep.subr.mxu0 0.0
  %650 = vmatpush1.xpose.msra.mxu0 0.0
  %651 = vmatprep.subr.mxu0 0.0
  %652 = vmatpush1.xpose.msra.mxu0 0.0
  %653 = vmatprep.subr.mxu0 0.0
  %654 = vmatpush1.xpose.msra.mxu0 0.0
  %655 = vmatprep.subr.mxu0 0.0
  %656 = vmatpush1.xpose.msra.mxu0 0.0
  %657 = vmatprep.subr.mxu0 0.0
  %658 = vmatpush1.xpose.msra.mxu0 0.0
  %659 = vmatprep.subr.mxu0 0.0
  %660 = vmatpush1.xpose.msra.mxu0 0.0
  %661 = vmatprep.subr.mxu0 0.0
  %662 = vmatpush1.xpose.msra.mxu0 0.0
  %663 = vmatprep.subr.mxu0 0.0
  %664 = vmatpush1.xpose.msra.mxu0 0.0
  %665 = vmatprep.subr.mxu0 0.0
  %666 = vmatpush1.xpose.msra.mxu0 0.0
  %667 = vmatprep.mubr.f32.mxu0 0.0
  %668 = vmatmul.mubr.f32.gmra.mrb[0].mxu0 %v599
  %v669 = vpop.f32.mrb[0].mxu0
  %v670 = vadd.f32 0.0, %v669
  %v671 = vpop.f32.mrb[0].mxu0
  %672 = vdwg.mxu0
  %v673 = vmul.f32 %v670, 0.35355338
  %v674 = vadd.f32 %v673, %v339
  %v675 = vsel %vm260, %v674, -inf
  %676 = vmax.xlane.f32.xlu0 %v675
  %v677 = vpop.xlane.xlu0 %676
  %v678 = vsub.f32 %v674, %v677
  %v679 = vmul.f32 %v678, 1.442695
  %v680 = vpow.pop %v679
  %v681 = vsel %vm260, %v680, 0.0
  %682 = vadd.xlane.f32.xlu0 %v681
  %v683 = vpop.xlane.xlu0 %682
  %v684 = vrcp.pop %v683
  %v685 = vmul.f32 %v680, %v684
  %686 = vrot.lane.b32.xlu0 %v247, 48
  %v687 = vpop.permute.xlu0 %686
  %v690 = vsel %vm260, %v685, 0
  %692 = vmatprep.subr.mxu0 0.0
  %693 = vmatpush1.msra.mxu0 %v687
  %694 = vmatprep.subr.mxu0 0.0
  %695 = vmatpush1.msra.mxu0 0.0
  %696 = vmatprep.subr.mxu0 0.0
  %697 = vmatpush1.msra.mxu0 0.0
  %698 = vmatprep.subr.mxu0 0.0
  %699 = vmatpush1.msra.mxu0 0.0
  %700 = vmatprep.subr.mxu0 0.0
  %701 = vmatpush1.msra.mxu0 0.0
  %702 = vmatprep.subr.mxu0 0.0
  %703 = vmatpush1.msra.mxu0 0.0
  %704 = vmatprep.subr.mxu0 0.0
  %705 = vmatpush1.msra.mxu0 0.0
  %706 = vmatprep.subr.mxu0 0.0
  %707 = vmatpush1.msra.mxu0 0.0
  %708 = vmatprep.subr.mxu0 0.0
  %709 = vmatpush1.msra.mxu0 0.0
  %710 = vmatprep.subr.mxu0 0.0
  %711 = vmatpush1.msra.mxu0 0.0
  %712 = vmatprep.subr.mxu0 0.0
  %713 = vmatpush1.msra.mxu0 0.0
  %714 = vmatprep.subr.mxu0 0.0
  %715 = vmatpush1.msra.mxu0 0.0
  %716 = vmatprep.subr.mxu0 0.0
  %717 = vmatpush1.msra.mxu0 0.0
  %718 = vmatprep.subr.mxu0 0.0
  %719 = vmatpush1.msra.mxu0 0.0
  %720 = vmatprep.subr.mxu0 0.0
  %721 = vmatpush1.msra.mxu0 0.0
  %722 = vmatprep.subr.mxu0 0.0
  %723 = vmatpush1.msra.mxu0 0.0
  %724 = vmatprep.subr.mxu0 0.0
  %725 = vmatpush1.msra.mxu0 0.0
  %726 = vmatprep.subr.mxu0 0.0
  %727 = vmatpush1.msra.mxu0 0.0
  %728 = vmatprep.subr.mxu0 0.0
  %729 = vmatpush1.msra.mxu0 0.0
  %730 = vmatprep.subr.mxu0 0.0
  %731 = vmatpush1.msra.mxu0 0.0
  %732 = vmatprep.subr.mxu0 0.0
  %733 = vmatpush1.msra.mxu0 0.0
  %734 = vmatprep.subr.mxu0 0.0
  %735 = vmatpush1.msra.mxu0 0.0
  %736 = vmatprep.subr.mxu0 0.0
  %737 = vmatpush1.msra.mxu0 0.0
  %738 = vmatprep.subr.mxu0 0.0
  %739 = vmatpush1.msra.mxu0 0.0
  %740 = vmatprep.subr.mxu0 0.0
  %741 = vmatpush1.msra.mxu0 0.0
  %742 = vmatprep.subr.mxu0 0.0
  %743 = vmatpush1.msra.mxu0 0.0
  %744 = vmatprep.subr.mxu0 0.0
  %745 = vmatpush1.msra.mxu0 0.0
  %746 = vmatprep.subr.mxu0 0.0
  %747 = vmatpush1.msra.mxu0 0.0
  %748 = vmatprep.subr.mxu0 0.0
  %749 = vmatpush1.msra.mxu0 0.0
  %750 = vmatprep.subr.mxu0 0.0
  %751 = vmatpush1.msra.mxu0 0.0
  %752 = vmatprep.subr.mxu0 0.0
  %753 = vmatpush1.msra.mxu0 0.0
  %754 = vmatprep.subr.mxu0 0.0
  %755 = vmatpush1.msra.mxu0 0.0
  %756 = vmatprep.mubr.f32.mxu0 0.0
  %757 = vmatmul.mubr.f32.gmra.mrb[0].mxu0 %v690
  %v758 = vpop.f32.mrb[0].mxu0
  %v759 = vadd.f32 0.0, %v758
  %v760 = vpop.f32.mrb[0].mxu0
  %761 = vdwg.mxu0
  %762 = vrot.lane.b32.xlu0 %v247, 104
  %v763 = vpop.permute.xlu0 %762
  %764 = vrot.lane.b32.xlu0 %v247, 72
  %v765 = vpop.permute.xlu0 %764
  %v766 = vsel %vm260, %v763, 0
  %v768 = vsel %vm260, %v765, 0
  %770 = vmatprep.subr.mxu0 0.0
  %771 = vmatpush1.xpose.msra.mxu0 %v768
  %772 = vmatprep.subr.mxu0 0.0
  %773 = vmatpush1.xpose.msra.mxu0 0.0
  %774 = vmatprep.subr.mxu0 0.0
  %775 = vmatpush1.xpose.msra.mxu0 0.0
  %776 = vmatprep.subr.mxu0 0.0
  %777 = vmatpush1.xpose.msra.mxu0 0.0
  %778 = vmatprep.subr.mxu0 0.0
  %779 = vmatpush1.xpose.msra.mxu0 0.0
  %780 = vmatprep.subr.mxu0 0.0
  %781 = vmatpush1.xpose.msra.mxu0 0.0
  %782 = vmatprep.subr.mxu0 0.0
  %783 = vmatpush1.xpose.msra.mxu0 0.0
  %784 = vmatprep.subr.mxu0 0.0
  %785 = vmatpush1.xpose.msra.mxu0 0.0
  %786 = vmatprep.subr.mxu0 0.0
  %787 = vmatpush1.xpose.msra.mxu0 0.0
  %788 = vmatprep.subr.mxu0 0.0
  %789 = vmatpush1.xpose.msra.mxu0 0.0
  %790 = vmatprep.subr.mxu0 0.0
  %791 = vmatpush1.xpose.msra.mxu0 0.0
  %792 = vmatprep.subr.mxu0 0.0
  %793 = vmatpush1.xpose.msra.mxu0 0.0
  %794 = vmatprep.subr.mxu0 0.0
  %795 = vmatpush1.xpose.msra.mxu0 0.0
  %796 = vmatprep.subr.mxu0 0.0
  %797 = vmatpush1.xpose.msra.mxu0 0.0
  %798 = vmatprep.subr.mxu0 0.0
  %799 = vmatpush1.xpose.msra.mxu0 0.0
  %800 = vmatprep.subr.mxu0 0.0
  %801 = vmatpush1.xpose.msra.mxu0 0.0
  %802 = vmatprep.subr.mxu0 0.0
  %803 = vmatpush1.xpose.msra.mxu0 0.0
  %804 = vmatprep.subr.mxu0 0.0
  %805 = vmatpush1.xpose.msra.mxu0 0.0
  %806 = vmatprep.subr.mxu0 0.0
  %807 = vmatpush1.xpose.msra.mxu0 0.0
  %808 = vmatprep.subr.mxu0 0.0
  %809 = vmatpush1.xpose.msra.mxu0 0.0
  %810 = vmatprep.subr.mxu0 0.0
  %811 = vmatpush1.xpose.msra.mxu0 0.0
  %812 = vmatprep.subr.mxu0 0.0
  %813 = vmatpush1.xpose.msra.mxu0 0.0
  %814 = vmatprep.subr.mxu0 0.0
  %815 = vmatpush1.xpose.msra.mxu0 0.0
  %816 = vmatprep.subr.mxu0 0.0
  %817 = vmatpush1.xpose.msra.mxu0 0.0
  %818 = vmatprep.subr.mxu0 0.0
  %819 = vmatpush1.xpose.msra.mxu0 0.0
  %820 = vmatprep.subr.mxu0 0.0
  %821 = vmatpush1.xpose.msra.mxu0 0.0
  %822 = vmatprep.subr.mxu0 0.0
  %823 = vmatpush1.xpose.msra.mxu0 0.0
  %824 = vmatprep.subr.mxu0 0.0
  %825 = vmatpush1.xpose.msra.mxu0 0.0
  %826 = vmatprep.subr.mxu0 0.0
  %827 = vmatpush1.xpose.msra.mxu0 0.0
  %828 = vmatprep.subr.mxu0 0.0
  %829 = vmatpush1.xpose.msra.mxu0 0.0
  %830 = vmatprep.subr.mxu0 0.0
  %831 = vmatpush1.xpose.msra.mxu0 0.0
  %832 = vmatprep.subr.mxu0 0.0
  %833 = vmatpush1.xpose.msra.mxu0 0.0
  %834 = vmatprep.mubr.f32.mxu0 0.0
  %835 = vmatmul.mubr.f32.gmra.mrb[0].mxu0 %v766
  %v836 = vpop.f32.mrb[0].mxu0
  %v837 = vadd.f32 0.0, %v836
  %v838 = vpop.f32.mrb[0].mxu0
  %839 = vdwg.mxu0
  %v840 = vmul.f32 %v837, 0.35355338
  %v841 = vadd.f32 %v840, %v339
  %v842 = vsel %vm260, %v841, -inf
  %843 = vmax.xlane.f32.xlu0 %v842
  %v844 = vpop.xlane.xlu0 %843
  %v845 = vsub.f32 %v841, %v844
  %v846 = vmul.f32 %v845, 1.442695
  %v847 = vpow.pop %v846
  %v848 = vsel %vm260, %v847, 0.0
  %849 = vadd.xlane.f32.xlu0 %v848
  %v850 = vpop.xlane.xlu0 %849
  %v851 = vrcp.pop %v850
  %v852 = vmul.f32 %v847, %v851
  %853 = vrot.lane.b32.xlu0 %v247, 40
  %v854 = vpop.permute.xlu0 %853
  %v857 = vsel %vm260, %v852, 0
  %859 = vmatprep.subr.mxu0 0.0
  %860 = vmatpush1.msra.mxu0 %v854
  %861 = vmatprep.subr.mxu0 0.0
  %862 = vmatpush1.msra.mxu0 0.0
  %863 = vmatprep.subr.mxu0 0.0
  %864 = vmatpush1.msra.mxu0 0.0
  %865 = vmatprep.subr.mxu0 0.0
  %866 = vmatpush1.msra.mxu0 0.0
  %867 = vmatprep.subr.mxu0 0.0
  %868 = vmatpush1.msra.mxu0 0.0
  %869 = vmatprep.subr.mxu0 0.0
  %870 = vmatpush1.msra.mxu0 0.0
  %871 = vmatprep.subr.mxu0 0.0
  %872 = vmatpush1.msra.mxu0 0.0
  %873 = vmatprep.subr.mxu0 0.0
  %874 = vmatpush1.msra.mxu0 0.0
  %875 = vmatprep.subr.mxu0 0.0
  %876 = vmatpush1.msra.mxu0 0.0
  %877 = vmatprep.subr.mxu0 0.0
  %878 = vmatpush1.msra.mxu0 0.0
  %879 = vmatprep.subr.mxu0 0.0
  %880 = vmatpush1.msra.mxu0 0.0
  %881 = vmatprep.subr.mxu0 0.0
  %882 = vmatpush1.msra.mxu0 0.0
  %883 = vmatprep.subr.mxu0 0.0
  %884 = vmatpush1.msra.mxu0 0.0
  %885 = vmatprep.subr.mxu0 0.0
  %886 = vmatpush1.msra.mxu0 0.0
  %887 = vmatprep.subr.mxu0 0.0
  %888 = vmatpush1.msra.mxu0 0.0
  %889 = vmatprep.subr.mxu0 0.0
  %890 = vmatpush1.msra.mxu0 0.0
  %891 = vmatprep.subr.mxu0 0.0
  %892 = vmatpush1.msra.mxu0 0.0
  %893 = vmatprep.subr.mxu0 0.0
  %894 = vmatpush1.msra.mxu0 0.0
  %895 = vmatprep.subr.mxu0 0.0
  %896 = vmatpush1.msra.mxu0 0.0
  %897 = vmatprep.subr.mxu0 0.0
  %898 = vmatpush1.msra.mxu0 0.0
  %899 = vmatprep.subr.mxu0 0.0
  %900 = vmatpush1.msra.mxu0 0.0
  %901 = vmatprep.subr.mxu0 0.0
  %902 = vmatpush1.msra.mxu0 0.0
  %903 = vmatprep.subr.mxu0 0.0
  %904 = vmatpush1.msra.mxu0 0.0
  %905 = vmatprep.subr.mxu0 0.0
  %906 = vmatpush1.msra.mxu0 0.0
  %907 = vmatprep.subr.mxu0 0.0
  %908 = vmatpush1.msra.mxu0 0.0
  %909 = vmatprep.subr.mxu0 0.0
  %910 = vmatpush1.msra.mxu0 0.0
  %911 = vmatprep.subr.mxu0 0.0
  %912 = vmatpush1.msra.mxu0 0.0
  %913 = vmatprep.subr.mxu0 0.0
  %914 = vmatpush1.msra.mxu0 0.0
  %915 = vmatprep.subr.mxu0 0.0
  %916 = vmatpush1.msra.mxu0 0.0
  %917 = vmatprep.subr.mxu0 0.0
  %918 = vmatpush1.msra.mxu0 0.0
  %919 = vmatprep.subr.mxu0 0.0
  %920 = vmatpush1.msra.mxu0 0.0
  %921 = vmatprep.subr.mxu0 0.0
  %922 = vmatpush1.msra.mxu0 0.0
  %923 = vmatprep.mubr.f32.mxu0 0.0
  %924 = vmatmul.mubr.f32.gmra.mrb[0].mxu0 %v857
  %v925 = vpop.f32.mrb[0].mxu0
  %v926 = vadd.f32 0.0, %v925
  %v927 = vpop.f32.mrb[0].mxu0
  %928 = vdwg.mxu0
  %930 = vrot.lane.b32.xlu0 %v592, 8
  %v931 = vpop.permute.xlu0 %930
  %934 = vrot.lane.b32.xlu0 %v759, 16
  %v935 = vpop.permute.xlu0 %934
  %938 = vrot.lane.b32.xlu0 %v926, 24
  %v939 = vpop.permute.xlu0 %938
  %v941 = vsel %vm260, %v425, %v931
  %vm942 = vcmask 130048
  %v943 = vsel %vm942, %v941, %v935
  %vm944 = vcmask 195584
  %v945 = vsel %vm944, %v943, %v939
  %947 = vrot.lane.b32.xlu0 %v252, 96
  %v948 = vpop.permute.xlu0 %947
  %v949 = vsel %vm260, %v252, 0
  %v951 = vsel %vm260, %v948, 0
  %953 = vmatprep.subr.mxu0 0.0
  %954 = vmatpush1.xpose.msra.mxu0 %v951
  %955 = vmatprep.subr.mxu0 0.0
  %956 = vmatpush1.xpose.msra.mxu0 0.0
  %957 = vmatprep.subr.mxu0 0.0
  %958 = vmatpush1.xpose.msra.mxu0 0.0
  %959 = vmatprep.subr.mxu0 0.0
  %960 = vmatpush1.xpose.msra.mxu0 0.0
  %961 = vmatprep.subr.mxu0 0.0
  %962 = vmatpush1.xpose.msra.mxu0 0.0
  %963 = vmatprep.subr.mxu0 0.0
  %964 = vmatpush1.xpose.msra.mxu0 0.0
  %965 = vmatprep.subr.mxu0 0.0
  %966 = vmatpush1.xpose.msra.mxu0 0.0
  %967 = vmatprep.subr.mxu0 0.0
  %968 = vmatpush1.xpose.msra.mxu0 0.0
  %969 = vmatprep.subr.mxu0 0.0
  %970 = vmatpush1.xpose.msra.mxu0 0.0
  %971 = vmatprep.subr.mxu0 0.0
  %972 = vmatpush1.xpose.msra.mxu0 0.0
  %973 = vmatprep.subr.mxu0 0.0
  %974 = vmatpush1.xpose.msra.mxu0 0.0
  %975 = vmatprep.subr.mxu0 0.0
  %976 = vmatpush1.xpose.msra.mxu0 0.0
  %977 = vmatprep.subr.mxu0 0.0
  %978 = vmatpush1.xpose.msra.mxu0 0.0
  %979 = vmatprep.subr.mxu0 0.0
  %980 = vmatpush1.xpose.msra.mxu0 0.0
  %981 = vmatprep.subr.mxu0 0.0
  %982 = vmatpush1.xpose.msra.mxu0 0.0
  %983 = vmatprep.subr.mxu0 0.0
  %984 = vmatpush1.xpose.msra.mxu0 0.0
  %985 = vmatprep.subr.mxu0 0.0
  %986 = vmatpush1.xpose.msra.mxu0 0.0
  %987 = vmatprep.subr.mxu0 0.0
  %988 = vmatpush1.xpose.msra.mxu0 0.0
  %989 = vmatprep.subr.mxu0 0.0
  %990 = vmatpush1.xpose.msra.mxu0 0.0
  %991 = vmatprep.subr.mxu0 0.0
  %992 = vmatpush1.xpose.msra.mxu0 0.0
  %993 = vmatprep.subr.mxu0 0.0
  %994 = vmatpush1.xpose.msra.mxu0 0.0
  %995 = vmatprep.subr.mxu0 0.0
  %996 = vmatpush1.xpose.msra.mxu0 0.0
  %997 = vmatprep.subr.mxu0 0.0
  %998 = vmatpush1.xpose.msra.mxu0 0.0
  %999 = vmatprep.subr.mxu0 0.0
  %1000 = vmatpush1.xpose.msra.mxu0 0.0
  %1001 = vmatprep.subr.mxu0 0.0
  %1002 = vmatpush1.xpose.msra.mxu0 0.0
  %1003 = vmatprep.subr.mxu0 0.0
  %1004 = vmatpush1.xpose.msra.mxu0 0.0
  %1005 = vmatprep.subr.mxu0 0.0
  %1006 = vmatpush1.xpose.msra.mxu0 0.0
  %1007 = vmatprep.subr.mxu0 0.0
  %1008 = vmatpush1.xpose.msra.mxu0 0.0
  %1009 = vmatprep.subr.mxu0 0.0
  %1010 = vmatpush1.xpose.msra.mxu0 0.0
  %1011 = vmatprep.subr.mxu0 0.0
  %1012 = vmatpush1.xpose.msra.mxu0 0.0
  %1013 = vmatprep.subr.mxu0 0.0
  %1014 = vmatpush1.xpose.msra.mxu0 0.0
  %1015 = vmatprep.subr.mxu0 0.0
  %1016 = vmatpush1.xpose.msra.mxu0 0.0
  %1017 = vmatprep.mubr.f32.mxu0 0.0
  %1018 = vmatmul.mubr.f32.gmra.mrb[0].mxu0 %v949
  %v1019 = vpop.f32.mrb[0].mxu0
  %v1020 = vadd.f32 0.0, %v1019
  %v1021 = vpop.f32.mrb[0].mxu0
  %1022 = vdwg.mxu0
  %v1023 = vmul.f32 %v1020, 0.35355338
  %v1024 = vlaneseq
  %v1025 = vshrl.u32 %v1024, 7
  %v1026 = vsub.s32 1, %v1025
  %v1027 = vrot.slane %v256, %v1026
  %v1028 = vadd.f32 %v1023, %v1027
  %v1029 = vsel %vm260, %v1028, -inf
  %1030 = vmax.xlane.f32.xlu0 %v1029
  %v1031 = vpop.xlane.xlu0 %1030
  %v1032 = vsub.f32 %v1028, %v1031
  %v1033 = vmul.f32 %v1032, 1.442695
  %v1034 = vpow.pop %v1033
  %v1035 = vsel %vm260, %v1034, 0.0
  %1036 = vadd.xlane.f32.xlu0 %v1035
  %v1037 = vpop.xlane.xlu0 %1036
  %v1038 = vrcp.pop %v1037
  %v1039 = vmul.f32 %v1034, %v1038
  %1040 = vrot.lane.b32.xlu0 %v252, 64
  %v1041 = vpop.permute.xlu0 %1040
  %v1044 = vsel %vm260, %v1039, 0
  %1046 = vmatprep.subr.mxu0 0.0
  %1047 = vmatpush1.msra.mxu0 %v1041
  %1048 = vmatprep.subr.mxu0 0.0
  %1049 = vmatpush1.msra.mxu0 0.0
  %1050 = vmatprep.subr.mxu0 0.0
  %1051 = vmatpush1.msra.mxu0 0.0
  %1052 = vmatprep.subr.mxu0 0.0
  %1053 = vmatpush1.msra.mxu0 0.0
  %1054 = vmatprep.subr.mxu0 0.0
  %1055 = vmatpush1.msra.mxu0 0.0
  %1056 = vmatprep.subr.mxu0 0.0
  %1057 = vmatpush1.msra.mxu0 0.0
  %1058 = vmatprep.subr.mxu0 0.0
  %1059 = vmatpush1.msra.mxu0 0.0
  %1060 = vmatprep.subr.mxu0 0.0
  %1061 = vmatpush1.msra.mxu0 0.0
  %1062 = vmatprep.subr.mxu0 0.0
  %1063 = vmatpush1.msra.mxu0 0.0
  %1064 = vmatprep.subr.mxu0 0.0
  %1065 = vmatpush1.msra.mxu0 0.0
  %1066 = vmatprep.subr.mxu0 0.0
  %1067 = vmatpush1.msra.mxu0 0.0
  %1068 = vmatprep.subr.mxu0 0.0
  %1069 = vmatpush1.msra.mxu0 0.0
  %1070 = vmatprep.subr.mxu0 0.0
  %1071 = vmatpush1.msra.mxu0 0.0
  %1072 = vmatprep.subr.mxu0 0.0
  %1073 = vmatpush1.msra.mxu0 0.0
  %1074 = vmatprep.subr.mxu0 0.0
  %1075 = vmatpush1.msra.mxu0 0.0
  %1076 = vmatprep.subr.mxu0 0.0
  %1077 = vmatpush1.msra.mxu0 0.0
  %1078 = vmatprep.subr.mxu0 0.0
  %1079 = vmatpush1.msra.mxu0 0.0
  %1080 = vmatprep.subr.mxu0 0.0
  %1081 = vmatpush1.msra.mxu0 0.0
  %1082 = vmatprep.subr.mxu0 0.0
  %1083 = vmatpush1.msra.mxu0 0.0
  %1084 = vmatprep.subr.mxu0 0.0
  %1085 = vmatpush1.msra.mxu0 0.0
  %1086 = vmatprep.subr.mxu0 0.0
  %1087 = vmatpush1.msra.mxu0 0.0
  %1088 = vmatprep.subr.mxu0 0.0
  %1089 = vmatpush1.msra.mxu0 0.0
  %1090 = vmatprep.subr.mxu0 0.0
  %1091 = vmatpush1.msra.mxu0 0.0
  %1092 = vmatprep.subr.mxu0 0.0
  %1093 = vmatpush1.msra.mxu0 0.0
  %1094 = vmatprep.subr.mxu0 0.0
  %1095 = vmatpush1.msra.mxu0 0.0
  %1096 = vmatprep.subr.mxu0 0.0
  %1097 = vmatpush1.msra.mxu0 0.0
  %1098 = vmatprep.subr.mxu0 0.0
  %1099 = vmatpush1.msra.mxu0 0.0
  %1100 = vmatprep.subr.mxu0 0.0
  %1101 = vmatpush1.msra.mxu0 0.0
  %1102 = vmatprep.subr.mxu0 0.0
  %1103 = vmatpush1.msra.mxu0 0.0
  %1104 = vmatprep.subr.mxu0 0.0
  %1105 = vmatpush1.msra.mxu0 0.0
  %1106 = vmatprep.subr.mxu0 0.0
  %1107 = vmatpush1.msra.mxu0 0.0
  %1108 = vmatprep.subr.mxu0 0.0
  %1109 = vmatpush1.msra.mxu0 0.0
  %1110 = vmatprep.mubr.f32.mxu0 0.0
  %1111 = vmatmul.mubr.f32.gmra.mrb[0].mxu0 %v1044
  %v1112 = vpop.f32.mrb[0].mxu0
  %v1113 = vadd.f32 0.0, %v1112
  %v1114 = vpop.f32.mrb[0].mxu0
  %1115 = vdwg.mxu0
  %1116 = vrot.lane.b32.xlu0 %v252, 120
  %v1117 = vpop.permute.xlu0 %1116
  %1118 = vrot.lane.b32.xlu0 %v252, 88
  %v1119 = vpop.permute.xlu0 %1118
  %v1120 = vsel %vm260, %v1117, 0
  %v1122 = vsel %vm260, %v1119, 0
  %1124 = vmatprep.subr.mxu0 0.0
  %1125 = vmatpush1.xpose.msra.mxu0 %v1122
  %1126 = vmatprep.subr.mxu0 0.0
  %1127 = vmatpush1.xpose.msra.mxu0 0.0
  %1128 = vmatprep.subr.mxu0 0.0
  %1129 = vmatpush1.xpose.msra.mxu0 0.0
  %1130 = vmatprep.subr.mxu0 0.0
  %1131 = vmatpush1.xpose.msra.mxu0 0.0
  %1132 = vmatprep.subr.mxu0 0.0
  %1133 = vmatpush1.xpose.msra.mxu0 0.0
  %1134 = vmatprep.subr.mxu0 0.0
  %1135 = vmatpush1.xpose.msra.mxu0 0.0
  %1136 = vmatprep.subr.mxu0 0.0
  %1137 = vmatpush1.xpose.msra.mxu0 0.0
  %1138 = vmatprep.subr.mxu0 0.0
  %1139 = vmatpush1.xpose.msra.mxu0 0.0
  %1140 = vmatprep.subr.mxu0 0.0
  %1141 = vmatpush1.xpose.msra.mxu0 0.0
  %1142 = vmatprep.subr.mxu0 0.0
  %1143 = vmatpush1.xpose.msra.mxu0 0.0
  %1144 = vmatprep.subr.mxu0 0.0
  %1145 = vmatpush1.xpose.msra.mxu0 0.0
  %1146 = vmatprep.subr.mxu0 0.0
  %1147 = vmatpush1.xpose.msra.mxu0 0.0
  %1148 = vmatprep.subr.mxu0 0.0
  %1149 = vmatpush1.xpose.msra.mxu0 0.0
  %1150 = vmatprep.subr.mxu0 0.0
  %1151 = vmatpush1.xpose.msra.mxu0 0.0
  %1152 = vmatprep.subr.mxu0 0.0
  %1153 = vmatpush1.xpose.msra.mxu0 0.0
  %1154 = vmatprep.subr.mxu0 0.0
  %1155 = vmatpush1.xpose.msra.mxu0 0.0
  %1156 = vmatprep.subr.mxu0 0.0
  %1157 = vmatpush1.xpose.msra.mxu0 0.0
  %1158 = vmatprep.subr.mxu0 0.0
  %1159 = vmatpush1.xpose.msra.mxu0 0.0
  %1160 = vmatprep.subr.mxu0 0.0
  %1161 = vmatpush1.xpose.msra.mxu0 0.0
  %1162 = vmatprep.subr.mxu0 0.0
  %1163 = vmatpush1.xpose.msra.mxu0 0.0
  %1164 = vmatprep.subr.mxu0 0.0
  %1165 = vmatpush1.xpose.msra.mxu0 0.0
  %1166 = vmatprep.subr.mxu0 0.0
  %1167 = vmatpush1.xpose.msra.mxu0 0.0
  %1168 = vmatprep.subr.mxu0 0.0
  %1169 = vmatpush1.xpose.msra.mxu0 0.0
  %1170 = vmatprep.subr.mxu0 0.0
  %1171 = vmatpush1.xpose.msra.mxu0 0.0
  %1172 = vmatprep.subr.mxu0 0.0
  %1173 = vmatpush1.xpose.msra.mxu0 0.0
  %1174 = vmatprep.subr.mxu0 0.0
  %1175 = vmatpush1.xpose.msra.mxu0 0.0
  %1176 = vmatprep.subr.mxu0 0.0
  %1177 = vmatpush1.xpose.msra.mxu0 0.0
  %1178 = vmatprep.subr.mxu0 0.0
  %1179 = vmatpush1.xpose.msra.mxu0 0.0
  %1180 = vmatprep.subr.mxu0 0.0
  %1181 = vmatpush1.xpose.msra.mxu0 0.0
  %1182 = vmatprep.subr.mxu0 0.0
  %1183 = vmatpush1.xpose.msra.mxu0 0.0
  %1184 = vmatprep.subr.mxu0 0.0
  %1185 = vmatpush1.xpose.msra.mxu0 0.0
  %1186 = vmatprep.subr.mxu0 0.0
  %1187 = vmatpush1.xpose.msra.mxu0 0.0
  %1188 = vmatprep.mubr.f32.mxu0 0.0
  %1189 = vmatmul.mubr.f32.gmra.mrb[0].mxu0 %v1120
  %v1190 = vpop.f32.mrb[0].mxu0
  %v1191 = vadd.f32 0.0, %v1190
  %v1192 = vpop.f32.mrb[0].mxu0
  %1193 = vdwg.mxu0
  %v1194 = vmul.f32 %v1191, 0.35355338
  %v1195 = vadd.f32 %v1194, %v1027
  %v1196 = vsel %vm260, %v1195, -inf
  %1197 = vmax.xlane.f32.xlu0 %v1196
  %v1198 = vpop.xlane.xlu0 %1197
  %v1199 = vsub.f32 %v1195, %v1198
  %v1200 = vmul.f32 %v1199, 1.442695
  %v1201 = vpow.pop %v1200
  %v1202 = vsel %vm260, %v1201, 0.0
  %1203 = vadd.xlane.f32.xlu0 %v1202
  %v1204 = vpop.xlane.xlu0 %1203
  %v1205 = vrcp.pop %v1204
  %v1206 = vmul.f32 %v1201, %v1205
  %1207 = vrot.lane.b32.xlu0 %v252, 56
  %v1208 = vpop.permute.xlu0 %1207
  %v1211 = vsel %vm260, %v1206, 0
  %1213 = vmatprep.subr.mxu0 0.0
  %1214 = vmatpush1.msra.mxu0 %v1208
  %1215 = vmatprep.subr.mxu0 0.0
  %1216 = vmatpush1.msra.mxu0 0.0
  %1217 = vmatprep.subr.mxu0 0.0
  %1218 = vmatpush1.msra.mxu0 0.0
  %1219 = vmatprep.subr.mxu0 0.0
  %1220 = vmatpush1.msra.mxu0 0.0
  %1221 = vmatprep.subr.mxu0 0.0
  %1222 = vmatpush1.msra.mxu0 0.0
  %1223 = vmatprep.subr.mxu0 0.0
  %1224 = vmatpush1.msra.mxu0 0.0
  %1225 = vmatprep.subr.mxu0 0.0
  %1226 = vmatpush1.msra.mxu0 0.0
  %1227 = vmatprep.subr.mxu0 0.0
  %1228 = vmatpush1.msra.mxu0 0.0
  %1229 = vmatprep.subr.mxu0 0.0
  %1230 = vmatpush1.msra.mxu0 0.0
  %1231 = vmatprep.subr.mxu0 0.0
  %1232 = vmatpush1.msra.mxu0 0.0
  %1233 = vmatprep.subr.mxu0 0.0
  %1234 = vmatpush1.msra.mxu0 0.0
  %1235 = vmatprep.subr.mxu0 0.0
  %1236 = vmatpush1.msra.mxu0 0.0
  %1237 = vmatprep.subr.mxu0 0.0
  %1238 = vmatpush1.msra.mxu0 0.0
  %1239 = vmatprep.subr.mxu0 0.0
  %1240 = vmatpush1.msra.mxu0 0.0
  %1241 = vmatprep.subr.mxu0 0.0
  %1242 = vmatpush1.msra.mxu0 0.0
  %1243 = vmatprep.subr.mxu0 0.0
  %1244 = vmatpush1.msra.mxu0 0.0
  %1245 = vmatprep.subr.mxu0 0.0
  %1246 = vmatpush1.msra.mxu0 0.0
  %1247 = vmatprep.subr.mxu0 0.0
  %1248 = vmatpush1.msra.mxu0 0.0
  %1249 = vmatprep.subr.mxu0 0.0
  %1250 = vmatpush1.msra.mxu0 0.0
  %1251 = vmatprep.subr.mxu0 0.0
  %1252 = vmatpush1.msra.mxu0 0.0
  %1253 = vmatprep.subr.mxu0 0.0
  %1254 = vmatpush1.msra.mxu0 0.0
  %1255 = vmatprep.subr.mxu0 0.0
  %1256 = vmatpush1.msra.mxu0 0.0
  %1257 = vmatprep.subr.mxu0 0.0
  %1258 = vmatpush1.msra.mxu0 0.0
  %1259 = vmatprep.subr.mxu0 0.0
  %1260 = vmatpush1.msra.mxu0 0.0
  %1261 = vmatprep.subr.mxu0 0.0
  %1262 = vmatpush1.msra.mxu0 0.0
  %1263 = vmatprep.subr.mxu0 0.0
  %1264 = vmatpush1.msra.mxu0 0.0
  %1265 = vmatprep.subr.mxu0 0.0
  %1266 = vmatpush1.msra.mxu0 0.0
  %1267 = vmatprep.subr.mxu0 0.0
  %1268 = vmatpush1.msra.mxu0 0.0
  %1269 = vmatprep.subr.mxu0 0.0
  %1270 = vmatpush1.msra.mxu0 0.0
  %1271 = vmatprep.subr.mxu0 0.0
  %1272 = vmatpush1.msra.mxu0 0.0
  %1273 = vmatprep.subr.mxu0 0.0
  %1274 = vmatpush1.msra.mxu0 0.0
  %1275 = vmatprep.subr.mxu0 0.0
  %1276 = vmatpush1.msra.mxu0 0.0
  %1277 = vmatprep.mubr.f32.mxu0 0.0
  %1278 = vmatmul.mubr.f32.gmra.mrb[0].mxu0 %v1211
  %v1279 = vpop.f32.mrb[0].mxu0
  %v1280 = vadd.f32 0.0, %v1279
  %v1281 = vpop.f32.mrb[0].mxu0
  %1282 = vdwg.mxu0
  %1283 = vrot.lane.b32.xlu0 %v252, 112
  %v1284 = vpop.permute.xlu0 %1283
  %1285 = vrot.lane.b32.xlu0 %v252, 80
  %v1286 = vpop.permute.xlu0 %1285
  %v1287 = vsel %vm260, %v1284, 0
  %v1289 = vsel %vm260, %v1286, 0
  %1291 = vmatprep.subr.mxu0 0.0
  %1292 = vmatpush1.xpose.msra.mxu0 %v1289
  %1293 = vmatprep.subr.mxu0 0.0
  %1294 = vmatpush1.xpose.msra.mxu0 0.0
  %1295 = vmatprep.subr.mxu0 0.0
  %1296 = vmatpush1.xpose.msra.mxu0 0.0
  %1297 = vmatprep.subr.mxu0 0.0
  %1298 = vmatpush1.xpose.msra.mxu0 0.0
  %1299 = vmatprep.subr.mxu0 0.0
  %1300 = vmatpush1.xpose.msra.mxu0 0.0
  %1301 = vmatprep.subr.mxu0 0.0
  %1302 = vmatpush1.xpose.msra.mxu0 0.0
  %1303 = vmatprep.subr.mxu0 0.0
  %1304 = vmatpush1.xpose.msra.mxu0 0.0
  %1305 = vmatprep.subr.mxu0 0.0
  %1306 = vmatpush1.xpose.msra.mxu0 0.0
  %1307 = vmatprep.subr.mxu0 0.0
  %1308 = vmatpush1.xpose.msra.mxu0 0.0
  %1309 = vmatprep.subr.mxu0 0.0
  %1310 = vmatpush1.xpose.msra.mxu0 0.0
  %1311 = vmatprep.subr.mxu0 0.0
  %1312 = vmatpush1.xpose.msra.mxu0 0.0
  %1313 = vmatprep.subr.mxu0 0.0
  %1314 = vmatpush1.xpose.msra.mxu0 0.0
  %1315 = vmatprep.subr.mxu0 0.0
  %1316 = vmatpush1.xpose.msra.mxu0 0.0
  %1317 = vmatprep.subr.mxu0 0.0
  %1318 = vmatpush1.xpose.msra.mxu0 0.0
  %1319 = vmatprep.subr.mxu0 0.0
  %1320 = vmatpush1.xpose.msra.mxu0 0.0
  %1321 = vmatprep.subr.mxu0 0.0
  %1322 = vmatpush1.xpose.msra.mxu0 0.0
  %1323 = vmatprep.subr.mxu0 0.0
  %1324 = vmatpush1.xpose.msra.mxu0 0.0
  %1325 = vmatprep.subr.mxu0 0.0
  %1326 = vmatpush1.xpose.msra.mxu0 0.0
  %1327 = vmatprep.subr.mxu0 0.0
  %1328 = vmatpush1.xpose.msra.mxu0 0.0
  %1329 = vmatprep.subr.mxu0 0.0
  %1330 = vmatpush1.xpose.msra.mxu0 0.0
  %1331 = vmatprep.subr.mxu0 0.0
  %1332 = vmatpush1.xpose.msra.mxu0 0.0
  %1333 = vmatprep.subr.mxu0 0.0
  %1334 = vmatpush1.xpose.msra.mxu0 0.0
  %1335 = vmatprep.subr.mxu0 0.0
  %1336 = vmatpush1.xpose.msra.mxu0 0.0
  %1337 = vmatprep.subr.mxu0 0.0
  %1338 = vmatpush1.xpose.msra.mxu0 0.0
  %1339 = vmatprep.subr.mxu0 0.0
  %1340 = vmatpush1.xpose.msra.mxu0 0.0
  %1341 = vmatprep.subr.mxu0 0.0
  %1342 = vmatpush1.xpose.msra.mxu0 0.0
  %1343 = vmatprep.subr.mxu0 0.0
  %1344 = vmatpush1.xpose.msra.mxu0 0.0
  %1345 = vmatprep.subr.mxu0 0.0
  %1346 = vmatpush1.xpose.msra.mxu0 0.0
  %1347 = vmatprep.subr.mxu0 0.0
  %1348 = vmatpush1.xpose.msra.mxu0 0.0
  %1349 = vmatprep.subr.mxu0 0.0
  %1350 = vmatpush1.xpose.msra.mxu0 0.0
  %1351 = vmatprep.subr.mxu0 0.0
  %1352 = vmatpush1.xpose.msra.mxu0 0.0
  %1353 = vmatprep.subr.mxu0 0.0
  %1354 = vmatpush1.xpose.msra.mxu0 0.0
  %1355 = vmatprep.mubr.f32.mxu0 0.0
  %1356 = vmatmul.mubr.f32.gmra.mrb[0].mxu0 %v1287
  %v1357 = vpop.f32.mrb[0].mxu0
  %v1358 = vadd.f32 0.0, %v1357
  %v1359 = vpop.f32.mrb[0].mxu0
  %1360 = vdwg.mxu0
  %v1361 = vmul.f32 %v1358, 0.35355338
  %v1362 = vadd.f32 %v1361, %v1027
  %v1363 = vsel %vm260, %v1362, -inf
  %1364 = vmax.xlane.f32.xlu0 %v1363
  %v1365 = vpop.xlane.xlu0 %1364
  %v1366 = vsub.f32 %v1362, %v1365
  %v1367 = vmul.f32 %v1366, 1.442695
  %v1368 = vpow.pop %v1367
  %v1369 = vsel %vm260, %v1368, 0.0
  %1370 = vadd.xlane.f32.xlu0 %v1369
  %v1371 = vpop.xlane.xlu0 %1370
  %v1372 = vrcp.pop %v1371
  %v1373 = vmul.f32 %v1368, %v1372
  %1374 = vrot.lane.b32.xlu0 %v252, 48
  %v1375 = vpop.permute.xlu0 %1374
  %v1378 = vsel %vm260, %v1373, 0
  %1380 = vmatprep.subr.mxu0 0.0
  %1381 = vmatpush1.msra.mxu0 %v1375
  %1382 = vmatprep.subr.mxu0 0.0
  %1383 = vmatpush1.msra.mxu0 0.0
  %1384 = vmatprep.subr.mxu0 0.0
  %1385 = vmatpush1.msra.mxu0 0.0
  %1386 = vmatprep.subr.mxu0 0.0
  %1387 = vmatpush1.msra.mxu0 0.0
  %1388 = vmatprep.subr.mxu0 0.0
  %1389 = vmatpush1.msra.mxu0 0.0
  %1390 = vmatprep.subr.mxu0 0.0
  %1391 = vmatpush1.msra.mxu0 0.0
  %1392 = vmatprep.subr.mxu0 0.0
  %1393 = vmatpush1.msra.mxu0 0.0
  %1394 = vmatprep.subr.mxu0 0.0
  %1395 = vmatpush1.msra.mxu0 0.0
  %1396 = vmatprep.subr.mxu0 0.0
  %1397 = vmatpush1.msra.mxu0 0.0
  %1398 = vmatprep.subr.mxu0 0.0
  %1399 = vmatpush1.msra.mxu0 0.0
  %1400 = vmatprep.subr.mxu0 0.0
  %1401 = vmatpush1.msra.mxu0 0.0
  %1402 = vmatprep.subr.mxu0 0.0
  %1403 = vmatpush1.msra.mxu0 0.0
  %1404 = vmatprep.subr.mxu0 0.0
  %1405 = vmatpush1.msra.mxu0 0.0
  %1406 = vmatprep.subr.mxu0 0.0
  %1407 = vmatpush1.msra.mxu0 0.0
  %1408 = vmatprep.subr.mxu0 0.0
  %1409 = vmatpush1.msra.mxu0 0.0
  %1410 = vmatprep.subr.mxu0 0.0
  %1411 = vmatpush1.msra.mxu0 0.0
  %1412 = vmatprep.subr.mxu0 0.0
  %1413 = vmatpush1.msra.mxu0 0.0
  %1414 = vmatprep.subr.mxu0 0.0
  %1415 = vmatpush1.msra.mxu0 0.0
  %1416 = vmatprep.subr.mxu0 0.0
  %1417 = vmatpush1.msra.mxu0 0.0
  %1418 = vmatprep.subr.mxu0 0.0
  %1419 = vmatpush1.msra.mxu0 0.0
  %1420 = vmatprep.subr.mxu0 0.0
  %1421 = vmatpush1.msra.mxu0 0.0
  %1422 = vmatprep.subr.mxu0 0.0
  %1423 = vmatpush1.msra.mxu0 0.0
  %1424 = vmatprep.subr.mxu0 0.0
  %1425 = vmatpush1.msra.mxu0 0.0
  %1426 = vmatprep.subr.mxu0 0.0
  %1427 = vmatpush1.msra.mxu0 0.0
  %1428 = vmatprep.subr.mxu0 0.0
  %1429 = vmatpush1.msra.mxu0 0.0
  %1430 = vmatprep.subr.mxu0 0.0
  %1431 = vmatpush1.msra.mxu0 0.0
  %1432 = vmatprep.subr.mxu0 0.0
  %1433 = vmatpush1.msra.mxu0 0.0
  %1434 = vmatprep.subr.mxu0 0.0
  %1435 = vmatpush1.msra.mxu0 0.0
  %1436 = vmatprep.subr.mxu0 0.0
  %1437 = vmatpush1.msra.mxu0 0.0
  %1438 = vmatprep.subr.mxu0 0.0
  %1439 = vmatpush1.msra.mxu0 0.0
  %1440 = vmatprep.subr.mxu0 0.0
  %1441 = vmatpush1.msra.mxu0 0.0
  %1442 = vmatprep.subr.mxu0 0.0
  %1443 = vmatpush1.msra.mxu0 0.0
  %1444 = vmatprep.mubr.f32.mxu0 0.0
  %1445 = vmatmul.mubr.f32.gmra.mrb[0].mxu0 %v1378
  %v1446 = vpop.f32.mrb[0].mxu0
  %v1447 = vadd.f32 0.0, %v1446
  %v1448 = vpop.f32.mrb[0].mxu0
  %1449 = vdwg.mxu0
  %1450 = vrot.lane.b32.xlu0 %v252, 104
  %v1451 = vpop.permute.xlu0 %1450
  %1452 = vrot.lane.b32.xlu0 %v252, 72
  %v1453 = vpop.permute.xlu0 %1452
  %v1454 = vsel %vm260, %v1451, 0
  %v1456 = vsel %vm260, %v1453, 0
  %1458 = vmatprep.subr.mxu0 0.0
  %1459 = vmatpush1.xpose.msra.mxu0 %v1456
  %1460 = vmatprep.subr.mxu0 0.0
  %1461 = vmatpush1.xpose.msra.mxu0 0.0
  %1462 = vmatprep.subr.mxu0 0.0
  %1463 = vmatpush1.xpose.msra.mxu0 0.0
  %1464 = vmatprep.subr.mxu0 0.0
  %1465 = vmatpush1.xpose.msra.mxu0 0.0
  %1466 = vmatprep.subr.mxu0 0.0
  %1467 = vmatpush1.xpose.msra.mxu0 0.0
  %1468 = vmatprep.subr.mxu0 0.0
  %1469 = vmatpush1.xpose.msra.mxu0 0.0
  %1470 = vmatprep.subr.mxu0 0.0
  %1471 = vmatpush1.xpose.msra.mxu0 0.0
  %1472 = vmatprep.subr.mxu0 0.0
  %1473 = vmatpush1.xpose.msra.mxu0 0.0
  %1474 = vmatprep.subr.mxu0 0.0
  %1475 = vmatpush1.xpose.msra.mxu0 0.0
  %1476 = vmatprep.subr.mxu0 0.0
  %1477 = vmatpush1.xpose.msra.mxu0 0.0
  %1478 = vmatprep.subr.mxu0 0.0
  %1479 = vmatpush1.xpose.msra.mxu0 0.0
  %1480 = vmatprep.subr.mxu0 0.0
  %1481 = vmatpush1.xpose.msra.mxu0 0.0
  %1482 = vmatprep.subr.mxu0 0.0
  %1483 = vmatpush1.xpose.msra.mxu0 0.0
  %1484 = vmatprep.subr.mxu0 0.0
  %1485 = vmatpush1.xpose.msra.mxu0 0.0
  %1486 = vmatprep.subr.mxu0 0.0
  %1487 = vmatpush1.xpose.msra.mxu0 0.0
  %1488 = vmatprep.subr.mxu0 0.0
  %1489 = vmatpush1.xpose.msra.mxu0 0.0
  %1490 = vmatprep.subr.mxu0 0.0
  %1491 = vmatpush1.xpose.msra.mxu0 0.0
  %1492 = vmatprep.subr.mxu0 0.0
  %1493 = vmatpush1.xpose.msra.mxu0 0.0
  %1494 = vmatprep.subr.mxu0 0.0
  %1495 = vmatpush1.xpose.msra.mxu0 0.0
  %1496 = vmatprep.subr.mxu0 0.0
  %1497 = vmatpush1.xpose.msra.mxu0 0.0
  %1498 = vmatprep.subr.mxu0 0.0
  %1499 = vmatpush1.xpose.msra.mxu0 0.0
  %1500 = vmatprep.subr.mxu0 0.0
  %1501 = vmatpush1.xpose.msra.mxu0 0.0
  %1502 = vmatprep.subr.mxu0 0.0
  %1503 = vmatpush1.xpose.msra.mxu0 0.0
  %1504 = vmatprep.subr.mxu0 0.0
  %1505 = vmatpush1.xpose.msra.mxu0 0.0
  %1506 = vmatprep.subr.mxu0 0.0
  %1507 = vmatpush1.xpose.msra.mxu0 0.0
  %1508 = vmatprep.subr.mxu0 0.0
  %1509 = vmatpush1.xpose.msra.mxu0 0.0
  %1510 = vmatprep.subr.mxu0 0.0
  %1511 = vmatpush1.xpose.msra.mxu0 0.0
  %1512 = vmatprep.subr.mxu0 0.0
  %1513 = vmatpush1.xpose.msra.mxu0 0.0
  %1514 = vmatprep.subr.mxu0 0.0
  %1515 = vmatpush1.xpose.msra.mxu0 0.0
  %1516 = vmatprep.subr.mxu0 0.0
  %1517 = vmatpush1.xpose.msra.mxu0 0.0
  %1518 = vmatprep.subr.mxu0 0.0
  %1519 = vmatpush1.xpose.msra.mxu0 0.0
  %1520 = vmatprep.subr.mxu0 0.0
  %1521 = vmatpush1.xpose.msra.mxu0 0.0
  %1522 = vmatprep.mubr.f32.mxu0 0.0
  %1523 = vmatmul.mubr.f32.gmra.mrb[0].mxu0 %v1454
  %v1524 = vpop.f32.mrb[0].mxu0
  %v1525 = vadd.f32 0.0, %v1524
  %v1526 = vpop.f32.mrb[0].mxu0
  %1527 = vdwg.mxu0
  %v1528 = vmul.f32 %v1525, 0.35355338
  %v1529 = vadd.f32 %v1528, %v1027
  %v1530 = vsel %vm260, %v1529, -inf
  %1531 = vmax.xlane.f32.xlu0 %v1530
  %v1532 = vpop.xlane.xlu0 %1531
  %v1533 = vsub.f32 %v1529, %v1532
  %v1534 = vmul.f32 %v1533, 1.442695
  %v1535 = vpow.pop %v1534
  %v1536 = vsel %vm260, %v1535, 0.0
  %1537 = vadd.xlane.f32.xlu0 %v1536
  %v1538 = vpop.xlane.xlu0 %1537
  %v1539 = vrcp.pop %v1538
  %v1540 = vmul.f32 %v1535, %v1539
  %1541 = vrot.lane.b32.xlu0 %v252, 40
  %v1542 = vpop.permute.xlu0 %1541
  %v1545 = vsel %vm260, %v1540, 0
  %1547 = vmatprep.subr.mxu0 0.0
  %1548 = vmatpush1.msra.mxu0 %v1542
  %1549 = vmatprep.subr.mxu0 0.0
  %1550 = vmatpush1.msra.mxu0 0.0
  %1551 = vmatprep.subr.mxu0 0.0
  %1552 = vmatpush1.msra.mxu0 0.0
  %1553 = vmatprep.subr.mxu0 0.0
  %1554 = vmatpush1.msra.mxu0 0.0
  %1555 = vmatprep.subr.mxu0 0.0
  %1556 = vmatpush1.msra.mxu0 0.0
  %1557 = vmatprep.subr.mxu0 0.0
  %1558 = vmatpush1.msra.mxu0 0.0
  %1559 = vmatprep.subr.mxu0 0.0
  %1560 = vmatpush1.msra.mxu0 0.0
  %1561 = vmatprep.subr.mxu0 0.0
  %1562 = vmatpush1.msra.mxu0 0.0
  %1563 = vmatprep.subr.mxu0 0.0
  %1564 = vmatpush1.msra.mxu0 0.0
  %1565 = vmatprep.subr.mxu0 0.0
  %1566 = vmatpush1.msra.mxu0 0.0
  %1567 = vmatprep.subr.mxu0 0.0
  %1568 = vmatpush1.msra.mxu0 0.0
  %1569 = vmatprep.subr.mxu0 0.0
  %1570 = vmatpush1.msra.mxu0 0.0
  %1571 = vmatprep.subr.mxu0 0.0
  %1572 = vmatpush1.msra.mxu0 0.0
  %1573 = vmatprep.subr.mxu0 0.0
  %1574 = vmatpush1.msra.mxu0 0.0
  %1575 = vmatprep.subr.mxu0 0.0
  %1576 = vmatpush1.msra.mxu0 0.0
  %1577 = vmatprep.subr.mxu0 0.0
  %1578 = vmatpush1.msra.mxu0 0.0
  %1579 = vmatprep.subr.mxu0 0.0
  %1580 = vmatpush1.msra.mxu0 0.0
  %1581 = vmatprep.subr.mxu0 0.0
  %1582 = vmatpush1.msra.mxu0 0.0
  %1583 = vmatprep.subr.mxu0 0.0
  %1584 = vmatpush1.msra.mxu0 0.0
  %1585 = vmatprep.subr.mxu0 0.0
  %1586 = vmatpush1.msra.mxu0 0.0
  %1587 = vmatprep.subr.mxu0 0.0
  %1588 = vmatpush1.msra.mxu0 0.0
  %1589 = vmatprep.subr.mxu0 0.0
  %1590 = vmatpush1.msra.mxu0 0.0
  %1591 = vmatprep.subr.mxu0 0.0
  %1592 = vmatpush1.msra.mxu0 0.0
  %1593 = vmatprep.subr.mxu0 0.0
  %1594 = vmatpush1.msra.mxu0 0.0
  %1595 = vmatprep.subr.mxu0 0.0
  %1596 = vmatpush1.msra.mxu0 0.0
  %1597 = vmatprep.subr.mxu0 0.0
  %1598 = vmatpush1.msra.mxu0 0.0
  %1599 = vmatprep.subr.mxu0 0.0
  %1600 = vmatpush1.msra.mxu0 0.0
  %1601 = vmatprep.subr.mxu0 0.0
  %1602 = vmatpush1.msra.mxu0 0.0
  %1603 = vmatprep.subr.mxu0 0.0
  %1604 = vmatpush1.msra.mxu0 0.0
  %1605 = vmatprep.subr.mxu0 0.0
  %1606 = vmatpush1.msra.mxu0 0.0
  %1607 = vmatprep.subr.mxu0 0.0
  %1608 = vmatpush1.msra.mxu0 0.0
  %1609 = vmatprep.subr.mxu0 0.0
  %1610 = vmatpush1.msra.mxu0 0.0
  %1611 = vmatprep.mubr.f32.mxu0 0.0
  %1612 = vmatmul.mubr.f32.gmra.mrb[0].mxu0 %v1545
  %v1613 = vpop.f32.mrb[0].mxu0
  %v1614 = vadd.f32 0.0, %v1613
  %v1615 = vpop.f32.mrb[0].mxu0
  %1616 = vdwg.mxu0
  %1618 = vrot.lane.b32.xlu0 %v1280, 8
  %v1619 = vpop.permute.xlu0 %1618
  %1622 = vrot.lane.b32.xlu0 %v1447, 16
  %v1623 = vpop.permute.xlu0 %1622
  %1626 = vrot.lane.b32.xlu0 %v1614, 24
  %v1627 = vpop.permute.xlu0 %1626
  %v1629 = vsel %vm260, %v1113, %v1619
  %v1630 = vsel %vm942, %v1629, %v1623
  %v1631 = vsel %vm944, %v1630, %v1627
  %v1632 = vld [vmem:[%s3 + $0x6b] sm:$0xff]
  %v1633 = vld [vmem:[%s3 + $0x73] sm:$0xff]
  %v1634 = vld [vmem:[%s3 + $0x7b] sm:$0xff]
  %v1635 = vld [vmem:[%s3 + $0x83] sm:$0xff]
  %v1637 = vsel %vm125, %v945, 0
  %v1640 = vsel %vm125, %v1631, 0
  %1642 = vmatprep.subr.mxu0 0.0
  %1643 = vmatpush1.msra.mxu0 %v1632
  %1644 = vmatprep.subr.mxu0 0.0
  %1645 = vmatpush1.msra.mxu0 %v1633
  %1646 = vmatprep.subr.mxu0 0.0
  %1647 = vmatpush1.msra.mxu0 %v1634
  %1648 = vmatprep.subr.mxu0 0.0
  %1649 = vmatpush1.msra.mxu0 %v1635
  %1650 = vmatprep.subr.mxu0 0.0
  %1651 = vmatpush1.msra.mxu0 0.0
  %1652 = vmatprep.subr.mxu0 0.0
  %1653 = vmatpush1.msra.mxu0 0.0
  %1654 = vmatprep.subr.mxu0 0.0
  %1655 = vmatpush1.msra.mxu0 0.0
  %1656 = vmatprep.subr.mxu0 0.0
  %1657 = vmatpush1.msra.mxu0 0.0
  %1658 = vmatprep.subr.mxu0 0.0
  %1659 = vmatpush1.msra.mxu0 0.0
  %1660 = vmatprep.subr.mxu0 0.0
  %1661 = vmatpush1.msra.mxu0 0.0
  %1662 = vmatprep.subr.mxu0 0.0
  %1663 = vmatpush1.msra.mxu0 0.0
  %1664 = vmatprep.subr.mxu0 0.0
  %1665 = vmatpush1.msra.mxu0 0.0
  %1666 = vmatprep.subr.mxu0 0.0
  %1667 = vmatpush1.msra.mxu0 0.0
  %1668 = vmatprep.subr.mxu0 0.0
  %1669 = vmatpush1.msra.mxu0 0.0
  %1670 = vmatprep.subr.mxu0 0.0
  %1671 = vmatpush1.msra.mxu0 0.0
  %1672 = vmatprep.subr.mxu0 0.0
  %1673 = vmatpush1.msra.mxu0 0.0
  %1674 = vmatprep.subr.mxu0 0.0
  %1675 = vmatpush1.msra.mxu0 0.0
  %1676 = vmatprep.subr.mxu0 0.0
  %1677 = vmatpush1.msra.mxu0 0.0
  %1678 = vmatprep.subr.mxu0 0.0
  %1679 = vmatpush1.msra.mxu0 0.0
  %1680 = vmatprep.subr.mxu0 0.0
  %1681 = vmatpush1.msra.mxu0 0.0
  %1682 = vmatprep.subr.mxu0 0.0
  %1683 = vmatpush1.msra.mxu0 0.0
  %1684 = vmatprep.subr.mxu0 0.0
  %1685 = vmatpush1.msra.mxu0 0.0
  %1686 = vmatprep.subr.mxu0 0.0
  %1687 = vmatpush1.msra.mxu0 0.0
  %1688 = vmatprep.subr.mxu0 0.0
  %1689 = vmatpush1.msra.mxu0 0.0
  %1690 = vmatprep.subr.mxu0 0.0
  %1691 = vmatpush1.msra.mxu0 0.0
  %1692 = vmatprep.subr.mxu0 0.0
  %1693 = vmatpush1.msra.mxu0 0.0
  %1694 = vmatprep.subr.mxu0 0.0
  %1695 = vmatpush1.msra.mxu0 0.0
  %1696 = vmatprep.subr.mxu0 0.0
  %1697 = vmatpush1.msra.mxu0 0.0
  %1698 = vmatprep.subr.mxu0 0.0
  %1699 = vmatpush1.msra.mxu0 0.0
  %1700 = vmatprep.subr.mxu0 0.0
  %1701 = vmatpush1.msra.mxu0 0.0
  %1702 = vmatprep.subr.mxu0 0.0
  %1703 = vmatpush1.msra.mxu0 0.0
  %1704 = vmatprep.subr.mxu0 0.0
  %1705 = vmatpush1.msra.mxu0 0.0
  %1706 = vmatprep.mubr.f32.mxu0 0.0
  %1707 = vmatmul.mubr.f32.gmra.mrb[0].mxu0 %v1637
  %v1708 = vpop.f32.mrb[0].mxu0
  %v1709 = vadd.f32 0.0, %v1708
  %v1710 = vpop.f32.mrb[0].mxu0
  %1711 = vmatprep.mubr.f32.mxu0 0.0
  %1712 = vmatmul.mubr.f32.gmra.mrb[0].mxu0 %v1640
  %v1713 = vpop.f32.mrb[0].mxu0
  %v1714 = vadd.f32 0.0, %v1713
  %v1715 = vpop.f32.mrb[0].mxu0
  %1716 = vdwg.mxu0
  %v1717 = vadd.f32 %v163, %v1709
  %v1718 = vadd.f32 %v164, %v1714
  %v1719 = vld [vmem:[%s3 + $0x8b] sm:$0x1]
  %v1720 = vlaneseq
  %v1721 = vshrl.u32 %v1720, 7
  %v1722 = vsub.s32 0, %v1721
  %v1723 = vrot.slane %v1719, %v1722
  %v1724 = vadd.f32 %v1717, %v1723
  %v1725 = vadd.f32 %v1718, %v1723
  %v1726 = vld [vmem:[%s3 + $0x8c] sm:$0x1]
  %v1727 = vld [vmem:[%s3 + $0x8d] sm:$0x1]
  %v1728 = vsel %vm125, %v1724, 0.0
  %1729 = vadd.xlane.f32.xlu0 %v1728
  %v1730 = vpop.xlane.xlu0 %1729
  %v1731 = vsel %vm125, %v1725, 0.0
  %1732 = vadd.xlane.f32.xlu0 %v1731
  %v1733 = vpop.xlane.xlu0 %1732
  %v1734 = vmul.f32 %v1730, %v132
  %v1735 = vmul.f32 %v1733, %v132
  %v1736 = vsub.f32 %v1724, %v1734
  %v1737 = vsub.f32 %v1725, %v1735
  %v1738 = vmul.f32 %v1736, %v1736
  %v1739 = vmul.f32 %v1737, %v1737
  %v1740 = vsel %vm125, %v1738, 0.0
  %1741 = vadd.xlane.f32.xlu0 %v1740
  %v1742 = vpop.xlane.xlu0 %1741
  %v1743 = vsel %vm125, %v1739, 0.0
  %1744 = vadd.xlane.f32.xlu0 %v1743
  %v1745 = vpop.xlane.xlu0 %1744
  %v1746 = vmul.f32 %v1742, %v132
  %v1747 = vmul.f32 %v1745, %v132
  %v1748 = vadd.f32 %v1746, 1e-12
  %v1749 = vadd.f32 %v1747, 1e-12
  %v1750 = vrsqrt.pop %v1748
  %v1751 = vrsqrt.pop %v1749
  %v1752 = vmul.f32 %v1736, %v1750
  %v1753 = vmul.f32 %v1737, %v1751
  %v1754 = vlaneseq
  %v1755 = vshrl.u32 %v1754, 7
  %v1756 = vsub.s32 0, %v1755
  %v1757 = vrot.slane %v1726, %v1756
  %v1758 = vmul.f32 %v1752, %v1757
  %v1759 = vmul.f32 %v1753, %v1757
  %v1760 = vlaneseq
  %v1761 = vshrl.u32 %v1760, 7
  %v1762 = vsub.s32 0, %v1761
  %v1763 = vrot.slane %v1727, %v1762
  %v1764 = vadd.f32 %v1758, %v1763
  %v1765 = vadd.f32 %v1759, %v1763
  %v1766 = vld [vmem:[%s3 + $0xf3] sm:$0xff]
  %v1767 = vld [vmem:[%s3 + $0xfb] sm:$0xff]
  %v1768 = vld [vmem:[%s3 + $0x103] sm:$0xff]
  %v1769 = vld [vmem:[%s3 + $0x10b] sm:$0xff]
  %v1770 = vld [vmem:[%s3 + $0x113] sm:$0x1]
  %v1771 = vlaneseq
  %v1772 = vshrl.u32 %v1771, 7
  %v1773 = vsub.s32 0, %v1772
  %v1774 = vrot.slane %v1770, %v1773
  %v1776 = vsel %vm125, %v1764, 0
  %v1779 = vsel %vm125, %v1765, 0
  %1781 = vmatprep.subr.mxu0 0.0
  %1782 = vmatpush1.msra.mxu0 %v1766
  %1783 = vmatprep.subr.mxu0 0.0
  %1784 = vmatpush1.msra.mxu0 %v1767
  %1785 = vmatprep.subr.mxu0 0.0
  %1786 = vmatpush1.msra.mxu0 %v1768
  %1787 = vmatprep.subr.mxu0 0.0
  %1788 = vmatpush1.msra.mxu0 %v1769
  %1789 = vmatprep.subr.mxu0 0.0
  %1790 = vmatpush1.msra.mxu0 0.0
  %1791 = vmatprep.subr.mxu0 0.0
  %1792 = vmatpush1.msra.mxu0 0.0
  %1793 = vmatprep.subr.mxu0 0.0
  %1794 = vmatpush1.msra.mxu0 0.0
  %1795 = vmatprep.subr.mxu0 0.0
  %1796 = vmatpush1.msra.mxu0 0.0
  %1797 = vmatprep.subr.mxu0 0.0
  %1798 = vmatpush1.msra.mxu0 0.0
  %1799 = vmatprep.subr.mxu0 0.0
  %1800 = vmatpush1.msra.mxu0 0.0
  %1801 = vmatprep.subr.mxu0 0.0
  %1802 = vmatpush1.msra.mxu0 0.0
  %1803 = vmatprep.subr.mxu0 0.0
  %1804 = vmatpush1.msra.mxu0 0.0
  %1805 = vmatprep.subr.mxu0 0.0
  %1806 = vmatpush1.msra.mxu0 0.0
  %1807 = vmatprep.subr.mxu0 0.0
  %1808 = vmatpush1.msra.mxu0 0.0
  %1809 = vmatprep.subr.mxu0 0.0
  %1810 = vmatpush1.msra.mxu0 0.0
  %1811 = vmatprep.subr.mxu0 0.0
  %1812 = vmatpush1.msra.mxu0 0.0
  %1813 = vmatprep.subr.mxu0 0.0
  %1814 = vmatpush1.msra.mxu0 0.0
  %1815 = vmatprep.subr.mxu0 0.0
  %1816 = vmatpush1.msra.mxu0 0.0
  %1817 = vmatprep.subr.mxu0 0.0
  %1818 = vmatpush1.msra.mxu0 0.0
  %1819 = vmatprep.subr.mxu0 0.0
  %1820 = vmatpush1.msra.mxu0 0.0
  %1821 = vmatprep.subr.mxu0 0.0
  %1822 = vmatpush1.msra.mxu0 0.0
  %1823 = vmatprep.subr.mxu0 0.0
  %1824 = vmatpush1.msra.mxu0 0.0
  %1825 = vmatprep.subr.mxu0 0.0
  %1826 = vmatpush1.msra.mxu0 0.0
  %1827 = vmatprep.subr.mxu0 0.0
  %1828 = vmatpush1.msra.mxu0 0.0
  %1829 = vmatprep.subr.mxu0 0.0
  %1830 = vmatpush1.msra.mxu0 0.0
  %1831 = vmatprep.subr.mxu0 0.0
  %1832 = vmatpush1.msra.mxu0 0.0
  %1833 = vmatprep.subr.mxu0 0.0
  %1834 = vmatpush1.msra.mxu0 0.0
  %1835 = vmatprep.subr.mxu0 0.0
  %1836 = vmatpush1.msra.mxu0 0.0
  %1837 = vmatprep.subr.mxu0 0.0
  %1838 = vmatpush1.msra.mxu0 0.0
  %1839 = vmatprep.subr.mxu0 0.0
  %1840 = vmatpush1.msra.mxu0 0.0
  %1841 = vmatprep.subr.mxu0 0.0
  %1842 = vmatpush1.msra.mxu0 0.0
  %1843 = vmatprep.subr.mxu0 0.0
  %1844 = vmatpush1.msra.mxu0 0.0
  %1845 = vmatprep.mubr.f32.mxu0 0.0
  %1846 = vmatmul.mubr.f32.gmra.mrb[0].mxu0 %v1776
  %v1847 = vpop.f32.mrb[0].mxu0
  %v1848 = vadd.f32 %v1774, %v1847
  %v1849 = vpop.f32.mrb[0].mxu0
  %1850 = vmatprep.mubr.f32.mxu0 0.0
  %1851 = vmatmul.mubr.f32.gmra.mrb[0].mxu0 %v1779
  %v1852 = vpop.f32.mrb[0].mxu0
  %v1853 = vadd.f32 %v1774, %v1852
  %v1854 = vpop.f32.mrb[0].mxu0
  %1855 = vdwg.mxu0
  %v1856 = vmul.f32 %v1848, %v1848
  %v1857 = vmul.f32 %v1853, %v1853
  %v1858 = vmul.f32 %v1848, %v1856
  %v1859 = vmul.f32 %v1853, %v1857
  %v1860 = vmul.f32 %v1858, 0.044715
  %v1861 = vmul.f32 %v1859, 0.044715
  %v1862 = vadd.f32 %v1848, %v1860
  %v1863 = vadd.f32 %v1853, %v1861
  %v1864 = vmul.f32 %v1862, 0.7978846
  %v1865 = vmul.f32 %v1863, 0.7978846
  %v1866 = vtanh.pop %v1864
  %v1867 = vtanh.pop %v1865
  %v1868 = vadd.f32 %v1866, 1.0
  %v1869 = vadd.f32 %v1867, 1.0
  %v1870 = vmul.f32 %v1868, 0.5
  %v1871 = vmul.f32 %v1869, 0.5
  %v1872 = vmul.f32 %v1848, %v1870
  %v1873 = vmul.f32 %v1853, %v1871
  %v1874 = vld [vmem:[%s3 + $0x114] sm:$0xff]
  %v1875 = vld [vmem:[%s3 + $0x11c] sm:$0xff]
  %v1876 = vld [vmem:[%s3 + $0x124] sm:$0xff]
  %v1877 = vld [vmem:[%s3 + $0x12c] sm:$0xff]
  %v1878 = vld [vmem:[%s3 + $0x134] sm:$0xff]
  %v1879 = vld [vmem:[%s3 + $0x13c] sm:$0xff]
  %v1880 = vld [vmem:[%s3 + $0x144] sm:$0xff]
  %v1881 = vld [vmem:[%s3 + $0x14c] sm:$0xff]
  %v1882 = vld [vmem:[%s3 + $0x154] sm:$0x1]
  %v1883 = vlaneseq
  %v1884 = vshrl.u32 %v1883, 7
  %v1885 = vsub.s32 0, %v1884
  %v1886 = vrot.slane %v1882, %v1885
  %v1888 = vsel %vm41, %v1872, 0
  %v1891 = vsel %vm41, %v1873, 0
  %1893 = vmatprep.subr.mxu0 0.0
  %1894 = vmatpush1.msra.mxu0 %v1874
  %1895 = vmatprep.subr.mxu0 0.0
  %1896 = vmatpush1.msra.mxu0 %v1875
  %1897 = vmatprep.subr.mxu0 0.0
  %1898 = vmatpush1.msra.mxu0 %v1876
  %1899 = vmatprep.subr.mxu0 0.0
  %1900 = vmatpush1.msra.mxu0 %v1877
  %1901 = vmatprep.subr.mxu0 0.0
  %1902 = vmatpush1.msra.mxu0 %v1878
  %1903 = vmatprep.subr.mxu0 0.0
  %1904 = vmatpush1.msra.mxu0 %v1879
  %1905 = vmatprep.subr.mxu0 0.0
  %1906 = vmatpush1.msra.mxu0 %v1880
  %1907 = vmatprep.subr.mxu0 0.0
  %1908 = vmatpush1.msra.mxu0 %v1881
  %1909 = vmatprep.subr.mxu0 0.0
  %1910 = vmatpush1.msra.mxu0 0.0
  %1911 = vmatprep.subr.mxu0 0.0
  %1912 = vmatpush1.msra.mxu0 0.0
  %1913 = vmatprep.subr.mxu0 0.0
  %1914 = vmatpush1.msra.mxu0 0.0
  %1915 = vmatprep.subr.mxu0 0.0
  %1916 = vmatpush1.msra.mxu0 0.0
  %1917 = vmatprep.subr.mxu0 0.0
  %1918 = vmatpush1.msra.mxu0 0.0
  %1919 = vmatprep.subr.mxu0 0.0
  %1920 = vmatpush1.msra.mxu0 0.0
  %1921 = vmatprep.subr.mxu0 0.0
  %1922 = vmatpush1.msra.mxu0 0.0
  %1923 = vmatprep.subr.mxu0 0.0
  %1924 = vmatpush1.msra.mxu0 0.0
  %1925 = vmatprep.subr.mxu0 0.0
  %1926 = vmatpush1.msra.mxu0 0.0
  %1927 = vmatprep.subr.mxu0 0.0
  %1928 = vmatpush1.msra.mxu0 0.0
  %1929 = vmatprep.subr.mxu0 0.0
  %1930 = vmatpush1.msra.mxu0 0.0
  %1931 = vmatprep.subr.mxu0 0.0
  %1932 = vmatpush1.msra.mxu0 0.0
  %1933 = vmatprep.subr.mxu0 0.0
  %1934 = vmatpush1.msra.mxu0 0.0
  %1935 = vmatprep.subr.mxu0 0.0
  %1936 = vmatpush1.msra.mxu0 0.0
  %1937 = vmatprep.subr.mxu0 0.0
  %1938 = vmatpush1.msra.mxu0 0.0
  %1939 = vmatprep.subr.mxu0 0.0
  %1940 = vmatpush1.msra.mxu0 0.0
  %1941 = vmatprep.subr.mxu0 0.0
  %1942 = vmatpush1.msra.mxu0 0.0
  %1943 = vmatprep.subr.mxu0 0.0
  %1944 = vmatpush1.msra.mxu0 0.0
  %1945 = vmatprep.subr.mxu0 0.0
  %1946 = vmatpush1.msra.mxu0 0.0
  %1947 = vmatprep.subr.mxu0 0.0
  %1948 = vmatpush1.msra.mxu0 0.0
  %1949 = vmatprep.subr.mxu0 0.0
  %1950 = vmatpush1.msra.mxu0 0.0
  %1951 = vmatprep.subr.mxu0 0.0
  %1952 = vmatpush1.msra.mxu0 0.0
  %1953 = vmatprep.subr.mxu0 0.0
  %1954 = vmatpush1.msra.mxu0 0.0
  %1955 = vmatprep.subr.mxu0 0.0
  %1956 = vmatpush1.msra.mxu0 0.0
  %1957 = vmatprep.mubr.f32.mxu0 0.0
  %1958 = vmatmul.mubr.f32.gmra.mrb[0].mxu0 %v1888
  %v1959 = vpop.f32.mrb[0].mxu0
  %v1960 = vadd.f32 %v1886, %v1959
  %v1961 = vpop.f32.mrb[0].mxu0
  %1962 = vmatprep.mubr.f32.mxu0 0.0
  %1963 = vmatmul.mubr.f32.gmra.mrb[0].mxu0 %v1891
  %v1964 = vpop.f32.mrb[0].mxu0
  %v1965 = vadd.f32 %v1886, %v1964
  %v1966 = vpop.f32.mrb[0].mxu0
  %1967 = vdwg.mxu0
  %v1968 = vadd.f32 %v1764, %v1960
  %v1969 = vadd.f32 %v1765, %v1965
  %v1970 = vld [vmem:[%s3 + $0x155] sm:$0x1]
  %v1971 = vld [vmem:[%s3 + $0x156] sm:$0x1]
  %v1972 = vsel %vm125, %v1968, 0.0
  %1973 = vadd.xlane.f32.xlu0 %v1972
  %v1974 = vpop.xlane.xlu0 %1973
  %v1975 = vsel %vm125, %v1969, 0.0
  %1976 = vadd.xlane.f32.xlu0 %v1975
  %v1977 = vpop.xlane.xlu0 %1976
  %v1978 = vmul.f32 %v1974, %v132
  %v1979 = vmul.f32 %v1977, %v132
  %v1980 = vsub.f32 %v1968, %v1978
  %v1981 = vsub.f32 %v1969, %v1979
  %v1982 = vmul.f32 %v1980, %v1980
  %v1983 = vmul.f32 %v1981, %v1981
  %v1984 = vsel %vm125, %v1982, 0.0
  %1985 = vadd.xlane.f32.xlu0 %v1984
  %v1986 = vpop.xlane.xlu0 %1985
  %v1987 = vsel %vm125, %v1983, 0.0
  %1988 = vadd.xlane.f32.xlu0 %v1987
  %v1989 = vpop.xlane.xlu0 %1988
  %v1990 = vmul.f32 %v1986, %v132
  %v1991 = vmul.f32 %v1989, %v132
  %v1992 = vadd.f32 %v1990, 1e-12
  %v1993 = vadd.f32 %v1991, 1e-12
  %v1994 = vrsqrt.pop %v1992
  %v1995 = vrsqrt.pop %v1993
  %v1996 = vmul.f32 %v1980, %v1994
  %v1997 = vmul.f32 %v1981, %v1995
  %v1998 = vlaneseq
  %v1999 = vshrl.u32 %v1998, 7
  %v2000 = vsub.s32 0, %v1999
  %v2001 = vrot.slane %v1970, %v2000
  %v2002 = vmul.f32 %v1996, %v2001
  %v2003 = vmul.f32 %v1997, %v2001
  %v2004 = vlaneseq
  %v2005 = vshrl.u32 %v2004, 7
  %v2006 = vsub.s32 0, %v2005
  %v2007 = vrot.slane %v1971, %v2006
  %v2008 = vadd.f32 %v2002, %v2007
  %v2009 = vadd.f32 %v2003, %v2007
  %v2011 = vrot.slane %v2009, 7
  %vm2013 = vcmask 1040384
  %v2014 = vsel %vm2013, %v2008, %v2011
  %v2015 = vld [vmem:[%s2] sm:$0xff]
  %v2016 = vld [vmem:[%s2 + $0x8] sm:$0xff]
  %v2018 = vrot.slane %v2016, 7
  %v2020 = vsel %vm2013, %v2015, %v2018
  %v2021 = vld [vmem:[%s3 + $0x178] sm:$0xff]
  %v2022 = vld [vmem:[%s3 + $0x180] sm:$0xff]
  %v2023 = vld [vmem:[%s3 + $0x188] sm:$0xff]
  %v2024 = vld [vmem:[%s3 + $0x190] sm:$0xff]
  %v2025 = vld [vmem:[%s3 + $0x198] sm:$0x1]
  %v2026 = vlaneseq
  %v2027 = vshrl.u32 %v2026, 7
  %v2028 = vsub.s32 0, %v2027
  %v2029 = vrot.slane %v2025, %v2028
  %v2031 = vsel %vm125, %v2020, 0
  %2033 = vmatprep.subr.mxu0 0.0
  %2034 = vmatpush1.msra.mxu0 %v2021
  %2035 = vmatprep.subr.mxu0 0.0
  %2036 = vmatpush1.msra.mxu0 %v2022
  %2037 = vmatprep.subr.mxu0 0.0
  %2038 = vmatpush1.msra.mxu0 %v2023
  %2039 = vmatprep.subr.mxu0 0.0
  %2040 = vmatpush1.msra.mxu0 %v2024
  %2041 = vmatprep.subr.mxu0 0.0
  %2042 = vmatpush1.msra.mxu0 0.0
  %2043 = vmatprep.subr.mxu0 0.0
  %2044 = vmatpush1.msra.mxu0 0.0
  %2045 = vmatprep.subr.mxu0 0.0
  %2046 = vmatpush1.msra.mxu0 0.0
  %2047 = vmatprep.subr.mxu0 0.0
  %2048 = vmatpush1.msra.mxu0 0.0
  %2049 = vmatprep.subr.mxu0 0.0
  %2050 = vmatpush1.msra.mxu0 0.0
  %2051 = vmatprep.subr.mxu0 0.0
  %2052 = vmatpush1.msra.mxu0 0.0
  %2053 = vmatprep.subr.mxu0 0.0
  %2054 = vmatpush1.msra.mxu0 0.0
  %2055 = vmatprep.subr.mxu0 0.0
  %2056 = vmatpush1.msra.mxu0 0.0
  %2057 = vmatprep.subr.mxu0 0.0
  %2058 = vmatpush1.msra.mxu0 0.0
  %2059 = vmatprep.subr.mxu0 0.0
  %2060 = vmatpush1.msra.mxu0 0.0
  %2061 = vmatprep.subr.mxu0 0.0
  %2062 = vmatpush1.msra.mxu0 0.0
  %2063 = vmatprep.subr.mxu0 0.0
  %2064 = vmatpush1.msra.mxu0 0.0
  %2065 = vmatprep.subr.mxu0 0.0
  %2066 = vmatpush1.msra.mxu0 0.0
  %2067 = vmatprep.subr.mxu0 0.0
  %2068 = vmatpush1.msra.mxu0 0.0
  %2069 = vmatprep.subr.mxu0 0.0
  %2070 = vmatpush1.msra.mxu0 0.0
  %2071 = vmatprep.subr.mxu0 0.0
  %2072 = vmatpush1.msra.mxu0 0.0
  %2073 = vmatprep.subr.mxu0 0.0
  %2074 = vmatpush1.msra.mxu0 0.0
  %2075 = vmatprep.subr.mxu0 0.0
  %2076 = vmatpush1.msra.mxu0 0.0
  %2077 = vmatprep.subr.mxu0 0.0
  %2078 = vmatpush1.msra.mxu0 0.0
  %2079 = vmatprep.subr.mxu0 0.0
  %2080 = vmatpush1.msra.mxu0 0.0
  %2081 = vmatprep.subr.mxu0 0.0
  %2082 = vmatpush1.msra.mxu0 0.0
  %2083 = vmatprep.subr.mxu0 0.0
  %2084 = vmatpush1.msra.mxu0 0.0
  %2085 = vmatprep.subr.mxu0 0.0
  %2086 = vmatpush1.msra.mxu0 0.0
  %2087 = vmatprep.subr.mxu0 0.0
  %2088 = vmatpush1.msra.mxu0 0.0
  %2089 = vmatprep.subr.mxu0 0.0
  %2090 = vmatpush1.msra.mxu0 0.0
  %2091 = vmatprep.subr.mxu0 0.0
  %2092 = vmatpush1.msra.mxu0 0.0
  %2093 = vmatprep.subr.mxu0 0.0
  %2094 = vmatpush1.msra.mxu0 0.0
  %2095 = vmatprep.subr.mxu0 0.0
  %2096 = vmatpush1.msra.mxu0 0.0
  %2097 = vmatprep.mubr.f32.mxu0 0.0
  %2098 = vmatmul.mubr.f32.gmra.mrb[0].mxu0 %v2031
  %v2099 = vpop.f32.mrb[0].mxu0
  %v2100 = vadd.f32 %v2029, %v2099
  %v2101 = vpop.f32.mrb[0].mxu0
  %2102 = vdwg.mxu0
  %v2103 = vld [vmem:[%s3 + $0x199] sm:$0xff]
  %v2104 = vld [vmem:[%s3 + $0x1a1] sm:$0xff]
  %v2105 = vld [vmem:[%s3 + $0x1a9] sm:$0xff]
  %v2106 = vld [vmem:[%s3 + $0x1b1] sm:$0xff]
  %v2107 = vld [vmem:[%s3 + $0x1b9] sm:$0x1]
  %v2108 = vlaneseq
  %v2109 = vshrl.u32 %v2108, 7
  %v2110 = vsub.s32 0, %v2109
  %v2111 = vrot.slane %v2107, %v2110
  %v2113 = vsel %vm125, %v2014, 0
  %2115 = vmatprep.subr.mxu0 0.0
  %2116 = vmatpush1.msra.mxu0 %v2103
  %2117 = vmatprep.subr.mxu0 0.0
  %2118 = vmatpush1.msra.mxu0 %v2104
  %2119 = vmatprep.subr.mxu0 0.0
  %2120 = vmatpush1.msra.mxu0 %v2105
  %2121 = vmatprep.subr.mxu0 0.0
  %2122 = vmatpush1.msra.mxu0 %v2106
  %2123 = vmatprep.subr.mxu0 0.0
  %2124 = vmatpush1.msra.mxu0 0.0
  %2125 = vmatprep.subr.mxu0 0.0
  %2126 = vmatpush1.msra.mxu0 0.0
  %2127 = vmatprep.subr.mxu0 0.0
  %2128 = vmatpush1.msra.mxu0 0.0
  %2129 = vmatprep.subr.mxu0 0.0
  %2130 = vmatpush1.msra.mxu0 0.0
  %2131 = vmatprep.subr.mxu0 0.0
  %2132 = vmatpush1.msra.mxu0 0.0
  %2133 = vmatprep.subr.mxu0 0.0
  %2134 = vmatpush1.msra.mxu0 0.0
  %2135 = vmatprep.subr.mxu0 0.0
  %2136 = vmatpush1.msra.mxu0 0.0
  %2137 = vmatprep.subr.mxu0 0.0
  %2138 = vmatpush1.msra.mxu0 0.0
  %2139 = vmatprep.subr.mxu0 0.0
  %2140 = vmatpush1.msra.mxu0 0.0
  %2141 = vmatprep.subr.mxu0 0.0
  %2142 = vmatpush1.msra.mxu0 0.0
  %2143 = vmatprep.subr.mxu0 0.0
  %2144 = vmatpush1.msra.mxu0 0.0
  %2145 = vmatprep.subr.mxu0 0.0
  %2146 = vmatpush1.msra.mxu0 0.0
  %2147 = vmatprep.subr.mxu0 0.0
  %2148 = vmatpush1.msra.mxu0 0.0
  %2149 = vmatprep.subr.mxu0 0.0
  %2150 = vmatpush1.msra.mxu0 0.0
  %2151 = vmatprep.subr.mxu0 0.0
  %2152 = vmatpush1.msra.mxu0 0.0
  %2153 = vmatprep.subr.mxu0 0.0
  %2154 = vmatpush1.msra.mxu0 0.0
  %2155 = vmatprep.subr.mxu0 0.0
  %2156 = vmatpush1.msra.mxu0 0.0
  %2157 = vmatprep.subr.mxu0 0.0
  %2158 = vmatpush1.msra.mxu0 0.0
  %2159 = vmatprep.subr.mxu0 0.0
  %2160 = vmatpush1.msra.mxu0 0.0
  %2161 = vmatprep.subr.mxu0 0.0
  %2162 = vmatpush1.msra.mxu0 0.0
  %2163 = vmatprep.subr.mxu0 0.0
  %2164 = vmatpush1.msra.mxu0 0.0
  %2165 = vmatprep.subr.mxu0 0.0
  %2166 = vmatpush1.msra.mxu0 0.0
  %2167 = vmatprep.subr.mxu0 0.0
  %2168 = vmatpush1.msra.mxu0 0.0
  %2169 = vmatprep.subr.mxu0 0.0
  %2170 = vmatpush1.msra.mxu0 0.0
  %2171 = vmatprep.subr.mxu0 0.0
  %2172 = vmatpush1.msra.mxu0 0.0
  %2173 = vmatprep.subr.mxu0 0.0
  %2174 = vmatpush1.msra.mxu0 0.0
  %2175 = vmatprep.subr.mxu0 0.0
  %2176 = vmatpush1.msra.mxu0 0.0
  %2177 = vmatprep.subr.mxu0 0.0
  %2178 = vmatpush1.msra.mxu0 0.0
  %2179 = vmatprep.mubr.f32.mxu0 0.0
  %2180 = vmatmul.mubr.f32.gmra.mrb[0].mxu0 %v2113
  %v2181 = vpop.f32.mrb[0].mxu0
  %v2182 = vadd.f32 %v2111, %v2181
  %v2183 = vpop.f32.mrb[0].mxu0
  %2184 = vdwg.mxu0
  %v2185 = vmul.f32 %v2100, %v2100
  %vm2186 = vcmask 254976
  %v2187 = vsel %vm2186, %v2185, 0.0
  %2188 = vadd.xlane.f32.xlu0 %v2187
  %v2189 = vpop.xlane.xlu0 %2188
  %v2190 = vrsqrt.pop %v2189
  %v2191 = vmul.f32 %v2189, %v2190
  %vm2192 = vcmp.eq.f32.partialorder %v2189, inf
  %v2193 = vsel %vm2192, %v2189, %v2191
  %vm2194 = vcmp.eq.f32.partialorder %v2189, 0.0
  %v2195 = vand.u32 %v2189, 2147483648
  %v2196 = vsel %vm2194, %v2195, %v2193
  %v2197 = vmax.f32 %v2196, 1e-12
  %v2198 = vrcp.pop %v2197
  %v2199 = vmul.f32 %v2100, %v2198
  %v2200 = vmul.f32 %v2182, %v2182
  %v2201 = vsel %vm2186, %v2200, 0.0
  %2202 = vadd.xlane.f32.xlu0 %v2201
  %v2203 = vpop.xlane.xlu0 %2202
  %v2204 = vrsqrt.pop %v2203
  %v2205 = vmul.f32 %v2203, %v2204
  %vm2206 = vcmp.eq.f32.partialorder %v2203, inf
  %v2207 = vsel %vm2206, %v2203, %v2205
  %vm2208 = vcmp.eq.f32.partialorder %v2203, 0.0
  %v2209 = vand.u32 %v2203, 2147483648
  %v2210 = vsel %vm2208, %v2209, %v2207
  %v2211 = vmax.f32 %v2210, 1e-12
  %v2212 = vrcp.pop %v2211
  %v2213 = vmul.f32 %v2182, %v2212
  %v2215 = vsel %vm125, %v2213, 0
  %v2218 = vsel %vm125, %v2199, 0
  %2220 = vmatprep.subr.mxu0 0.0
  %2221 = vmatpush1.xpose.msra.mxu0 %v2218
  %2222 = vmatprep.subr.mxu0 0.0
  %2223 = vmatpush1.xpose.msra.mxu0 0.0
  %2224 = vmatprep.subr.mxu0 0.0
  %2225 = vmatpush1.xpose.msra.mxu0 0.0
  %2226 = vmatprep.subr.mxu0 0.0
  %2227 = vmatpush1.xpose.msra.mxu0 0.0
  %2228 = vmatprep.subr.mxu0 0.0
  %2229 = vmatpush1.xpose.msra.mxu0 0.0
  %2230 = vmatprep.subr.mxu0 0.0
  %2231 = vmatpush1.xpose.msra.mxu0 0.0
  %2232 = vmatprep.subr.mxu0 0.0
  %2233 = vmatpush1.xpose.msra.mxu0 0.0
  %2234 = vmatprep.subr.mxu0 0.0
  %2235 = vmatpush1.xpose.msra.mxu0 0.0
  %2236 = vmatprep.subr.mxu0 0.0
  %2237 = vmatpush1.xpose.msra.mxu0 0.0
  %2238 = vmatprep.subr.mxu0 0.0
  %2239 = vmatpush1.xpose.msra.mxu0 0.0
  %2240 = vmatprep.subr.mxu0 0.0
  %2241 = vmatpush1.xpose.msra.mxu0 0.0
  %2242 = vmatprep.subr.mxu0 0.0
  %2243 = vmatpush1.xpose.msra.mxu0 0.0
  %2244 = vmatprep.subr.mxu0 0.0
  %2245 = vmatpush1.xpose.msra.mxu0 0.0
  %2246 = vmatprep.subr.mxu0 0.0
  %2247 = vmatpush1.xpose.msra.mxu0 0.0
  %2248 = vmatprep.subr.mxu0 0.0
  %2249 = vmatpush1.xpose.msra.mxu0 0.0
  %2250 = vmatprep.subr.mxu0 0.0
  %2251 = vmatpush1.xpose.msra.mxu0 0.0
  %2252 = vmatprep.subr.mxu0 0.0
  %2253 = vmatpush1.xpose.msra.mxu0 0.0
  %2254 = vmatprep.subr.mxu0 0.0
  %2255 = vmatpush1.xpose.msra.mxu0 0.0
  %2256 = vmatprep.subr.mxu0 0.0
  %2257 = vmatpush1.xpose.msra.mxu0 0.0
  %2258 = vmatprep.subr.mxu0 0.0
  %2259 = vmatpush1.xpose.msra.mxu0 0.0
  %2260 = vmatprep.subr.mxu0 0.0
  %2261 = vmatpush1.xpose.msra.mxu0 0.0
  %2262 = vmatprep.subr.mxu0 0.0
  %2263 = vmatpush1.xpose.msra.mxu0 0.0
  %2264 = vmatprep.subr.mxu0 0.0
  %2265 = vmatpush1.xpose.msra.mxu0 0.0
  %2266 = vmatprep.subr.mxu0 0.0
  %2267 = vmatpush1.xpose.msra.mxu0 0.0
  %2268 = vmatprep.subr.mxu0 0.0
  %2269 = vmatpush1.xpose.msra.mxu0 0.0
  %2270 = vmatprep.subr.mxu0 0.0
  %2271 = vmatpush1.xpose.msra.mxu0 0.0
  %2272 = vmatprep.subr.mxu0 0.0
  %2273 = vmatpush1.xpose.msra.mxu0 0.0
  %2274 = vmatprep.subr.mxu0 0.0
  %2275 = vmatpush1.xpose.msra.mxu0 0.0
  %2276 = vmatprep.subr.mxu0 0.0
  %2277 = vmatpush1.xpose.msra.mxu0 0.0
  %2278 = vmatprep.subr.mxu0 0.0
  %2279 = vmatpush1.xpose.msra.mxu0 0.0
  %2280 = vmatprep.subr.mxu0 0.0
  %2281 = vmatpush1.xpose.msra.mxu0 0.0
  %2282 = vmatprep.subr.mxu0 0.0
  %2283 = vmatpush1.xpose.msra.mxu0 0.0
  %2284 = vmatprep.mubr.f32.mxu0 0.0
  %2285 = vmatmul.mubr.f32.gmra.mrb[0].mxu0 %v2215
  %v2286 = vpop.f32.mrb[0].mxu0
  %v2287 = vadd.f32 0.0, %v2286
  %v2288 = vpop.f32.mrb[0].mxu0
  %2289 = vdwg.mxu0
  %2290 = vmatprep.subr.mxu0 0.0
  %2291 = vmatpush1.xpose.msra.mxu0 %v2215
  %2292 = vmatprep.subr.mxu0 0.0
  %2293 = vmatpush1.xpose.msra.mxu0 0.0
  %2294 = vmatprep.subr.mxu0 0.0
  %2295 = vmatpush1.xpose.msra.mxu0 0.0
  %2296 = vmatprep.subr.mxu0 0.0
  %2297 = vmatpush1.xpose.msra.mxu0 0.0
  %2298 = vmatprep.subr.mxu0 0.0
  %2299 = vmatpush1.xpose.msra.mxu0 0.0
  %2300 = vmatprep.subr.mxu0 0.0
  %2301 = vmatpush1.xpose.msra.mxu0 0.0
  %2302 = vmatprep.subr.mxu0 0.0
  %2303 = vmatpush1.xpose.msra.mxu0 0.0
  %2304 = vmatprep.subr.mxu0 0.0
  %2305 = vmatpush1.xpose.msra.mxu0 0.0
  %2306 = vmatprep.subr.mxu0 0.0
  %2307 = vmatpush1.xpose.msra.mxu0 0.0
  %2308 = vmatprep.subr.mxu0 0.0
  %2309 = vmatpush1.xpose.msra.mxu0 0.0
  %2310 = vmatprep.subr.mxu0 0.0
  %2311 = vmatpush1.xpose.msra.mxu0 0.0
  %2312 = vmatprep.subr.mxu0 0.0
  %2313 = vmatpush1.xpose.msra.mxu0 0.0
  %2314 = vmatprep.subr.mxu0 0.0
  %2315 = vmatpush1.xpose.msra.mxu0 0.0
  %2316 = vmatprep.subr.mxu0 0.0
  %2317 = vmatpush1.xpose.msra.mxu0 0.0
  %2318 = vmatprep.subr.mxu0 0.0
  %2319 = vmatpush1.xpose.msra.mxu0 0.0
  %2320 = vmatprep.subr.mxu0 0.0
  %2321 = vmatpush1.xpose.msra.mxu0 0.0
  %2322 = vmatprep.subr.mxu0 0.0
  %2323 = vmatpush1.xpose.msra.mxu0 0.0
  %2324 = vmatprep.subr.mxu0 0.0
  %2325 = vmatpush1.xpose.msra.mxu0 0.0
  %2326 = vmatprep.subr.mxu0 0.0
  %2327 = vmatpush1.xpose.msra.mxu0 0.0
  %2328 = vmatprep.subr.mxu0 0.0
  %2329 = vmatpush1.xpose.msra.mxu0 0.0
  %2330 = vmatprep.subr.mxu0 0.0
  %2331 = vmatpush1.xpose.msra.mxu0 0.0
  %2332 = vmatprep.subr.mxu0 0.0
  %2333 = vmatpush1.xpose.msra.mxu0 0.0
  %2334 = vmatprep.subr.mxu0 0.0
  %2335 = vmatpush1.xpose.msra.mxu0 0.0
  %2336 = vmatprep.subr.mxu0 0.0
  %2337 = vmatpush1.xpose.msra.mxu0 0.0
  %2338 = vmatprep.subr.mxu0 0.0
  %2339 = vmatpush1.xpose.msra.mxu0 0.0
  %2340 = vmatprep.subr.mxu0 0.0
  %2341 = vmatpush1.xpose.msra.mxu0 0.0
  %2342 = vmatprep.subr.mxu0 0.0
  %2343 = vmatpush1.xpose.msra.mxu0 0.0
  %2344 = vmatprep.subr.mxu0 0.0
  %2345 = vmatpush1.xpose.msra.mxu0 0.0
  %2346 = vmatprep.subr.mxu0 0.0
  %2347 = vmatpush1.xpose.msra.mxu0 0.0
  %2348 = vmatprep.subr.mxu0 0.0
  %2349 = vmatpush1.xpose.msra.mxu0 0.0
  %2350 = vmatprep.subr.mxu0 0.0
  %2351 = vmatpush1.xpose.msra.mxu0 0.0
  %2352 = vmatprep.subr.mxu0 0.0
  %2353 = vmatpush1.xpose.msra.mxu0 0.0
  %2354 = vmatprep.mubr.f32.mxu0 0.0
  %2355 = vmatmul.mubr.f32.gmra.mrb[0].mxu0 %v2215
  %v2356 = vpop.f32.mrb[0].mxu0
  %v2357 = vadd.f32 0.0, %v2356
  %v2358 = vpop.f32.mrb[0].mxu0
  %2359 = vdwg.mxu0
  %v2360 = vlaneseq
  %v2361 = vshrl.u32 %v2360, 7
  %vm2362 = vcmp.eq.s32.totalorder %v2361, %v21
  %v2363 = vsel %vm2362, 1.0, 0.0
  %vm2364 = vcmp.gt.f32.partialorder %v2357, 0.95
  %v2365 = vsel %vm2364, 1.0, 0.0
  %v2366 = vsub.f32 1.0, %v2363
  %v2367 = vmul.f32 %v2365, %v2366
  %v2368 = vsub.f32 1.0, %v2367
  %v2369 = vmul.f32 %v2287, %v2368
  %v2370 = vmul.f32 %v2367, -10000.0
  %v2371 = vadd.f32 %v2369, %v2370
  %vm2372 = vcmask 9216
  %v2373 = vsel %vm2372, %v2371, -inf
  %2374 = vmax.xlane.f32.xlu0 %v2373
  %v2375 = vpop.xlane.xlu0 %2374
  %v2376 = vsub.f32 %v2371, %v2375
  %v2377 = vmul.f32 %v2376, 1.442695
  %v2378 = vpow.pop %v2377
  %v2379 = vsel %vm2372, %v2378, 0.0
  %2380 = vadd.xlane.f32.xlu0 %v2379
  %v2381 = vpop.xlane.xlu0 %2380
  %v2382 = vlog2.pop %v2381
  %v2383 = vmul.f32 %v2382, 0.6931472
  %v2384 = vadd.f32 %v2375, %v2383
  %v2385 = vmul.f32 %v2371, %v2363
  %v2386 = vsel %vm2372, %v2385, 0.0
  %2387 = vadd.xlane.f32.xlu0 %v2386
  %v2388 = vpop.xlane.xlu0 %2387
  %v2389 = vsub.f32 %v2384, %v2388
  %vm2390 = vcmask 1041408
  %v2391 = vsel %vm2390, %v2389, 0.0
  %v2392 = vrot.slane %v2391, 4
  %v2393 = vadd.f32 %v2391, %v2392
  %v2394 = vrot.slane %v2393, 2
  %v2395 = vadd.f32 %v2393, %v2394
  %v2396 = vrot.slane %v2395, 1
  %v2397 = vadd.f32 %v2395, %v2396
  %v2398 = vrcp.pop 2.0
  %v2399 = vmul.f32 %v2397, %v2398
  %v2400 = vrot.slane %v2373, 4
  %v2401 = vmax.f32 %v2373, %v2400
  %v2402 = vrot.slane %v2401, 2
  %v2403 = vmax.f32 %v2401, %v2402
  %v2404 = vrot.slane %v2403, 1
  %v2405 = vmax.f32 %v2403, %v2404
  %v2406 = vsub.f32 %v2371, %v2405
  %v2407 = vmul.f32 %v2406, 1.442695
  %v2408 = vpow.pop %v2407
  %v2409 = vsel %vm2372, %v2408, 0.0
  %v2410 = vrot.slane %v2409, 4
  %v2411 = vadd.f32 %v2409, %v2410
  %v2412 = vrot.slane %v2411, 2
  %v2413 = vadd.f32 %v2411, %v2412
  %v2414 = vrot.slane %v2413, 1
  %v2415 = vadd.f32 %v2413, %v2414
  %v2416 = vlog2.pop %v2415
  %v2417 = vmul.f32 %v2416, 0.6931472
  %v2418 = vadd.f32 %v2405, %v2417
  %v2419 = vrot.slane %v2386, 4
  %v2420 = vadd.f32 %v2386, %v2419
  %v2421 = vrot.slane %v2420, 2
  %v2422 = vadd.f32 %v2420, %v2421
  %v2423 = vrot.slane %v2422, 1
  %v2424 = vadd.f32 %v2422, %v2423
  %v2425 = vsub.f32 %v2418, %v2424
  %vm2426 = vcmask 15360
  %v2427 = vsel %vm2426, %v2425, 0.0
  %2428 = vadd.xlane.f32.xlu0 %v2427
  %v2429 = vpop.xlane.xlu0 %2428
  %v2430 = vmul.f32 %v2429, %v2398
  %v2431 = vadd.f32 %v2399, %v2430
  %v2432 = vmul.f32 %v2431, 0.5
  %v2433 = vmul.f32 %v2287, %v2363
  %v2434 = vsel %vm2372, %v2433, 0.0
  %2435 = vadd.xlane.f32.xlu0 %v2434
  %v2436 = vpop.xlane.xlu0 %2435
  %v2437 = vsub.f32 1.0, %v2365
  %v2438 = vadd.f32 %v2287, 0.2
  %vm2439 = vcmp.gt.f32.partialorder %v2438, %v2436
  %v2440 = vsel %vm2439, 1.0, 0.0
  %v2441 = vmul.f32 %v2437, %v2440
  %v2442 = vsub.f32 %v2438, %v2436
  %v2443 = vmax.f32 %v2442, 0.0
  %v2444 = vmul.f32 %v2441, %v2443
  %v2445 = vsel %vm2372, %v2444, 0.0
  %2446 = vadd.xlane.f32.xlu0 %v2445
  %v2447 = vpop.xlane.xlu0 %2446
  %v2448 = vsel %vm2390, %v2447, 0.0
  %v2449 = vrot.slane %v2448, 4
  %v2450 = vadd.f32 %v2448, %v2449
  %v2451 = vrot.slane %v2450, 2
  %v2452 = vadd.f32 %v2450, %v2451
  %v2453 = vrot.slane %v2452, 1
  %v2454 = vadd.f32 %v2452, %v2453
  %v2455 = vmul.f32 %v2454, %v2398
  %v2456 = vmul.f32 %v2432, 0.5
  %v2457 = vmul.f32 %v2455, 0.5
  %v2458 = vadd.f32 %v2456, %v2457
  %v2459 = vsel %vm125, %v2014, 0.0
  %v2460 = vsel %vm125, %v2199, 0.0
  %v2461 = vsel %vm125, %v2213, 0.0
  %v2462 = vsel %vm2426, %v2287, 0.0
  %vm2463 = vcmask 7168
  %v2464 = vsel %vm2463, %v2458, 0.0
  %v2466 = vrot.slane %v2460, 6
  %v2469 = vrot.slane %v2461, 4
  %v2472 = vrot.slane %v2462, 2
  %v2474 = vsel %vm2390, %v2459, %v2466
  %vm2475 = vcmask 1043456
  %v2476 = vsel %vm2475, %v2474, %v2469
  %vm2477 = vcmask 1045504
  %v2478 = vsel %vm2477, %v2476, %v2472
  %2479 = vst [vmem:[%s4] sm:$0xff] %v2478
  %2480 = vst [vmem:[%s4 + $0x8] sm:$0x1] %v2464
  // Predicated region
  $region18: #{_stage1_impl.3} parent=0 // pred_check
    _
  $region19: #{_stage1_impl.3} parent=0 // pred_check_branch
    %2482 = sbr.rel (0) target = $region21
  $region20: #{_stage1_impl.3} parent=0 // pred_region
    _
  $region21: #{_stage1_impl.3} parent=0 // pred_fallthru
    _
  // Predicated region
  $region22: #{_stage1_impl.3} parent=0 // pred_check
    _
  $region23: #{_stage1_impl.3} parent=0 // pred_check_branch
    %2484 = sbr.rel (0) target = $region25
  $region24: #{_stage1_impl.3} parent=0 // pred_region
    _
  $region25: #{_stage1_impl.3} parent=0 // pred_fallthru
    _

</llo_original>
